<compile_context>
chip_gen: v7x
topology: tpu7x:2x2x1
jax: 0.10.0
libtpu: 0.0.40
codegen_flags: <defaults>
</compile_context>

<pallas_src>
import jax
import jax.numpy as jnp
from jax import lax
from jax.experimental import pallas as pl
from jax.experimental.pallas import tpu as pltpu
import numpy as np


# --------------------------- host-side constant packing ---------------------------

def _pack_weights(stacked_weights, c_pad):
    """Pack every conv tap (Cout, Cin) into one (n_taps, c_pad, c_pad) f32 array."""
    taps = []
    for w in stacked_weights:                       # each is (K, Cout, Cin)
        wn = np.asarray(w, np.float32)
        for k in range(wn.shape[0]):
            taps.append(wn[k])
    wpack = np.zeros((len(taps), c_pad, c_pad), np.float32)
    for i, t in enumerate(taps):
        wpack[i, :t.shape[0], :t.shape[1]] = t
    return wpack


def _build_constants(L, b_tile):
    """Precompute selection matrices / boundary masks for the lane-packed layout.

    One grid step holds b_tile samples packed sample-major along lanes, so an
    activation with per-sample length lc is a (C, b_tile*lc) slab.  Returns
    (poolpack, uppack, smallpack, layout); `layout` holds the static row/column
    offsets the kernel uses to slice each constant back out of the packs.
    """
    n0 = b_tile * L
    lp = L // 16            # per-sample length entering encoder conv5 / leaving decoder convT
    lz = lp - 1             # per-sample embedding length
    conv_lcs = [L, L // 2, L // 4, L // 8]   # conv3 / avgpool per-sample lengths
    up_lcs = [lp, L // 8, L // 4, L // 2]    # upsample *input* per-sample lengths

    # AvgPool1d(2): out[:, t] = 0.5*(x[:, 2t] + x[:, 2t+1]); pairs never cross a
    # sample boundary because every per-sample length here is even.
    pool_col, blocks, col = {}, [], 0
    for lc in conv_lcs:
        n, m = b_tile * lc, (b_tile * lc) // 2
        p = np.zeros((n, m), np.float32)
        t = np.arange(m)
        p[2 * t, t] = 0.5
        p[2 * t + 1, t] = 0.5
        pool_col[lc] = col
        blocks.append(p)
        col += m
    poolpack = np.zeros((n0, col), np.float32)
    c = 0
    for p in blocks:
        poolpack[:p.shape[0], c:c + p.shape[1]] = p
        c += p.shape[1]

    # Nearest x2 upsample: out[:, t] = x[:, t // 2] (stays within each sample).
    up_col, blocks, col = {}, [], 0
    for lc in up_lcs:
        n, m = b_tile * lc, 2 * b_tile * lc
        u = np.zeros((n, m), np.float32)
        t = np.arange(m)
        u[t // 2, t] = 1.0
        up_col[lc] = col
        blocks.append(u)
        col += m
    uppack = np.zeros((b_tile * max(up_lcs), col), np.float32)
    c = 0
    for u in blocks:
        uppack[:u.shape[0], c:c + u.shape[1]] = u
        c += u.shape[1]

    # Small constants: conv3 boundary masks + k=2 gathers (encoder conv5) and
    # scatters (decoder convT).
    npre, nz = b_tile * lp, b_tile * lz
    rows = max(8, npre)
    smallpack = np.zeros((rows, n0 + 2 * nz + 2 * npre), np.float32)
    mask_row = {}
    for i, lc in enumerate(conv_lcs):
        n = b_tile * lc
        t = np.arange(n)
        smallpack[2 * i, :n] = (t % lc != 0).astype(np.float32)           # "t-1 in-sample"
        smallpack[2 * i + 1, :n] = (t % lc != lc - 1).astype(np.float32)  # "t+1 in-sample"
        mask_row[lc] = 2 * i

    col = n0
    gcol = {}
    for off in (0, 1):        # encoder conv5 (k=2, valid): gather per-sample column t+off
        m = np.arange(nz)
        b, t = m // lz, m % lz
        g = np.zeros((npre, nz), np.float32)
        g[b * lp + t + off, m] = 1.0
        smallpack[:npre, col:col + nz] = g
        gcol[off] = col
        col += nz

    scol = {}
    for off in (0, -1):       # decoder convT (k=2): scatter tap result to per-sample column t
        m = np.arange(npre)
        b, t = m // lp, m % lp
        src = t + off
        ok = (src >= 0) & (src < lz)
        s = np.zeros((nz, npre), np.float32)
        s[(b * lz + src)[ok], m[ok]] = 1.0
        smallpack[:nz, col:col + npre] = s
        scol[off] = col
        col += npre

    layout = dict(pool_col=pool_col, up_col=up_col, mask_row=mask_row,
                  gcol=gcol, scol=scol)
    return poolpack, uppack, smallpack, layout


# --------------------------------- the kernel ---------------------------------

def _make_kernel(L, b_tile, c_pad, bases, layout):
    lp, lz = L // 16, L // 16 - 1
    npre, nz = b_tile * lp, b_tile * lz
    pool_col, up_col = layout["pool_col"], layout["up_col"]
    mask_row, gcol, scol = layout["mask_row"], layout["gcol"], layout["scol"]
    (b_e1, b_e2, b_e3, b_e4, b_e5,
     b_d1, b_d2, b_d3, b_d4, b_d5) = bases

    def kernel(x_ref, w_ref, pool_ref, up_ref, sm_ref, o_ref):

        def leaky(v):
            return jnp.where(v > 0, v, 0.2 * v)

        def conv3(h, base, lc, out_rows=None):
            """Conv1d(k=3, stride=1, pad=1, bias=False) on a lane-packed (C, b_tile*lc) slab."""
            n = b_tile * lc
            r = mask_row[lc]
            m_prev = sm_ref[r:r + 1, 0:n]            # 1.0 where column t-1 is in-sample
            m_next = sm_ref[r + 1:r + 2, 0:n]        # 1.0 where column t+1 is in-sample
            h_prev = pltpu.roll(h, shift=1, axis=1) * m_prev        # h[:, t-1]
            h_next = pltpu.roll(h, shift=n - 1, axis=1) * m_next    # h[:, t+1]
            w0, w1, w2 = w_ref[base], w_ref[base + 1], w_ref[base + 2]
            if out_rows is not None:
                w0, w1, w2 = w0[:out_rows], w1[:out_rows], w2[:out_rows]
            y = jnp.dot(w0, h_prev, preferred_element_type=jnp.float32)
            y = y + jnp.dot(w1, h, preferred_element_type=jnp.float32)
            y = y + jnp.dot(w2, h_next, preferred_element_type=jnp.float32)
            return y

        def avgpool(h, lc):
            n, c0 = b_tile * lc, pool_col[lc]
            return jnp.dot(h, pool_ref[0:n, c0:c0 + n // 2],
                           preferred_element_type=jnp.float32)

        def upsample(h, lc):
            n, c0 = b_tile * lc, up_col[lc]
            return jnp.dot(h, up_ref[0:n, c0:c0 + 2 * n],
                           preferred_element_type=jnp.float32)

        x = x_ref[...]                                    # (c_pad, b_tile*L)

        # ------------------------------ Encoder ------------------------------
        h = leaky(conv3(x, b_e1, L));       h = avgpool(h, L)
        h = leaky(conv3(h, b_e2, L // 2));  h = avgpool(h, L // 2)
        h = leaky(conv3(h, b_e3, L // 4));  h = avgpool(h, L // 4)
        h = leaky(conv3(h, b_e4, L // 8));  h = avgpool(h, L // 8)
        # conv5: Conv1d(k=2, stride=1, pad=0): per-sample length lp -> lz
        g0 = sm_ref[0:npre, gcol[0]:gcol[0] + nz]
        g1 = sm_ref[0:npre, gcol[1]:gcol[1] + nz]
        z = jnp.dot(w_ref[b_e5],
                    jnp.dot(h, g0, preferred_element_type=jnp.float32),
                    preferred_element_type=jnp.float32)
        z = z + jnp.dot(w_ref[b_e5 + 1],
                        jnp.dot(h, g1, preferred_element_type=jnp.float32),
                        preferred_element_type=jnp.float32)

        # ------------------------------ Decoder ------------------------------
        # conv1: ConvTranspose1d(k=2, stride=1, pad=0): per-sample length lz -> lp
        s0 = sm_ref[0:nz, scol[0]:scol[0] + npre]
        s1 = sm_ref[0:nz, scol[-1]:scol[-1] + npre]
        d = jnp.dot(jnp.dot(w_ref[b_d1], z, preferred_element_type=jnp.float32),
                    s0, preferred_element_type=jnp.float32)
        d = d + jnp.dot(jnp.dot(w_ref[b_d1 + 1], z, preferred_element_type=jnp.float32),
                        s1, preferred_element_type=jnp.float32)
        d = leaky(d)

        d = upsample(d, lp)
        d = leaky(conv3(d, b_d2, L // 8));  d = upsample(d, L // 8)
        d = leaky(conv3(d, b_d3, L // 4));  d = upsample(d, L // 4)
        d = leaky(conv3(d, b_d4, L // 2));  d = upsample(d, L // 2)
        y = conv3(d, b_d5, L, out_rows=2)                 # final conv -> 2 channels
        o_ref[...] = jnp.tanh(y).astype(o_ref.dtype)

    return kernel


# --------------------------------- the wrapper ---------------------------------

def aecoder_forward(x, stacked_weights, *, grid_steps=1, core_parallel=False):
    """AEcoder forward.  x: (B, 2, L) f32; stacked_weights: 10 (K, Cout, Cin) tap stacks.

    grid_steps=1 is best on single-TensorCore chips (v5e / v6e).  On v7x use
    grid_steps=2, core_parallel=True so the two batch halves land on the two cores.
    """
    B, C, L = x.shape
    assert C == 2, "AEcoder input must have 2 channels"
    assert L % 16 == 0 and L // 16 >= 2, \
        "need L divisible by 16 and L/16 >= 2 (4 AvgPool halvings + valid k=2 conv)"
    assert B % grid_steps == 0
    b_tile = B // grid_steps
    n = b_tile * L

    # Common (zero-padded) channel width so all weight taps share one packed input.
    c_pad = 8
    for w in stacked_weights:
        c_pad = max(c_pad, int(w.shape[1]), int(w.shape[2]))
    c_pad = ((c_pad + 7) // 8) * 8

    wpack = _pack_weights(stacked_weights, c_pad)
    bases = tuple(int(v) for v in
                  np.cumsum([0] + [int(w.shape[0]) for w in stacked_weights])[:-1])
    poolpack, uppack, smallpack, layout = _build_constants(L, b_tile)

    # Lane-dense packing + channel zero-pad: (B, 2, L) -> (c_pad, B*L), sample-major columns.
    xp = jnp.zeros((c_pad, B * L), jnp.float32)
    xp = xp.at[:2].set(jnp.transpose(x, (1, 0, 2)).reshape(2, B * L))

    kernel = _make_kernel(L, b_tile, c_pad, bases, layout)

    if core_parallel:
        semantics = (pltpu.CORE_PARALLEL,)     # v7x: shard grid steps across the 2 TensorCores
    elif grid_steps > 1:
        semantics = ("parallel",)
    else:
        semantics = ("arbitrary",)

    out = pl.pallas_call(
        kernel,
        out_shape=jax.ShapeDtypeStruct((2, B * L), jnp.float32),
        grid_spec=pltpu.PrefetchScalarGridSpec(
            num_scalar_prefetch=0,
            grid=(grid_steps,),
            in_specs=[
                pl.BlockSpec((c_pad, n), lambda g: (0, g)),        # activations: batch-split
                pl.BlockSpec(wpack.shape, lambda g: (0, 0, 0)),    # packed weights: resident
                pl.BlockSpec(poolpack.shape, lambda g: (0, 0)),    # packed constants: resident
                pl.BlockSpec(uppack.shape, lambda g: (0, 0)),
                pl.BlockSpec(smallpack.shape, lambda g: (0, 0)),
            ],
            out_specs=pl.BlockSpec((2, n), lambda g: (0, g)),
        ),
        compiler_params=pltpu.CompilerParams(dimension_semantics=semantics),
    )(xp, jnp.asarray(wpack), jnp.asarray(poolpack), jnp.asarray(uppack),
      jnp.asarray(smallpack))

    # Unpack back to PyTorch NCL layout.
    return jnp.transpose(out.reshape(2, B, L), (1, 0, 2))


# ------------------------------ parameter setup -------------------------------

def init_params(key, embed_dim, ndfs, ngfs):
    """Returns (pytorch-layout weights, kernel-layout (K, Cout, Cin) tap stacks)."""
    ndf1, ndf2, ndf3, ndf4 = ndfs
    ngf1, ngf2, ngf3, ngf4 = ngfs
    # PyTorch layouts: Conv1d -> (Cout, Cin, K), ConvTranspose1d -> (Cin, Cout, K)
    shapes = [
        ("conv",  (ndf1, 2, 3)),
        ("conv",  (ndf2, ndf1, 3)),
        ("conv",  (ndf3, ndf2, 3)),
        ("conv",  (ndf4, ndf3, 3)),
        ("conv",  (embed_dim, ndf4, 2)),
        ("convT", (embed_dim, ngf4, 2)),
        ("conv",  (ngf3, ngf4, 3)),
        ("conv",  (ngf2, ngf3, 3)),
        ("conv",  (ngf1, ngf2, 3)),
        ("conv",  (2, ngf1, 3)),
    ]
    keys = jax.random.split(key, len(shapes))
    pt_weights, stacked = [], []
    for k, (kind, shp) in zip(keys, shapes):
        fan_in = (shp[1] if kind == "conv" else shp[0]) * shp[2]
        w = jax.random.normal(k, shp, jnp.float32) / np.sqrt(fan_in)
        pt_weights.append(w)
        if kind == "conv":   # (Cout, Cin, K) -> (K, Cout, Cin)
            stacked.append(jnp.transpose(w, (2, 0, 1)))
        else:                # (Cin, Cout, K) -> (K, Cout, Cin)
            stacked.append(jnp.transpose(w, (2, 1, 0)))
    return pt_weights, stacked


# ------------------------------ pure-JAX reference -----------------------------

def aecoder_reference(x, pt_weights):
    we1, we2, we3, we4, we5, wd1, wd2, wd3, wd4, wd5 = pt_weights

    def conv1d(v, w, pad):
        return lax.conv_general_dilated(
            v, w, (1,), [(pad, pad)],
            dimension_numbers=("NCH", "OIH", "NCH"),
            precision=lax.Precision.HIGHEST)

    def leaky(v):
        return jnp.where(v > 0, v, 0.2 * v)

    def pool(v):
        b, c, l = v.shape
        return v.reshape(b, c, l // 2, 2).mean(-1)

    def up(v):
        return jnp.repeat(v, 2, axis=-1)

    h = pool(leaky(conv1d(x, we1, 1)))
    h = pool(leaky(conv1d(h, we2, 1)))
    h = pool(leaky(conv1d(h, we3, 1)))
    h = pool(leaky(conv1d(h, we4, 1)))
    z = conv1d(h, we5, 0)
    # ConvTranspose1d(stride=1, pad=0) == full conv with transposed + flipped kernel
    wt = jnp.flip(jnp.transpose(wd1, (1, 0, 2)), axis=2)
    d = leaky(conv1d(z, wt, 1))
    d = leaky(conv1d(up(d), wd2, 1))
    d = leaky(conv1d(up(d), wd3, 1))
    d = leaky(conv1d(up(d), wd4, 1))
    d = jnp.tanh(conv1d(up(d), wd5, 1))
    return d


# ----------------------------------- main --------------------------------------

if __name__ == "__main__":
    B, L = 8, 32
    embed_dim = 8
    ndfs = (4, 8, 16, 32)
    ngfs = (4, 8, 16, 32)

    key = jax.random.PRNGKey(0)
    kx, kw = jax.random.split(key)
    x = jax.random.normal(kx, (B, 2, L), jnp.float32)

    pt_weights, stacked = init_params(kw, embed_dim, ndfs, ngfs)

    # Single grid step: the whole batch is one (32, 256) lane-packed slab.
    y = jax.block_until_ready(aecoder_forward(x, stacked))

    y_ref = jax.block_until_ready(aecoder_reference(x, pt_weights))
    # Tolerance covers a possible reduced-precision MXU path on some generations;
    # any structural / indexing bug would produce errors orders of magnitude larger.
    np.testing.assert_allclose(np.asarray(y), np.asarray(y_ref), rtol=2e-2, atol=2e-2)

    print("KERNEL_OK")
</pallas_src>

<mosaic_0001>
module attributes {stable_mosaic.version = 11 : i64} {
  func.func @kernel(%arg0: i32, %arg1: memref<32x256xf32, #tpu.memory_space<vmem>>, %arg2: memref<28x32x32xf32, #tpu.memory_space<vmem>>, %arg3: memref<256x240xf32, #tpu.memory_space<vmem>>, %arg4: memref<128x480xf32, #tpu.memory_space<vmem>>, %arg5: memref<16x304xf32, #tpu.memory_space<vmem>>, %arg6: memref<2x256xf32, #tpu.memory_space<vmem>>) attributes {dimension_semantics = [#tpu.dimension_semantics<arbitrary>], iteration_bounds = array<i64: 1>, scalar_prefetch = 0 : i64, scratch_operands = 0 : i64, tpu.core_type = #tpu.core_type<tc>, window_params = [{transform_indices = @transform_0, window_bounds = array<i64: 32, 256>}, {pipeline_mode = #tpu.pipeline_mode<synchronous>, transform_indices = @transform_1, window_bounds = array<i64: 28, 32, 32>}, {pipeline_mode = #tpu.pipeline_mode<synchronous>, transform_indices = @transform_2, window_bounds = array<i64: 256, 240>}, {pipeline_mode = #tpu.pipeline_mode<synchronous>, transform_indices = @transform_3, window_bounds = array<i64: 128, 480>}, {pipeline_mode = #tpu.pipeline_mode<synchronous>, transform_indices = @transform_4, window_bounds = array<i64: 16, 304>}, {transform_indices = @transform_5, window_bounds = array<i64: 2, 256>}]} {
    %c0 = arith.constant 0 : index
    %c0_0 = arith.constant 0 : index
    %0 = vector.load %arg1[%c0, %c0_0] : memref<32x256xf32, #tpu.memory_space<vmem>>, vector<32x256xf32>
    %c0_1 = arith.constant 0 : index
    %c0_2 = arith.constant 0 : index
    %1 = vector.load %arg5[%c0_1, %c0_2] : memref<16x304xf32, #tpu.memory_space<vmem>>, vector<1x256xf32>
    %c1 = arith.constant 1 : index
    %c0_3 = arith.constant 0 : index
    %2 = vector.load %arg5[%c1, %c0_3] : memref<16x304xf32, #tpu.memory_space<vmem>>, vector<1x256xf32>
    %c1_i32 = arith.constant 1 : i32
    %3 = tpu.dynamic_rotate %0 by %c1_i32 dim 1 : vector<32x256xf32>, i32 -> vector<32x256xf32>
    %4 = vector.broadcast %1 : vector<1x256xf32> to vector<32x256xf32>
    %5 = arith.mulf %3, %4 : vector<32x256xf32>
    %c255_i32 = arith.constant 255 : i32
    %6 = tpu.dynamic_rotate %0 by %c255_i32 dim 1 : vector<32x256xf32>, i32 -> vector<32x256xf32>
    %7 = vector.broadcast %2 : vector<1x256xf32> to vector<32x256xf32>
    %8 = arith.mulf %6, %7 : vector<32x256xf32>
    %c0_4 = arith.constant 0 : index
    %c0_5 = arith.constant 0 : index
    %c0_6 = arith.constant 0 : index
    %9 = vector.load %arg2[%c0_4, %c0_5, %c0_6] : memref<28x32x32xf32, #tpu.memory_space<vmem>>, vector<1x32x32xf32>
    %10 = vector.shape_cast %9 : vector<1x32x32xf32> to vector<32x32xf32>
    %c1_7 = arith.constant 1 : index
    %c0_8 = arith.constant 0 : index
    %c0_9 = arith.constant 0 : index
    %11 = vector.load %arg2[%c1_7, %c0_8, %c0_9] : memref<28x32x32xf32, #tpu.memory_space<vmem>>, vector<1x32x32xf32>
    %12 = vector.shape_cast %11 : vector<1x32x32xf32> to vector<32x32xf32>
    %c2 = arith.constant 2 : index
    %c0_10 = arith.constant 0 : index
    %c0_11 = arith.constant 0 : index
    %13 = vector.load %arg2[%c2, %c0_10, %c0_11] : memref<28x32x32xf32, #tpu.memory_space<vmem>>, vector<1x32x32xf32>
    %14 = vector.shape_cast %13 : vector<1x32x32xf32> to vector<32x32xf32>
    %cst = arith.constant dense<0.000000e+00> : vector<32x256xf32>
    %15 = tpu.matmul %10, %5, %cst {dimension_numbers = #tpu.dot_dimension_numbers<[1], [0], [0], [1], [0, 0, 1, 1], [], []>} : vector<32x32xf32>, vector<32x256xf32>, vector<32x256xf32> -> vector<32x256xf32>
    %cst_12 = arith.constant dense<0.000000e+00> : vector<32x256xf32>
    %16 = tpu.matmul %12, %0, %cst_12 {dimension_numbers = #tpu.dot_dimension_numbers<[1], [0], [0], [1], [0, 0, 1, 1], [], []>} : vector<32x32xf32>, vector<32x256xf32>, vector<32x256xf32> -> vector<32x256xf32>
    %17 = arith.addf %15, %16 : vector<32x256xf32>
    %cst_13 = arith.constant dense<0.000000e+00> : vector<32x256xf32>
    %18 = tpu.matmul %14, %8, %cst_13 {dimension_numbers = #tpu.dot_dimension_numbers<[1], [0], [0], [1], [0, 0, 1, 1], [], []>} : vector<32x32xf32>, vector<32x256xf32>, vector<32x256xf32> -> vector<32x256xf32>
    %19 = arith.addf %17, %18 : vector<32x256xf32>
    %cst_14 = arith.constant 0.000000e+00 : f32
    %20 = vector.broadcast %cst_14 : f32 to vector<32x256xf32>
    %21 = arith.cmpf ogt, %19, %20 : vector<32x256xf32>
    %cst_15 = arith.constant 2.000000e-01 : f32
    %22 = vector.broadcast %cst_15 : f32 to vector<32x256xf32>
    %23 = arith.mulf %22, %19 : vector<32x256xf32>
    %24 = arith.select %21, %19, %23 : vector<32x256xi1>, vector<32x256xf32>
    %c0_16 = arith.constant 0 : index
    %c0_17 = arith.constant 0 : index
    %25 = vector.load %arg3[%c0_16, %c0_17] : memref<256x240xf32, #tpu.memory_space<vmem>>, vector<256x128xf32>
    %cst_18 = arith.constant dense<0.000000e+00> : vector<32x128xf32>
    %26 = tpu.matmul %24, %25, %cst_18 {dimension_numbers = #tpu.dot_dimension_numbers<[1], [0], [0], [1], [0, 0, 1, 1], [], []>} : vector<32x256xf32>, vector<256x128xf32>, vector<32x128xf32> -> vector<32x128xf32>
    %c2_19 = arith.constant 2 : index
    %c0_20 = arith.constant 0 : index
    %27 = vector.load %arg5[%c2_19, %c0_20] : memref<16x304xf32, #tpu.memory_space<vmem>>, vector<1x128xf32>
    %c3 = arith.constant 3 : index
    %c0_21 = arith.constant 0 : index
    %28 = vector.load %arg5[%c3, %c0_21] : memref<16x304xf32, #tpu.memory_space<vmem>>, vector<1x128xf32>
    %c1_i32_22 = arith.constant 1 : i32
    %29 = tpu.dynamic_rotate %26 by %c1_i32_22 dim 1 : vector<32x128xf32>, i32 -> vector<32x128xf32>
    %30 = vector.broadcast %27 : vector<1x128xf32> to vector<32x128xf32>
    %31 = arith.mulf %29, %30 : vector<32x128xf32>
    %c127_i32 = arith.constant 127 : i32
    %32 = tpu.dynamic_rotate %26 by %c127_i32 dim 1 : vector<32x128xf32>, i32 -> vector<32x128xf32>
    %33 = vector.broadcast %28 : vector<1x128xf32> to vector<32x128xf32>
    %34 = arith.mulf %32, %33 : vector<32x128xf32>
    %c3_23 = arith.constant 3 : index
    %c0_24 = arith.constant 0 : index
    %c0_25 = arith.constant 0 : index
    %35 = vector.load %arg2[%c3_23, %c0_24, %c0_25] : memref<28x32x32xf32, #tpu.memory_space<vmem>>, vector<1x32x32xf32>
    %36 = vector.shape_cast %35 : vector<1x32x32xf32> to vector<32x32xf32>
    %c4 = arith.constant 4 : index
    %c0_26 = arith.constant 0 : index
    %c0_27 = arith.constant 0 : index
    %37 = vector.load %arg2[%c4, %c0_26, %c0_27] : memref<28x32x32xf32, #tpu.memory_space<vmem>>, vector<1x32x32xf32>
    %38 = vector.shape_cast %37 : vector<1x32x32xf32> to vector<32x32xf32>
    %c5 = arith.constant 5 : index
    %c0_28 = arith.constant 0 : index
    %c0_29 = arith.constant 0 : index
    %39 = vector.load %arg2[%c5, %c0_28, %c0_29] : memref<28x32x32xf32, #tpu.memory_space<vmem>>, vector<1x32x32xf32>
    %40 = vector.shape_cast %39 : vector<1x32x32xf32> to vector<32x32xf32>
    %cst_30 = arith.constant dense<0.000000e+00> : vector<32x128xf32>
    %41 = tpu.matmul %36, %31, %cst_30 {dimension_numbers = #tpu.dot_dimension_numbers<[1], [0], [0], [1], [0, 0, 1, 1], [], []>} : vector<32x32xf32>, vector<32x128xf32>, vector<32x128xf32> -> vector<32x128xf32>
    %cst_31 = arith.constant dense<0.000000e+00> : vector<32x128xf32>
    %42 = tpu.matmul %38, %26, %cst_31 {dimension_numbers = #tpu.dot_dimension_numbers<[1], [0], [0], [1], [0, 0, 1, 1], [], []>} : vector<32x32xf32>, vector<32x128xf32>, vector<32x128xf32> -> vector<32x128xf32>
    %43 = arith.addf %41, %42 : vector<32x128xf32>
    %cst_32 = arith.constant dense<0.000000e+00> : vector<32x128xf32>
    %44 = tpu.matmul %40, %34, %cst_32 {dimension_numbers = #tpu.dot_dimension_numbers<[1], [0], [0], [1], [0, 0, 1, 1], [], []>} : vector<32x32xf32>, vector<32x128xf32>, vector<32x128xf32> -> vector<32x128xf32>
    %45 = arith.addf %43, %44 : vector<32x128xf32>
    %cst_33 = arith.constant 0.000000e+00 : f32
    %46 = vector.broadcast %cst_33 : f32 to vector<32x128xf32>
    %47 = arith.cmpf ogt, %45, %46 : vector<32x128xf32>
    %cst_34 = arith.constant 2.000000e-01 : f32
    %48 = vector.broadcast %cst_34 : f32 to vector<32x128xf32>
    %49 = arith.mulf %48, %45 : vector<32x128xf32>
    %50 = arith.select %47, %45, %49 : vector<32x128xi1>, vector<32x128xf32>
    %c0_35 = arith.constant 0 : index
    %c128 = arith.constant 128 : index
    %51 = vector.load %arg3[%c0_35, %c128] : memref<256x240xf32, #tpu.memory_space<vmem>>, vector<128x64xf32>
    %cst_36 = arith.constant dense<0.000000e+00> : vector<32x64xf32>
    %52 = tpu.matmul %50, %51, %cst_36 {dimension_numbers = #tpu.dot_dimension_numbers<[1], [0], [0], [1], [0, 0, 1, 1], [], []>} : vector<32x128xf32>, vector<128x64xf32>, vector<32x64xf32> -> vector<32x64xf32>
    %c4_37 = arith.constant 4 : index
    %c0_38 = arith.constant 0 : index
    %53 = vector.load %arg5[%c4_37, %c0_38] : memref<16x304xf32, #tpu.memory_space<vmem>>, vector<1x64xf32>
    %c5_39 = arith.constant 5 : index
    %c0_40 = arith.constant 0 : index
    %54 = vector.load %arg5[%c5_39, %c0_40] : memref<16x304xf32, #tpu.memory_space<vmem>>, vector<1x64xf32>
    %c1_i32_41 = arith.constant 1 : i32
    %55 = tpu.dynamic_rotate %52 by %c1_i32_41 dim 1 : vector<32x64xf32>, i32 -> vector<32x64xf32>
    %56 = vector.broadcast %53 : vector<1x64xf32> to vector<32x64xf32>
    %57 = arith.mulf %55, %56 : vector<32x64xf32>
    %c63_i32 = arith.constant 63 : i32
    %58 = tpu.dynamic_rotate %52 by %c63_i32 dim 1 : vector<32x64xf32>, i32 -> vector<32x64xf32>
    %59 = vector.broadcast %54 : vector<1x64xf32> to vector<32x64xf32>
    %60 = arith.mulf %58, %59 : vector<32x64xf32>
    %c6 = arith.constant 6 : index
    %c0_42 = arith.constant 0 : index
    %c0_43 = arith.constant 0 : index
    %61 = vector.load %arg2[%c6, %c0_42, %c0_43] : memref<28x32x32xf32, #tpu.memory_space<vmem>>, vector<1x32x32xf32>
    %62 = vector.shape_cast %61 : vector<1x32x32xf32> to vector<32x32xf32>
    %c7 = arith.constant 7 : index
    %c0_44 = arith.constant 0 : index
    %c0_45 = arith.constant 0 : index
    %63 = vector.load %arg2[%c7, %c0_44, %c0_45] : memref<28x32x32xf32, #tpu.memory_space<vmem>>, vector<1x32x32xf32>
    %64 = vector.shape_cast %63 : vector<1x32x32xf32> to vector<32x32xf32>
    %c8 = arith.constant 8 : index
    %c0_46 = arith.constant 0 : index
    %c0_47 = arith.constant 0 : index
    %65 = vector.load %arg2[%c8, %c0_46, %c0_47] : memref<28x32x32xf32, #tpu.memory_space<vmem>>, vector<1x32x32xf32>
    %66 = vector.shape_cast %65 : vector<1x32x32xf32> to vector<32x32xf32>
    %cst_48 = arith.constant dense<0.000000e+00> : vector<32x64xf32>
    %67 = tpu.matmul %62, %57, %cst_48 {dimension_numbers = #tpu.dot_dimension_numbers<[1], [0], [0], [1], [0, 0, 1, 1], [], []>} : vector<32x32xf32>, vector<32x64xf32>, vector<32x64xf32> -> vector<32x64xf32>
    %cst_49 = arith.constant dense<0.000000e+00> : vector<32x64xf32>
    %68 = tpu.matmul %64, %52, %cst_49 {dimension_numbers = #tpu.dot_dimension_numbers<[1], [0], [0], [1], [0, 0, 1, 1], [], []>} : vector<32x32xf32>, vector<32x64xf32>, vector<32x64xf32> -> vector<32x64xf32>
    %69 = arith.addf %67, %68 : vector<32x64xf32>
    %cst_50 = arith.constant dense<0.000000e+00> : vector<32x64xf32>
    %70 = tpu.matmul %66, %60, %cst_50 {dimension_numbers = #tpu.dot_dimension_numbers<[1], [0], [0], [1], [0, 0, 1, 1], [], []>} : vector<32x32xf32>, vector<32x64xf32>, vector<32x64xf32> -> vector<32x64xf32>
    %71 = arith.addf %69, %70 : vector<32x64xf32>
    %cst_51 = arith.constant 0.000000e+00 : f32
    %72 = vector.broadcast %cst_51 : f32 to vector<32x64xf32>
    %73 = arith.cmpf ogt, %71, %72 : vector<32x64xf32>
    %cst_52 = arith.constant 2.000000e-01 : f32
    %74 = vector.broadcast %cst_52 : f32 to vector<32x64xf32>
    %75 = arith.mulf %74, %71 : vector<32x64xf32>
    %76 = arith.select %73, %71, %75 : vector<32x64xi1>, vector<32x64xf32>
    %c0_53 = arith.constant 0 : index
    %c192 = arith.constant 192 : index
    %77 = vector.load %arg3[%c0_53, %c192] : memref<256x240xf32, #tpu.memory_space<vmem>>, vector<64x32xf32>
    %cst_54 = arith.constant dense<0.000000e+00> : vector<32x32xf32>
    %78 = tpu.matmul %76, %77, %cst_54 {dimension_numbers = #tpu.dot_dimension_numbers<[1], [0], [0], [1], [0, 0, 1, 1], [], []>} : vector<32x64xf32>, vector<64x32xf32>, vector<32x32xf32> -> vector<32x32xf32>
    %c6_55 = arith.constant 6 : index
    %c0_56 = arith.constant 0 : index
    %79 = vector.load %arg5[%c6_55, %c0_56] : memref<16x304xf32, #tpu.memory_space<vmem>>, vector<1x32xf32>
    %c7_57 = arith.constant 7 : index
    %c0_58 = arith.constant 0 : index
    %80 = vector.load %arg5[%c7_57, %c0_58] : memref<16x304xf32, #tpu.memory_space<vmem>>, vector<1x32xf32>
    %c1_i32_59 = arith.constant 1 : i32
    %81 = tpu.dynamic_rotate %78 by %c1_i32_59 dim 1 : vector<32x32xf32>, i32 -> vector<32x32xf32>
    %82 = vector.broadcast %79 : vector<1x32xf32> to vector<32x32xf32>
    %83 = arith.mulf %81, %82 : vector<32x32xf32>
    %c31_i32 = arith.constant 31 : i32
    %84 = tpu.dynamic_rotate %78 by %c31_i32 dim 1 : vector<32x32xf32>, i32 -> vector<32x32xf32>
    %85 = vector.broadcast %80 : vector<1x32xf32> to vector<32x32xf32>
    %86 = arith.mulf %84, %85 : vector<32x32xf32>
    %c9 = arith.constant 9 : index
    %c0_60 = arith.constant 0 : index
    %c0_61 = arith.constant 0 : index
    %87 = vector.load %arg2[%c9, %c0_60, %c0_61] : memref<28x32x32xf32, #tpu.memory_space<vmem>>, vector<1x32x32xf32>
    %88 = vector.shape_cast %87 : vector<1x32x32xf32> to vector<32x32xf32>
    %c10 = arith.constant 10 : index
    %c0_62 = arith.constant 0 : index
    %c0_63 = arith.constant 0 : index
    %89 = vector.load %arg2[%c10, %c0_62, %c0_63] : memref<28x32x32xf32, #tpu.memory_space<vmem>>, vector<1x32x32xf32>
    %90 = vector.shape_cast %89 : vector<1x32x32xf32> to vector<32x32xf32>
    %c11 = arith.constant 11 : index
    %c0_64 = arith.constant 0 : index
    %c0_65 = arith.constant 0 : index
    %91 = vector.load %arg2[%c11, %c0_64, %c0_65] : memref<28x32x32xf32, #tpu.memory_space<vmem>>, vector<1x32x32xf32>
    %92 = vector.shape_cast %91 : vector<1x32x32xf32> to vector<32x32xf32>
    %cst_66 = arith.constant dense<0.000000e+00> : vector<32x32xf32>
    %93 = tpu.matmul %88, %83, %cst_66 {dimension_numbers = #tpu.dot_dimension_numbers<[1], [0], [0], [1], [0, 0, 1, 1], [], []>} : vector<32x32xf32>, vector<32x32xf32>, vector<32x32xf32> -> vector<32x32xf32>
    %cst_67 = arith.constant dense<0.000000e+00> : vector<32x32xf32>
    %94 = tpu.matmul %90, %78, %cst_67 {dimension_numbers = #tpu.dot_dimension_numbers<[1], [0], [0], [1], [0, 0, 1, 1], [], []>} : vector<32x32xf32>, vector<32x32xf32>, vector<32x32xf32> -> vector<32x32xf32>
    %95 = arith.addf %93, %94 : vector<32x32xf32>
    %cst_68 = arith.constant dense<0.000000e+00> : vector<32x32xf32>
    %96 = tpu.matmul %92, %86, %cst_68 {dimension_numbers = #tpu.dot_dimension_numbers<[1], [0], [0], [1], [0, 0, 1, 1], [], []>} : vector<32x32xf32>, vector<32x32xf32>, vector<32x32xf32> -> vector<32x32xf32>
    %97 = arith.addf %95, %96 : vector<32x32xf32>
    %cst_69 = arith.constant 0.000000e+00 : f32
    %98 = vector.broadcast %cst_69 : f32 to vector<32x32xf32>
    %99 = arith.cmpf ogt, %97, %98 : vector<32x32xf32>
    %cst_70 = arith.constant 2.000000e-01 : f32
    %100 = vector.broadcast %cst_70 : f32 to vector<32x32xf32>
    %101 = arith.mulf %100, %97 : vector<32x32xf32>
    %102 = arith.select %99, %97, %101 : vector<32x32xi1>, vector<32x32xf32>
    %c0_71 = arith.constant 0 : index
    %c224 = arith.constant 224 : index
    %103 = vector.load %arg3[%c0_71, %c224] : memref<256x240xf32, #tpu.memory_space<vmem>>, vector<32x16xf32>
    %cst_72 = arith.constant dense<0.000000e+00> : vector<32x16xf32>
    %104 = tpu.matmul %102, %103, %cst_72 {dimension_numbers = #tpu.dot_dimension_numbers<[1], [0], [0], [1], [0, 0, 1, 1], [], []>} : vector<32x32xf32>, vector<32x16xf32>, vector<32x16xf32> -> vector<32x16xf32>
    %c0_73 = arith.constant 0 : index
    %c256 = arith.constant 256 : index
    %105 = vector.load %arg5[%c0_73, %c256] : memref<16x304xf32, #tpu.memory_space<vmem>>, vector<16x8xf32>
    %c0_74 = arith.constant 0 : index
    %c264 = arith.constant 264 : index
    %106 = vector.load %arg5[%c0_74, %c264] : memref<16x304xf32, #tpu.memory_space<vmem>>, vector<16x8xf32>
    %c12 = arith.constant 12 : index
    %c0_75 = arith.constant 0 : index
    %c0_76 = arith.constant 0 : index
    %107 = vector.load %arg2[%c12, %c0_75, %c0_76] : memref<28x32x32xf32, #tpu.memory_space<vmem>>, vector<1x32x32xf32>
    %108 = vector.shape_cast %107 : vector<1x32x32xf32> to vector<32x32xf32>
    %cst_77 = arith.constant dense<0.000000e+00> : vector<32x8xf32>
    %109 = tpu.matmul %104, %105, %cst_77 {dimension_numbers = #tpu.dot_dimension_numbers<[1], [0], [0], [1], [0, 0, 1, 1], [], []>} : vector<32x16xf32>, vector<16x8xf32>, vector<32x8xf32> -> vector<32x8xf32>
    %cst_78 = arith.constant dense<0.000000e+00> : vector<32x8xf32>
    %110 = tpu.matmul %108, %109, %cst_78 {dimension_numbers = #tpu.dot_dimension_numbers<[1], [0], [0], [1], [0, 0, 1, 1], [], []>} : vector<32x32xf32>, vector<32x8xf32>, vector<32x8xf32> -> vector<32x8xf32>
    %c13 = arith.constant 13 : index
    %c0_79 = arith.constant 0 : index
    %c0_80 = arith.constant 0 : index
    %111 = vector.load %arg2[%c13, %c0_79, %c0_80] : memref<28x32x32xf32, #tpu.memory_space<vmem>>, vector<1x32x32xf32>
    %112 = vector.shape_cast %111 : vector<1x32x32xf32> to vector<32x32xf32>
    %cst_81 = arith.constant dense<0.000000e+00> : vector<32x8xf32>
    %113 = tpu.matmul %104, %106, %cst_81 {dimension_numbers = #tpu.dot_dimension_numbers<[1], [0], [0], [1], [0, 0, 1, 1], [], []>} : vector<32x16xf32>, vector<16x8xf32>, vector<32x8xf32> -> vector<32x8xf32>
    %cst_82 = arith.constant dense<0.000000e+00> : vector<32x8xf32>
    %114 = tpu.matmul %112, %113, %cst_82 {dimension_numbers = #tpu.dot_dimension_numbers<[1], [0], [0], [1], [0, 0, 1, 1], [], []>} : vector<32x32xf32>, vector<32x8xf32>, vector<32x8xf32> -> vector<32x8xf32>
    %115 = arith.addf %110, %114 : vector<32x8xf32>
    %c0_83 = arith.constant 0 : index
    %c272 = arith.constant 272 : index
    %116 = vector.load %arg5[%c0_83, %c272] : memref<16x304xf32, #tpu.memory_space<vmem>>, vector<8x16xf32>
    %c0_84 = arith.constant 0 : index
    %c288 = arith.constant 288 : index
    %117 = vector.load %arg5[%c0_84, %c288] : memref<16x304xf32, #tpu.memory_space<vmem>>, vector<8x16xf32>
    %c14 = arith.constant 14 : index
    %c0_85 = arith.constant 0 : index
    %c0_86 = arith.constant 0 : index
    %118 = vector.load %arg2[%c14, %c0_85, %c0_86] : memref<28x32x32xf32, #tpu.memory_space<vmem>>, vector<1x32x32xf32>
    %119 = vector.shape_cast %118 : vector<1x32x32xf32> to vector<32x32xf32>
    %cst_87 = arith.constant dense<0.000000e+00> : vector<32x8xf32>
    %120 = tpu.matmul %119, %115, %cst_87 {dimension_numbers = #tpu.dot_dimension_numbers<[1], [0], [0], [1], [0, 0, 1, 1], [], []>} : vector<32x32xf32>, vector<32x8xf32>, vector<32x8xf32> -> vector<32x8xf32>
    %cst_88 = arith.constant dense<0.000000e+00> : vector<32x16xf32>
    %121 = tpu.matmul %120, %116, %cst_88 {dimension_numbers = #tpu.dot_dimension_numbers<[1], [0], [0], [1], [0, 0, 1, 1], [], []>} : vector<32x8xf32>, vector<8x16xf32>, vector<32x16xf32> -> vector<32x16xf32>
    %c15 = arith.constant 15 : index
    %c0_89 = arith.constant 0 : index
    %c0_90 = arith.constant 0 : index
    %122 = vector.load %arg2[%c15, %c0_89, %c0_90] : memref<28x32x32xf32, #tpu.memory_space<vmem>>, vector<1x32x32xf32>
    %123 = vector.shape_cast %122 : vector<1x32x32xf32> to vector<32x32xf32>
    %cst_91 = arith.constant dense<0.000000e+00> : vector<32x8xf32>
    %124 = tpu.matmul %123, %115, %cst_91 {dimension_numbers = #tpu.dot_dimension_numbers<[1], [0], [0], [1], [0, 0, 1, 1], [], []>} : vector<32x32xf32>, vector<32x8xf32>, vector<32x8xf32> -> vector<32x8xf32>
    %cst_92 = arith.constant dense<0.000000e+00> : vector<32x16xf32>
    %125 = tpu.matmul %124, %117, %cst_92 {dimension_numbers = #tpu.dot_dimension_numbers<[1], [0], [0], [1], [0, 0, 1, 1], [], []>} : vector<32x8xf32>, vector<8x16xf32>, vector<32x16xf32> -> vector<32x16xf32>
    %126 = arith.addf %121, %125 : vector<32x16xf32>
    %cst_93 = arith.constant 0.000000e+00 : f32
    %127 = vector.broadcast %cst_93 : f32 to vector<32x16xf32>
    %128 = arith.cmpf ogt, %126, %127 : vector<32x16xf32>
    %cst_94 = arith.constant 2.000000e-01 : f32
    %129 = vector.broadcast %cst_94 : f32 to vector<32x16xf32>
    %130 = arith.mulf %129, %126 : vector<32x16xf32>
    %131 = arith.select %128, %126, %130 : vector<32x16xi1>, vector<32x16xf32>
    %c0_95 = arith.constant 0 : index
    %c0_96 = arith.constant 0 : index
    %132 = vector.load %arg4[%c0_95, %c0_96] : memref<128x480xf32, #tpu.memory_space<vmem>>, vector<16x32xf32>
    %cst_97 = arith.constant dense<0.000000e+00> : vector<32x32xf32>
    %133 = tpu.matmul %131, %132, %cst_97 {dimension_numbers = #tpu.dot_dimension_numbers<[1], [0], [0], [1], [0, 0, 1, 1], [], []>} : vector<32x16xf32>, vector<16x32xf32>, vector<32x32xf32> -> vector<32x32xf32>
    %c6_98 = arith.constant 6 : index
    %c0_99 = arith.constant 0 : index
    %134 = vector.load %arg5[%c6_98, %c0_99] : memref<16x304xf32, #tpu.memory_space<vmem>>, vector<1x32xf32>
    %c7_100 = arith.constant 7 : index
    %c0_101 = arith.constant 0 : index
    %135 = vector.load %arg5[%c7_100, %c0_101] : memref<16x304xf32, #tpu.memory_space<vmem>>, vector<1x32xf32>
    %c1_i32_102 = arith.constant 1 : i32
    %136 = tpu.dynamic_rotate %133 by %c1_i32_102 dim 1 : vector<32x32xf32>, i32 -> vector<32x32xf32>
    %137 = vector.broadcast %134 : vector<1x32xf32> to vector<32x32xf32>
    %138 = arith.mulf %136, %137 : vector<32x32xf32>
    %c31_i32_103 = arith.constant 31 : i32
    %139 = tpu.dynamic_rotate %133 by %c31_i32_103 dim 1 : vector<32x32xf32>, i32 -> vector<32x32xf32>
    %140 = vector.broadcast %135 : vector<1x32xf32> to vector<32x32xf32>
    %141 = arith.mulf %139, %140 : vector<32x32xf32>
    %c16 = arith.constant 16 : index
    %c0_104 = arith.constant 0 : index
    %c0_105 = arith.constant 0 : index
    %142 = vector.load %arg2[%c16, %c0_104, %c0_105] : memref<28x32x32xf32, #tpu.memory_space<vmem>>, vector<1x32x32xf32>
    %143 = vector.shape_cast %142 : vector<1x32x32xf32> to vector<32x32xf32>
    %c17 = arith.constant 17 : index
    %c0_106 = arith.constant 0 : index
    %c0_107 = arith.constant 0 : index
    %144 = vector.load %arg2[%c17, %c0_106, %c0_107] : memref<28x32x32xf32, #tpu.memory_space<vmem>>, vector<1x32x32xf32>
    %145 = vector.shape_cast %144 : vector<1x32x32xf32> to vector<32x32xf32>
    %c18 = arith.constant 18 : index
    %c0_108 = arith.constant 0 : index
    %c0_109 = arith.constant 0 : index
    %146 = vector.load %arg2[%c18, %c0_108, %c0_109] : memref<28x32x32xf32, #tpu.memory_space<vmem>>, vector<1x32x32xf32>
    %147 = vector.shape_cast %146 : vector<1x32x32xf32> to vector<32x32xf32>
    %cst_110 = arith.constant dense<0.000000e+00> : vector<32x32xf32>
    %148 = tpu.matmul %143, %138, %cst_110 {dimension_numbers = #tpu.dot_dimension_numbers<[1], [0], [0], [1], [0, 0, 1, 1], [], []>} : vector<32x32xf32>, vector<32x32xf32>, vector<32x32xf32> -> vector<32x32xf32>
    %cst_111 = arith.constant dense<0.000000e+00> : vector<32x32xf32>
    %149 = tpu.matmul %145, %133, %cst_111 {dimension_numbers = #tpu.dot_dimension_numbers<[1], [0], [0], [1], [0, 0, 1, 1], [], []>} : vector<32x32xf32>, vector<32x32xf32>, vector<32x32xf32> -> vector<32x32xf32>
    %150 = arith.addf %148, %149 : vector<32x32xf32>
    %cst_112 = arith.constant dense<0.000000e+00> : vector<32x32xf32>
    %151 = tpu.matmul %147, %141, %cst_112 {dimension_numbers = #tpu.dot_dimension_numbers<[1], [0], [0], [1], [0, 0, 1, 1], [], []>} : vector<32x32xf32>, vector<32x32xf32>, vector<32x32xf32> -> vector<32x32xf32>
    %152 = arith.addf %150, %151 : vector<32x32xf32>
    %cst_113 = arith.constant 0.000000e+00 : f32
    %153 = vector.broadcast %cst_113 : f32 to vector<32x32xf32>
    %154 = arith.cmpf ogt, %152, %153 : vector<32x32xf32>
    %cst_114 = arith.constant 2.000000e-01 : f32
    %155 = vector.broadcast %cst_114 : f32 to vector<32x32xf32>
    %156 = arith.mulf %155, %152 : vector<32x32xf32>
    %157 = arith.select %154, %152, %156 : vector<32x32xi1>, vector<32x32xf32>
    %c0_115 = arith.constant 0 : index
    %c32 = arith.constant 32 : index
    %158 = vector.load %arg4[%c0_115, %c32] : memref<128x480xf32, #tpu.memory_space<vmem>>, vector<32x64xf32>
    %cst_116 = arith.constant dense<0.000000e+00> : vector<32x64xf32>
    %159 = tpu.matmul %157, %158, %cst_116 {dimension_numbers = #tpu.dot_dimension_numbers<[1], [0], [0], [1], [0, 0, 1, 1], [], []>} : vector<32x32xf32>, vector<32x64xf32>, vector<32x64xf32> -> vector<32x64xf32>
    %c4_117 = arith.constant 4 : index
    %c0_118 = arith.constant 0 : index
    %160 = vector.load %arg5[%c4_117, %c0_118] : memref<16x304xf32, #tpu.memory_space<vmem>>, vector<1x64xf32>
    %c5_119 = arith.constant 5 : index
    %c0_120 = arith.constant 0 : index
    %161 = vector.load %arg5[%c5_119, %c0_120] : memref<16x304xf32, #tpu.memory_space<vmem>>, vector<1x64xf32>
    %c1_i32_121 = arith.constant 1 : i32
    %162 = tpu.dynamic_rotate %159 by %c1_i32_121 dim 1 : vector<32x64xf32>, i32 -> vector<32x64xf32>
    %163 = vector.broadcast %160 : vector<1x64xf32> to vector<32x64xf32>
    %164 = arith.mulf %162, %163 : vector<32x64xf32>
    %c63_i32_122 = arith.constant 63 : i32
    %165 = tpu.dynamic_rotate %159 by %c63_i32_122 dim 1 : vector<32x64xf32>, i32 -> vector<32x64xf32>
    %166 = vector.broadcast %161 : vector<1x64xf32> to vector<32x64xf32>
    %167 = arith.mulf %165, %166 : vector<32x64xf32>
    %c19 = arith.constant 19 : index
    %c0_123 = arith.constant 0 : index
    %c0_124 = arith.constant 0 : index
    %168 = vector.load %arg2[%c19, %c0_123, %c0_124] : memref<28x32x32xf32, #tpu.memory_space<vmem>>, vector<1x32x32xf32>
    %169 = vector.shape_cast %168 : vector<1x32x32xf32> to vector<32x32xf32>
    %c20 = arith.constant 20 : index
    %c0_125 = arith.constant 0 : index
    %c0_126 = arith.constant 0 : index
    %170 = vector.load %arg2[%c20, %c0_125, %c0_126] : memref<28x32x32xf32, #tpu.memory_space<vmem>>, vector<1x32x32xf32>
    %171 = vector.shape_cast %170 : vector<1x32x32xf32> to vector<32x32xf32>
    %c21 = arith.constant 21 : index
    %c0_127 = arith.constant 0 : index
    %c0_128 = arith.constant 0 : index
    %172 = vector.load %arg2[%c21, %c0_127, %c0_128] : memref<28x32x32xf32, #tpu.memory_space<vmem>>, vector<1x32x32xf32>
    %173 = vector.shape_cast %172 : vector<1x32x32xf32> to vector<32x32xf32>
    %cst_129 = arith.constant dense<0.000000e+00> : vector<32x64xf32>
    %174 = tpu.matmul %169, %164, %cst_129 {dimension_numbers = #tpu.dot_dimension_numbers<[1], [0], [0], [1], [0, 0, 1, 1], [], []>} : vector<32x32xf32>, vector<32x64xf32>, vector<32x64xf32> -> vector<32x64xf32>
    %cst_130 = arith.constant dense<0.000000e+00> : vector<32x64xf32>
    %175 = tpu.matmul %171, %159, %cst_130 {dimension_numbers = #tpu.dot_dimension_numbers<[1], [0], [0], [1], [0, 0, 1, 1], [], []>} : vector<32x32xf32>, vector<32x64xf32>, vector<32x64xf32> -> vector<32x64xf32>
    %176 = arith.addf %174, %175 : vector<32x64xf32>
    %cst_131 = arith.constant dense<0.000000e+00> : vector<32x64xf32>
    %177 = tpu.matmul %173, %167, %cst_131 {dimension_numbers = #tpu.dot_dimension_numbers<[1], [0], [0], [1], [0, 0, 1, 1], [], []>} : vector<32x32xf32>, vector<32x64xf32>, vector<32x64xf32> -> vector<32x64xf32>
    %178 = arith.addf %176, %177 : vector<32x64xf32>
    %cst_132 = arith.constant 0.000000e+00 : f32
    %179 = vector.broadcast %cst_132 : f32 to vector<32x64xf32>
    %180 = arith.cmpf ogt, %178, %179 : vector<32x64xf32>
    %cst_133 = arith.constant 2.000000e-01 : f32
    %181 = vector.broadcast %cst_133 : f32 to vector<32x64xf32>
    %182 = arith.mulf %181, %178 : vector<32x64xf32>
    %183 = arith.select %180, %178, %182 : vector<32x64xi1>, vector<32x64xf32>
    %c0_134 = arith.constant 0 : index
    %c96 = arith.constant 96 : index
    %184 = vector.load %arg4[%c0_134, %c96] : memref<128x480xf32, #tpu.memory_space<vmem>>, vector<64x128xf32>
    %cst_135 = arith.constant dense<0.000000e+00> : vector<32x128xf32>
    %185 = tpu.matmul %183, %184, %cst_135 {dimension_numbers = #tpu.dot_dimension_numbers<[1], [0], [0], [1], [0, 0, 1, 1], [], []>} : vector<32x64xf32>, vector<64x128xf32>, vector<32x128xf32> -> vector<32x128xf32>
    %c2_136 = arith.constant 2 : index
    %c0_137 = arith.constant 0 : index
    %186 = vector.load %arg5[%c2_136, %c0_137] : memref<16x304xf32, #tpu.memory_space<vmem>>, vector<1x128xf32>
    %c3_138 = arith.constant 3 : index
    %c0_139 = arith.constant 0 : index
    %187 = vector.load %arg5[%c3_138, %c0_139] : memref<16x304xf32, #tpu.memory_space<vmem>>, vector<1x128xf32>
    %c1_i32_140 = arith.constant 1 : i32
    %188 = tpu.dynamic_rotate %185 by %c1_i32_140 dim 1 : vector<32x128xf32>, i32 -> vector<32x128xf32>
    %189 = vector.broadcast %186 : vector<1x128xf32> to vector<32x128xf32>
    %190 = arith.mulf %188, %189 : vector<32x128xf32>
    %c127_i32_141 = arith.constant 127 : i32
    %191 = tpu.dynamic_rotate %185 by %c127_i32_141 dim 1 : vector<32x128xf32>, i32 -> vector<32x128xf32>
    %192 = vector.broadcast %187 : vector<1x128xf32> to vector<32x128xf32>
    %193 = arith.mulf %191, %192 : vector<32x128xf32>
    %c22 = arith.constant 22 : index
    %c0_142 = arith.constant 0 : index
    %c0_143 = arith.constant 0 : index
    %194 = vector.load %arg2[%c22, %c0_142, %c0_143] : memref<28x32x32xf32, #tpu.memory_space<vmem>>, vector<1x32x32xf32>
    %195 = vector.shape_cast %194 : vector<1x32x32xf32> to vector<32x32xf32>
    %c23 = arith.constant 23 : index
    %c0_144 = arith.constant 0 : index
    %c0_145 = arith.constant 0 : index
    %196 = vector.load %arg2[%c23, %c0_144, %c0_145] : memref<28x32x32xf32, #tpu.memory_space<vmem>>, vector<1x32x32xf32>
    %197 = vector.shape_cast %196 : vector<1x32x32xf32> to vector<32x32xf32>
    %c24 = arith.constant 24 : index
    %c0_146 = arith.constant 0 : index
    %c0_147 = arith.constant 0 : index
    %198 = vector.load %arg2[%c24, %c0_146, %c0_147] : memref<28x32x32xf32, #tpu.memory_space<vmem>>, vector<1x32x32xf32>
    %199 = vector.shape_cast %198 : vector<1x32x32xf32> to vector<32x32xf32>
    %cst_148 = arith.constant dense<0.000000e+00> : vector<32x128xf32>
    %200 = tpu.matmul %195, %190, %cst_148 {dimension_numbers = #tpu.dot_dimension_numbers<[1], [0], [0], [1], [0, 0, 1, 1], [], []>} : vector<32x32xf32>, vector<32x128xf32>, vector<32x128xf32> -> vector<32x128xf32>
    %cst_149 = arith.constant dense<0.000000e+00> : vector<32x128xf32>
    %201 = tpu.matmul %197, %185, %cst_149 {dimension_numbers = #tpu.dot_dimension_numbers<[1], [0], [0], [1], [0, 0, 1, 1], [], []>} : vector<32x32xf32>, vector<32x128xf32>, vector<32x128xf32> -> vector<32x128xf32>
    %202 = arith.addf %200, %201 : vector<32x128xf32>
    %cst_150 = arith.constant dense<0.000000e+00> : vector<32x128xf32>
    %203 = tpu.matmul %199, %193, %cst_150 {dimension_numbers = #tpu.dot_dimension_numbers<[1], [0], [0], [1], [0, 0, 1, 1], [], []>} : vector<32x32xf32>, vector<32x128xf32>, vector<32x128xf32> -> vector<32x128xf32>
    %204 = arith.addf %202, %203 : vector<32x128xf32>
    %cst_151 = arith.constant 0.000000e+00 : f32
    %205 = vector.broadcast %cst_151 : f32 to vector<32x128xf32>
    %206 = arith.cmpf ogt, %204, %205 : vector<32x128xf32>
    %cst_152 = arith.constant 2.000000e-01 : f32
    %207 = vector.broadcast %cst_152 : f32 to vector<32x128xf32>
    %208 = arith.mulf %207, %204 : vector<32x128xf32>
    %209 = arith.select %206, %204, %208 : vector<32x128xi1>, vector<32x128xf32>
    %c0_153 = arith.constant 0 : index
    %c224_154 = arith.constant 224 : index
    %210 = vector.load %arg4[%c0_153, %c224_154] : memref<128x480xf32, #tpu.memory_space<vmem>>, vector<128x256xf32>
    %cst_155 = arith.constant dense<0.000000e+00> : vector<32x256xf32>
    %211 = tpu.matmul %209, %210, %cst_155 {dimension_numbers = #tpu.dot_dimension_numbers<[1], [0], [0], [1], [0, 0, 1, 1], [], []>} : vector<32x128xf32>, vector<128x256xf32>, vector<32x256xf32> -> vector<32x256xf32>
    %c0_156 = arith.constant 0 : index
    %c0_157 = arith.constant 0 : index
    %212 = vector.load %arg5[%c0_156, %c0_157] : memref<16x304xf32, #tpu.memory_space<vmem>>, vector<1x256xf32>
    %c1_158 = arith.constant 1 : index
    %c0_159 = arith.constant 0 : index
    %213 = vector.load %arg5[%c1_158, %c0_159] : memref<16x304xf32, #tpu.memory_space<vmem>>, vector<1x256xf32>
    %c1_i32_160 = arith.constant 1 : i32
    %214 = tpu.dynamic_rotate %211 by %c1_i32_160 dim 1 : vector<32x256xf32>, i32 -> vector<32x256xf32>
    %215 = vector.broadcast %212 : vector<1x256xf32> to vector<32x256xf32>
    %216 = arith.mulf %214, %215 : vector<32x256xf32>
    %c255_i32_161 = arith.constant 255 : i32
    %217 = tpu.dynamic_rotate %211 by %c255_i32_161 dim 1 : vector<32x256xf32>, i32 -> vector<32x256xf32>
    %218 = vector.broadcast %213 : vector<1x256xf32> to vector<32x256xf32>
    %219 = arith.mulf %217, %218 : vector<32x256xf32>
    %c25 = arith.constant 25 : index
    %c0_162 = arith.constant 0 : index
    %c0_163 = arith.constant 0 : index
    %220 = vector.load %arg2[%c25, %c0_162, %c0_163] : memref<28x32x32xf32, #tpu.memory_space<vmem>>, vector<1x32x32xf32>
    %221 = vector.shape_cast %220 : vector<1x32x32xf32> to vector<32x32xf32>
    %c26 = arith.constant 26 : index
    %c0_164 = arith.constant 0 : index
    %c0_165 = arith.constant 0 : index
    %222 = vector.load %arg2[%c26, %c0_164, %c0_165] : memref<28x32x32xf32, #tpu.memory_space<vmem>>, vector<1x32x32xf32>
    %223 = vector.shape_cast %222 : vector<1x32x32xf32> to vector<32x32xf32>
    %c27 = arith.constant 27 : index
    %c0_166 = arith.constant 0 : index
    %c0_167 = arith.constant 0 : index
    %224 = vector.load %arg2[%c27, %c0_166, %c0_167] : memref<28x32x32xf32, #tpu.memory_space<vmem>>, vector<1x32x32xf32>
    %225 = vector.shape_cast %224 : vector<1x32x32xf32> to vector<32x32xf32>
    %226 = vector.extract_strided_slice %221 {offsets = [0, 0], sizes = [2, 32], strides = [1, 1]} : vector<32x32xf32> to vector<2x32xf32>
    %227 = vector.extract_strided_slice %223 {offsets = [0, 0], sizes = [2, 32], strides = [1, 1]} : vector<32x32xf32> to vector<2x32xf32>
    %228 = vector.extract_strided_slice %225 {offsets = [0, 0], sizes = [2, 32], strides = [1, 1]} : vector<32x32xf32> to vector<2x32xf32>
    %cst_168 = arith.constant dense<0.000000e+00> : vector<2x256xf32>
    %229 = tpu.matmul %226, %216, %cst_168 {dimension_numbers = #tpu.dot_dimension_numbers<[1], [0], [0], [1], [0, 0, 1, 1], [], []>} : vector<2x32xf32>, vector<32x256xf32>, vector<2x256xf32> -> vector<2x256xf32>
    %cst_169 = arith.constant dense<0.000000e+00> : vector<2x256xf32>
    %230 = tpu.matmul %227, %211, %cst_169 {dimension_numbers = #tpu.dot_dimension_numbers<[1], [0], [0], [1], [0, 0, 1, 1], [], []>} : vector<2x32xf32>, vector<32x256xf32>, vector<2x256xf32> -> vector<2x256xf32>
    %231 = arith.addf %229, %230 : vector<2x256xf32>
    %cst_170 = arith.constant dense<0.000000e+00> : vector<2x256xf32>
    %232 = tpu.matmul %228, %219, %cst_170 {dimension_numbers = #tpu.dot_dimension_numbers<[1], [0], [0], [1], [0, 0, 1, 1], [], []>} : vector<2x32xf32>, vector<32x256xf32>, vector<2x256xf32> -> vector<2x256xf32>
    %233 = arith.addf %231, %232 : vector<2x256xf32>
    %234 = math.tanh %233 : vector<2x256xf32>
    %c0_171 = arith.constant 0 : index
    %c0_172 = arith.constant 0 : index
    %235 = vector.load %arg6[%c0_171, %c0_172] : memref<2x256xf32, #tpu.memory_space<vmem>>, vector<2x256xf32>
    tpu.vector_store %arg6[%c0_171, %c0_172], %234 {strides = array<i32>} : memref<2x256xf32, #tpu.memory_space<vmem>>, vector<2x256xf32>,
    return
  }
  func.func @transform_0(%arg0: i32) -> (i32, i32) {
    %c0_i32 = arith.constant 0 : i32
    %c0_i32_0 = arith.constant 0 : i32
    return %c0_i32, %arg0 : i32, i32
  }
  func.func @transform_1(%arg0: i32) -> (i32, i32, i32) {
    %c0_i32 = arith.constant 0 : i32
    %c0_i32_0 = arith.constant 0 : i32
    %c0_i32_1 = arith.constant 0 : i32
    %c0_i32_2 = arith.constant 0 : i32
    return %c0_i32, %c0_i32_0, %c0_i32_1 : i32, i32, i32
  }
  func.func @transform_2(%arg0: i32) -> (i32, i32) {
    %c0_i32 = arith.constant 0 : i32
    %c0_i32_0 = arith.constant 0 : i32
    %c0_i32_1 = arith.constant 0 : i32
    return %c0_i32, %c0_i32_0 : i32, i32
  }
  func.func @transform_3(%arg0: i32) -> (i32, i32) {
    %c0_i32 = arith.constant 0 : i32
    %c0_i32_0 = arith.constant 0 : i32
    %c0_i32_1 = arith.constant 0 : i32
    return %c0_i32, %c0_i32_0 : i32, i32
  }
  func.func @transform_4(%arg0: i32) -> (i32, i32) {
    %c0_i32 = arith.constant 0 : i32
    %c0_i32_0 = arith.constant 0 : i32
    %c0_i32_1 = arith.constant 0 : i32
    return %c0_i32, %c0_i32_0 : i32, i32
  }
  func.func @transform_5(%arg0: i32) -> (i32, i32) {
    %c0_i32 = arith.constant 0 : i32
    %c0_i32_0 = arith.constant 0 : i32
    return %c0_i32, %arg0 : i32, i32
  }
}

</mosaic_0001>

<llo_original>
// kernel: tpu_custom_call.1
$region0: #{tpu_custom_call.1}
  #allocation0 [shape = 'u32[]', space=smem, size = 0x4, offset = 0x4, fixed_abs, tag = 'smem constant byte address 0x4 - core index']
  #allocation1 [shape = 'u32[144,128]{1,0:T(1,128)}', space=vmem, size = 0x12000, scoped, tag = 'internal scratch']
  %s0 = inlined_call_operand.vmem [shape: f32[32,256], index: 0, kind: input, shape index: {}]
  %s1 = inlined_call_operand.vmem [shape: f32[28,32,32], index: 1, kind: input, shape index: {}]
  %s2 = inlined_call_operand.vmem [shape: f32[256,240], index: 2, kind: input, shape index: {}]
  %s3 = inlined_call_operand.vmem [shape: f32[128,480], index: 3, kind: input, shape index: {}]
  %s4 = inlined_call_operand.vmem [shape: f32[16,304], index: 4, kind: input, shape index: {}]
  %s5 = inlined_call_operand.hbm [shape: f32[2,256], index: 5, kind: output, shape index: {}]
  %s6 = sld [smem:[#allocation0]]
  $region30: #{tpu_custom_call.1} parent=0
    _
  %s8 = ssub.s32 1, %s6
  %s9 = scalar_select 0, %s8, %s6
  $region1: #{tpu_custom_call.1} parent=0
    #allocation2 [shape = 'u8[2048]{0}', space=vmem, size = 0x800, scoped, tag = 'output window, operand 0, single buffered']
    #allocation3 [shape = 's32[1]{0}', space=sflag, size = 0x4, scoped, tag = 'scoped memory for tpu_custom_call.1']
    %10 = vsyncpa [#allocation3], 0
    // Predicated region
    $region2: #{tpu_custom_call.1} parent=1 // pred_check
      _
    $region3: #{tpu_custom_call.1} parent=1 // pred_check_branch
      %12 = sbr.rel (0) target = $region5
    $region4: #{tpu_custom_call.1} parent=1 // pred_region
      _
    $region5: #{tpu_custom_call.1} parent=1 // pred_fallthru
      _
    // Predicated region
    $region6: #{tpu_custom_call.1} parent=1 // pred_check
      _
    $region7: #{tpu_custom_call.1} parent=1 // pred_check_branch
      %14 = sbr.rel (0) target = $region9
    $region8: #{tpu_custom_call.1} parent=1 // pred_region
      _
    $region9: #{tpu_custom_call.1} parent=1 // pred_fallthru
      _
    // Predicated region
    $region10: #{tpu_custom_call.1} parent=1 // pred_check
      _
    $region11: #{tpu_custom_call.1} parent=1 // pred_check_branch
      %16 = sbr.rel (0) target = $region13
    $region12: #{tpu_custom_call.1} parent=1 // pred_region
      _
    $region13: #{tpu_custom_call.1} parent=1 // pred_fallthru
      _
    // Predicated region
    $region14: #{tpu_custom_call.1} parent=1 // pred_check
      _
    $region15: #{tpu_custom_call.1} parent=1 // pred_check_branch
      %18 = sbr.rel (0) target = $region17
    $region16: #{tpu_custom_call.1} parent=1 // pred_region
      _
    $region17: #{tpu_custom_call.1} parent=1 // pred_fallthru
      _
    // Predicated region
    $region18: #{tpu_custom_call.1} parent=1 // pred_check
      _
    $region19: #{tpu_custom_call.1} parent=1 // pred_check_branch
      %20 = sbr.rel (0) target = $region21
    $region20: #{tpu_custom_call.1} parent=1 // pred_region
      _
    $region21: #{tpu_custom_call.1} parent=1 // pred_fallthru
      _
    %v21 = vld [vmem:[%s0] sm:$0xff]
    %v22 = vld [vmem:[%s0 + $0x8] sm:$0xff]
    %v23 = vld [vmem:[%s0 + $0x10] sm:$0xff]
    %v24 = vld [vmem:[%s0 + $0x18] sm:$0xff]
    %v25 = vld [vmem:[%s0 + $0x20] sm:$0xff]
    %v26 = vld [vmem:[%s0 + $0x28] sm:$0xff]
    %v27 = vld [vmem:[%s0 + $0x30] sm:$0xff]
    %v28 = vld [vmem:[%s0 + $0x38] sm:$0xff]
    %v29 = vld [vmem:[%s4] ss:$8 sm:$0x3]
    %s30 = scalar_lea.vmem %s4, 1
    %v31 = vld [vmem:[%s30] ss:$8 sm:$0x3]
    %32 = vrot.lane.b32.xlu0 %v21, 1
    %v33 = vpop.permute.xlu0 %32
    %34 = vrot.lane.b32.xlu0 %v23, 1
    %v35 = vpop.permute.xlu0 %34
    %36 = vrot.lane.b32.xlu0 %v25, 1
    %v37 = vpop.permute.xlu0 %36
    %38 = vrot.lane.b32.xlu0 %v27, 1
    %v39 = vpop.permute.xlu0 %38
    %40 = vrot.lane.b32.xlu0 %v22, 1
    %v41 = vpop.permute.xlu0 %40
    %42 = vrot.lane.b32.xlu0 %v24, 1
    %v43 = vpop.permute.xlu0 %42
    %44 = vrot.lane.b32.xlu0 %v26, 1
    %v45 = vpop.permute.xlu0 %44
    %46 = vrot.lane.b32.xlu0 %v28, 1
    %v47 = vpop.permute.xlu0 %46
    %v48 = vlaneseq
    %v49 = vand.u32 %v48, 127
    %vm50 = vcmp.lt.s32.totalorder %v49, 1
    %v51 = vsel %vm50, %v33, %v41
    %v52 = vsel %vm50, %v35, %v43
    %v53 = vsel %vm50, %v37, %v45
    %v54 = vsel %vm50, %v39, %v47
    %v55 = vsel %vm50, %v41, %v33
    %v56 = vsel %vm50, %v43, %v35
    %v57 = vsel %vm50, %v45, %v37
    %v58 = vsel %vm50, %v47, %v39
    %v60 = vlaneseq
    %v61 = vshrl.u32 %v60, 7
    %v62 = vsub.s32 0, %v61
    %v63 = vrot.slane %v29, %v62
    %v64 = vlaneseq
    %v65 = vshrl.u32 %v64, 7
    %v66 = vsub.s32 1, %v65
    %v67 = vrot.slane %v29, %v66
    %v70 = vmul.f32 %v55, %v63
    %v71 = vmul.f32 %v51, %v67
    %v72 = vmul.f32 %v56, %v63
    %v73 = vmul.f32 %v52, %v67
    %v74 = vmul.f32 %v57, %v63
    %v75 = vmul.f32 %v53, %v67
    %v76 = vmul.f32 %v58, %v63
    %v77 = vmul.f32 %v54, %v67
    %78 = vrot.lane.b32.xlu0 %v21, 127
    %v79 = vpop.permute.xlu0 %78
    %80 = vrot.lane.b32.xlu0 %v23, 127
    %v81 = vpop.permute.xlu0 %80
    %82 = vrot.lane.b32.xlu0 %v25, 127
    %v83 = vpop.permute.xlu0 %82
    %84 = vrot.lane.b32.xlu0 %v27, 127
    %v85 = vpop.permute.xlu0 %84
    %86 = vrot.lane.b32.xlu0 %v22, 127
    %v87 = vpop.permute.xlu0 %86
    %88 = vrot.lane.b32.xlu0 %v24, 127
    %v89 = vpop.permute.xlu0 %88
    %90 = vrot.lane.b32.xlu0 %v26, 127
    %v91 = vpop.permute.xlu0 %90
    %92 = vrot.lane.b32.xlu0 %v28, 127
    %v93 = vpop.permute.xlu0 %92
    %vm94 = vcmp.lt.s32.totalorder %v49, 127
    %v95 = vsel %vm94, %v79, %v87
    %v96 = vsel %vm94, %v81, %v89
    %v97 = vsel %vm94, %v83, %v91
    %v98 = vsel %vm94, %v85, %v93
    %v99 = vsel %vm94, %v87, %v79
    %v100 = vsel %vm94, %v89, %v81
    %v101 = vsel %vm94, %v91, %v83
    %v102 = vsel %vm94, %v93, %v85
    %v104 = vlaneseq
    %v105 = vshrl.u32 %v104, 7
    %v106 = vsub.s32 0, %v105
    %v107 = vrot.slane %v31, %v106
    %v108 = vlaneseq
    %v109 = vshrl.u32 %v108, 7
    %v110 = vsub.s32 1, %v109
    %v111 = vrot.slane %v31, %v110
    %v114 = vmul.f32 %v95, %v107
    %v115 = vmul.f32 %v99, %v111
    %v116 = vmul.f32 %v96, %v107
    %v117 = vmul.f32 %v100, %v111
    %v118 = vmul.f32 %v97, %v107
    %v119 = vmul.f32 %v101, %v111
    %v120 = vmul.f32 %v98, %v107
    %v121 = vmul.f32 %v102, %v111
    %v122 = vld [vmem:[%s1] sm:$0xff]
    %v123 = vld [vmem:[%s1 + $0x8] sm:$0xff]
    %v124 = vld [vmem:[%s1 + $0x10] sm:$0xff]
    %v125 = vld [vmem:[%s1 + $0x18] sm:$0xff]
    %s126 = scalar_lea.vmem %s1, 32
    %v127 = vld [vmem:[%s126] sm:$0xff]
    %v128 = vld [vmem:[%s126 + $0x8] sm:$0xff]
    %v129 = vld [vmem:[%s126 + $0x10] sm:$0xff]
    %v130 = vld [vmem:[%s126 + $0x18] sm:$0xff]
    %s131 = scalar_lea.vmem %s1, 64
    %v132 = vld [vmem:[%s131] sm:$0xff]
    %v133 = vld [vmem:[%s131 + $0x8] sm:$0xff]
    %v134 = vld [vmem:[%s131 + $0x10] sm:$0xff]
    %v135 = vld [vmem:[%s131 + $0x18] sm:$0xff]
    %vm136 = vcmask 261120
    %v138 = vsel %vm136, %v127, 0
    %v141 = vsel %vm136, %v128, 0
    %v144 = vsel %vm136, %v129, 0
    %v147 = vsel %vm136, %v130, 0
    %149 = vmatprep.subr.mxu0 %v22
    %150 = vmatpush1.msra.mxu0 %v21
    %151 = vmatprep.subr.mxu0 %v24
    %152 = vmatpush1.msra.mxu0 %v23
    %153 = vmatprep.subr.mxu0 %v26
    %154 = vmatpush1.msra.mxu0 %v25
    %155 = vmatprep.subr.mxu0 %v28
    %156 = vmatpush1.msra.mxu0 %v27
    %157 = vmatprep.subr.mxu0 0.0
    %158 = vmatpush1.msra.mxu0 0.0
    %159 = vmatprep.subr.mxu0 0.0
    %160 = vmatpush1.msra.mxu0 0.0
    %161 = vmatprep.subr.mxu0 0.0
    %162 = vmatpush1.msra.mxu0 0.0
    %163 = vmatprep.subr.mxu0 0.0
    %164 = vmatpush1.msra.mxu0 0.0
    %165 = vmatprep.subr.mxu0 0.0
    %166 = vmatpush1.msra.mxu0 0.0
    %167 = vmatprep.subr.mxu0 0.0
    %168 = vmatpush1.msra.mxu0 0.0
    %169 = vmatprep.subr.mxu0 0.0
    %170 = vmatpush1.msra.mxu0 0.0
    %171 = vmatprep.subr.mxu0 0.0
    %172 = vmatpush1.msra.mxu0 0.0
    %173 = vmatprep.subr.mxu0 0.0
    %174 = vmatpush1.msra.mxu0 0.0
    %175 = vmatprep.subr.mxu0 0.0
    %176 = vmatpush1.msra.mxu0 0.0
    %177 = vmatprep.subr.mxu0 0.0
    %178 = vmatpush1.msra.mxu0 0.0
    %179 = vmatprep.subr.mxu0 0.0
    %180 = vmatpush1.msra.mxu0 0.0
    %181 = vmatprep.subr.mxu0 0.0
    %182 = vmatpush1.msra.mxu0 0.0
    %183 = vmatprep.subr.mxu0 0.0
    %184 = vmatpush1.msra.mxu0 0.0
    %185 = vmatprep.subr.mxu0 0.0
    %186 = vmatpush1.msra.mxu0 0.0
    %187 = vmatprep.subr.mxu0 0.0
    %188 = vmatpush1.msra.mxu0 0.0
    %189 = vmatprep.subr.mxu0 0.0
    %190 = vmatpush1.msra.mxu0 0.0
    %191 = vmatprep.subr.mxu0 0.0
    %192 = vmatpush1.msra.mxu0 0.0
    %193 = vmatprep.subr.mxu0 0.0
    %194 = vmatpush1.msra.mxu0 0.0
    %195 = vmatprep.subr.mxu0 0.0
    %196 = vmatpush1.msra.mxu0 0.0
    %197 = vmatprep.subr.mxu0 0.0
    %198 = vmatpush1.msra.mxu0 0.0
    %199 = vmatprep.subr.mxu0 0.0
    %200 = vmatpush1.msra.mxu0 0.0
    %201 = vmatprep.subr.mxu0 0.0
    %202 = vmatpush1.msra.mxu0 0.0
    %203 = vmatprep.subr.mxu0 0.0
    %204 = vmatpush1.msra.mxu0 0.0
    %205 = vmatprep.subr.mxu0 0.0
    %206 = vmatpush1.msra.mxu0 0.0
    %207 = vmatprep.subr.mxu0 0.0
    %208 = vmatpush1.msra.mxu0 0.0
    %209 = vmatprep.subr.mxu0 0.0
    %210 = vmatpush1.msra.mxu0 0.0
    %211 = vmatprep.subr.mxu0 0.0
    %212 = vmatpush1.msra.mxu0 0.0
    %213 = vmatprep.mubr.f32.mxu0 0.0
    %214 = vmatmul.mubr.f32.gmra.mrb[0].mxu0 %v138
    %v215 = vpop.f32.mrb[0].mxu0
    %v216 = vadd.f32 0.0, %v215
    %v217 = vpop.f32.mrb[0].mxu0
    %v218 = vadd.f32 0.0, %v217
    %219 = vmatprep.mubr.f32.mxu0 0.0
    %220 = vmatmul.mubr.f32.gmra.mrb[0].mxu0 %v141
    %v221 = vpop.f32.mrb[0].mxu0
    %v222 = vadd.f32 0.0, %v221
    %v223 = vpop.f32.mrb[0].mxu0
    %v224 = vadd.f32 0.0, %v223
    %225 = vmatprep.mubr.f32.mxu0 0.0
    %226 = vmatmul.mubr.f32.gmra.mrb[0].mxu0 %v144
    %v227 = vpop.f32.mrb[0].mxu0
    %v228 = vadd.f32 0.0, %v227
    %v229 = vpop.f32.mrb[0].mxu0
    %v230 = vadd.f32 0.0, %v229
    %231 = vmatprep.mubr.f32.mxu0 0.0
    %232 = vmatmul.mubr.f32.gmra.mrb[0].mxu0 %v147
    %v233 = vpop.f32.mrb[0].mxu0
    %v234 = vadd.f32 0.0, %v233
    %v235 = vpop.f32.mrb[0].mxu0
    %v236 = vadd.f32 0.0, %v235
    %237 = vdwg.mxu0
    %v239 = vsel %vm136, %v122, 0
    %v242 = vsel %vm136, %v123, 0
    %v245 = vsel %vm136, %v124, 0
    %v248 = vsel %vm136, %v125, 0
    %250 = vmatprep.subr.mxu0 %v71
    %251 = vmatpush1.msra.mxu0 %v70
    %252 = vmatprep.subr.mxu0 %v73
    %253 = vmatpush1.msra.mxu0 %v72
    %254 = vmatprep.subr.mxu0 %v75
    %255 = vmatpush1.msra.mxu0 %v74
    %256 = vmatprep.subr.mxu0 %v77
    %257 = vmatpush1.msra.mxu0 %v76
    %258 = vmatprep.subr.mxu0 0.0
    %259 = vmatpush1.msra.mxu0 0.0
    %260 = vmatprep.subr.mxu0 0.0
    %261 = vmatpush1.msra.mxu0 0.0
    %262 = vmatprep.subr.mxu0 0.0
    %263 = vmatpush1.msra.mxu0 0.0
    %264 = vmatprep.subr.mxu0 0.0
    %265 = vmatpush1.msra.mxu0 0.0
    %266 = vmatprep.subr.mxu0 0.0
    %267 = vmatpush1.msra.mxu0 0.0
    %268 = vmatprep.subr.mxu0 0.0
    %269 = vmatpush1.msra.mxu0 0.0
    %270 = vmatprep.subr.mxu0 0.0
    %271 = vmatpush1.msra.mxu0 0.0
    %272 = vmatprep.subr.mxu0 0.0
    %273 = vmatpush1.msra.mxu0 0.0
    %274 = vmatprep.subr.mxu0 0.0
    %275 = vmatpush1.msra.mxu0 0.0
    %276 = vmatprep.subr.mxu0 0.0
    %277 = vmatpush1.msra.mxu0 0.0
    %278 = vmatprep.subr.mxu0 0.0
    %279 = vmatpush1.msra.mxu0 0.0
    %280 = vmatprep.subr.mxu0 0.0
    %281 = vmatpush1.msra.mxu0 0.0
    %282 = vmatprep.subr.mxu0 0.0
    %283 = vmatpush1.msra.mxu0 0.0
    %284 = vmatprep.subr.mxu0 0.0
    %285 = vmatpush1.msra.mxu0 0.0
    %286 = vmatprep.subr.mxu0 0.0
    %287 = vmatpush1.msra.mxu0 0.0
    %288 = vmatprep.subr.mxu0 0.0
    %289 = vmatpush1.msra.mxu0 0.0
    %290 = vmatprep.subr.mxu0 0.0
    %291 = vmatpush1.msra.mxu0 0.0
    %292 = vmatprep.subr.mxu0 0.0
    %293 = vmatpush1.msra.mxu0 0.0
    %294 = vmatprep.subr.mxu0 0.0
    %295 = vmatpush1.msra.mxu0 0.0
    %296 = vmatprep.subr.mxu0 0.0
    %297 = vmatpush1.msra.mxu0 0.0
    %298 = vmatprep.subr.mxu0 0.0
    %299 = vmatpush1.msra.mxu0 0.0
    %300 = vmatprep.subr.mxu0 0.0
    %301 = vmatpush1.msra.mxu0 0.0
    %302 = vmatprep.subr.mxu0 0.0
    %303 = vmatpush1.msra.mxu0 0.0
    %304 = vmatprep.subr.mxu0 0.0
    %305 = vmatpush1.msra.mxu0 0.0
    %306 = vmatprep.subr.mxu0 0.0
    %307 = vmatpush1.msra.mxu0 0.0
    %308 = vmatprep.subr.mxu0 0.0
    %309 = vmatpush1.msra.mxu0 0.0
    %310 = vmatprep.subr.mxu0 0.0
    %311 = vmatpush1.msra.mxu0 0.0
    %312 = vmatprep.subr.mxu0 0.0
    %313 = vmatpush1.msra.mxu0 0.0
    %314 = vmatprep.mubr.f32.mxu0 0.0
    %315 = vmatmul.mubr.f32.gmra.mrb[0].mxu0 %v239
    %v316 = vpop.f32.mrb[0].mxu0
    %v317 = vadd.f32 %v216, %v316
    %v318 = vpop.f32.mrb[0].mxu0
    %v319 = vadd.f32 %v218, %v318
    %320 = vmatprep.mubr.f32.mxu0 0.0
    %321 = vmatmul.mubr.f32.gmra.mrb[0].mxu0 %v242
    %v322 = vpop.f32.mrb[0].mxu0
    %v323 = vadd.f32 %v222, %v322
    %v324 = vpop.f32.mrb[0].mxu0
    %v325 = vadd.f32 %v224, %v324
    %326 = vmatprep.mubr.f32.mxu0 0.0
    %327 = vmatmul.mubr.f32.gmra.mrb[0].mxu0 %v245
    %v328 = vpop.f32.mrb[0].mxu0
    %v329 = vadd.f32 %v228, %v328
    %v330 = vpop.f32.mrb[0].mxu0
    %v331 = vadd.f32 %v230, %v330
    %332 = vmatprep.mubr.f32.mxu0 0.0
    %333 = vmatmul.mubr.f32.gmra.mrb[0].mxu0 %v248
    %v334 = vpop.f32.mrb[0].mxu0
    %v335 = vadd.f32 %v234, %v334
    %v336 = vpop.f32.mrb[0].mxu0
    %v337 = vadd.f32 %v236, %v336
    %338 = vdwg.mxu0
    %v340 = vsel %vm136, %v132, 0
    %v343 = vsel %vm136, %v133, 0
    %v346 = vsel %vm136, %v134, 0
    %v349 = vsel %vm136, %v135, 0
    %351 = vmatprep.subr.mxu0 %v115
    %352 = vmatpush1.msra.mxu0 %v114
    %353 = vmatprep.subr.mxu0 %v117
    %354 = vmatpush1.msra.mxu0 %v116
    %355 = vmatprep.subr.mxu0 %v119
    %356 = vmatpush1.msra.mxu0 %v118
    %357 = vmatprep.subr.mxu0 %v121
    %358 = vmatpush1.msra.mxu0 %v120
    %359 = vmatprep.subr.mxu0 0.0
    %360 = vmatpush1.msra.mxu0 0.0
    %361 = vmatprep.subr.mxu0 0.0
    %362 = vmatpush1.msra.mxu0 0.0
    %363 = vmatprep.subr.mxu0 0.0
    %364 = vmatpush1.msra.mxu0 0.0
    %365 = vmatprep.subr.mxu0 0.0
    %366 = vmatpush1.msra.mxu0 0.0
    %367 = vmatprep.subr.mxu0 0.0
    %368 = vmatpush1.msra.mxu0 0.0
    %369 = vmatprep.subr.mxu0 0.0
    %370 = vmatpush1.msra.mxu0 0.0
    %371 = vmatprep.subr.mxu0 0.0
    %372 = vmatpush1.msra.mxu0 0.0
    %373 = vmatprep.subr.mxu0 0.0
    %374 = vmatpush1.msra.mxu0 0.0
    %375 = vmatprep.subr.mxu0 0.0
    %376 = vmatpush1.msra.mxu0 0.0
    %377 = vmatprep.subr.mxu0 0.0
    %378 = vmatpush1.msra.mxu0 0.0
    %379 = vmatprep.subr.mxu0 0.0
    %380 = vmatpush1.msra.mxu0 0.0
    %381 = vmatprep.subr.mxu0 0.0
    %382 = vmatpush1.msra.mxu0 0.0
    %383 = vmatprep.subr.mxu0 0.0
    %384 = vmatpush1.msra.mxu0 0.0
    %385 = vmatprep.subr.mxu0 0.0
    %386 = vmatpush1.msra.mxu0 0.0
    %387 = vmatprep.subr.mxu0 0.0
    %388 = vmatpush1.msra.mxu0 0.0
    %389 = vmatprep.subr.mxu0 0.0
    %390 = vmatpush1.msra.mxu0 0.0
    %391 = vmatprep.subr.mxu0 0.0
    %392 = vmatpush1.msra.mxu0 0.0
    %393 = vmatprep.subr.mxu0 0.0
    %394 = vmatpush1.msra.mxu0 0.0
    %395 = vmatprep.subr.mxu0 0.0
    %396 = vmatpush1.msra.mxu0 0.0
    %397 = vmatprep.subr.mxu0 0.0
    %398 = vmatpush1.msra.mxu0 0.0
    %399 = vmatprep.subr.mxu0 0.0
    %400 = vmatpush1.msra.mxu0 0.0
    %401 = vmatprep.subr.mxu0 0.0
    %402 = vmatpush1.msra.mxu0 0.0
    %403 = vmatprep.subr.mxu0 0.0
    %404 = vmatpush1.msra.mxu0 0.0
    %405 = vmatprep.subr.mxu0 0.0
    %406 = vmatpush1.msra.mxu0 0.0
    %407 = vmatprep.subr.mxu0 0.0
    %408 = vmatpush1.msra.mxu0 0.0
    %409 = vmatprep.subr.mxu0 0.0
    %410 = vmatpush1.msra.mxu0 0.0
    %411 = vmatprep.subr.mxu0 0.0
    %412 = vmatpush1.msra.mxu0 0.0
    %413 = vmatprep.subr.mxu0 0.0
    %414 = vmatpush1.msra.mxu0 0.0
    %415 = vmatprep.mubr.f32.mxu0 0.0
    %416 = vmatmul.mubr.f32.gmra.mrb[0].mxu0 %v340
    %v417 = vpop.f32.mrb[0].mxu0
    %v418 = vadd.f32 0.0, %v417
    %v419 = vpop.f32.mrb[0].mxu0
    %v420 = vadd.f32 0.0, %v419
    %421 = vmatprep.mubr.f32.mxu0 0.0
    %422 = vmatmul.mubr.f32.gmra.mrb[0].mxu0 %v343
    %v423 = vpop.f32.mrb[0].mxu0
    %v424 = vadd.f32 0.0, %v423
    %v425 = vpop.f32.mrb[0].mxu0
    %v426 = vadd.f32 0.0, %v425
    %427 = vmatprep.mubr.f32.mxu0 0.0
    %428 = vmatmul.mubr.f32.gmra.mrb[0].mxu0 %v346
    %v429 = vpop.f32.mrb[0].mxu0
    %v430 = vadd.f32 0.0, %v429
    %v431 = vpop.f32.mrb[0].mxu0
    %v432 = vadd.f32 0.0, %v431
    %433 = vmatprep.mubr.f32.mxu0 0.0
    %434 = vmatmul.mubr.f32.gmra.mrb[0].mxu0 %v349
    %v435 = vpop.f32.mrb[0].mxu0
    %v436 = vadd.f32 0.0, %v435
    %v437 = vpop.f32.mrb[0].mxu0
    %v438 = vadd.f32 0.0, %v437
    %439 = vdwg.mxu0
    %v440 = vadd.f32 %v317, %v418
    %v441 = vadd.f32 %v319, %v420
    %v442 = vadd.f32 %v323, %v424
    %v443 = vadd.f32 %v325, %v426
    %v444 = vadd.f32 %v329, %v430
    %v445 = vadd.f32 %v331, %v432
    %v446 = vadd.f32 %v335, %v436
    %v447 = vadd.f32 %v337, %v438
    %vm448 = vcmp.gt.f32.partialorder %v440, 0.0
    %vm449 = vcmp.gt.f32.partialorder %v441, 0.0
    %vm450 = vcmp.gt.f32.partialorder %v442, 0.0
    %vm451 = vcmp.gt.f32.partialorder %v443, 0.0
    %vm452 = vcmp.gt.f32.partialorder %v444, 0.0
    %vm453 = vcmp.gt.f32.partialorder %v445, 0.0
    %vm454 = vcmp.gt.f32.partialorder %v446, 0.0
    %vm455 = vcmp.gt.f32.partialorder %v447, 0.0
    %v456 = vmul.f32 %v440, 0.2
    %v457 = vmul.f32 %v441, 0.2
    %v458 = vmul.f32 %v442, 0.2
    %v459 = vmul.f32 %v443, 0.2
    %v460 = vmul.f32 %v444, 0.2
    %v461 = vmul.f32 %v445, 0.2
    %v462 = vmul.f32 %v446, 0.2
    %v463 = vmul.f32 %v447, 0.2
    %v464 = vsel %vm448, %v440, %v456
    %v465 = vsel %vm449, %v441, %v457
    %v466 = vsel %vm450, %v442, %v458
    %v467 = vsel %vm451, %v443, %v459
    %v468 = vsel %vm452, %v444, %v460
    %v469 = vsel %vm453, %v445, %v461
    %v470 = vsel %vm454, %v446, %v462
    %v471 = vsel %vm455, %v447, %v463
    %v472 = vld [vmem:[%s2] sm:$0xff]
    %v473 = vld [vmem:[%s2 + $0x10] sm:$0xff]
    %v474 = vld [vmem:[%s2 + $0x20] sm:$0xff]
    %v475 = vld [vmem:[%s2 + $0x30] sm:$0xff]
    %v476 = vld [vmem:[%s2 + $0x40] sm:$0xff]
    %v477 = vld [vmem:[%s2 + $0x50] sm:$0xff]
    %v478 = vld [vmem:[%s2 + $0x60] sm:$0xff]
    %v479 = vld [vmem:[%s2 + $0x70] sm:$0xff]
    %v480 = vld [vmem:[%s2 + $0x80] sm:$0xff]
    %v481 = vld [vmem:[%s2 + $0x90] sm:$0xff]
    %v482 = vld [vmem:[%s2 + $0xa0] sm:$0xff]
    %v483 = vld [vmem:[%s2 + $0xb0] sm:$0xff]
    %v484 = vld [vmem:[%s2 + $0xc0] sm:$0xff]
    %v485 = vld [vmem:[%s2 + $0xd0] sm:$0xff]
    %v486 = vld [vmem:[%s2 + $0xe0] sm:$0xff]
    %v487 = vld [vmem:[%s2 + $0xf0] sm:$0xff]
    %v488 = vld [vmem:[%s2 + $0x100] sm:$0xff]
    %v489 = vld [vmem:[%s2 + $0x110] sm:$0xff]
    %v490 = vld [vmem:[%s2 + $0x120] sm:$0xff]
    %v491 = vld [vmem:[%s2 + $0x130] sm:$0xff]
    %v492 = vld [vmem:[%s2 + $0x140] sm:$0xff]
    %v493 = vld [vmem:[%s2 + $0x150] sm:$0xff]
    %v494 = vld [vmem:[%s2 + $0x160] sm:$0xff]
    %v495 = vld [vmem:[%s2 + $0x170] sm:$0xff]
    %v496 = vld [vmem:[%s2 + $0x180] sm:$0xff]
    %v497 = vld [vmem:[%s2 + $0x190] sm:$0xff]
    %v498 = vld [vmem:[%s2 + $0x1a0] sm:$0xff]
    %v499 = vld [vmem:[%s2 + $0x1b0] sm:$0xff]
    %v500 = vld [vmem:[%s2 + $0x1c0] sm:$0xff]
    %v501 = vld [vmem:[%s2 + $0x1d0] sm:$0xff]
    %v502 = vld [vmem:[%s2 + $0x1e0] sm:$0xff]
    %v503 = vld [vmem:[%s2 + $0x1f0] sm:$0xff]
    %504 = vmatprep.subr.mxu0 0.0
    %505 = vmatpush1.msra.mxu0 %v472
    %506 = vmatprep.subr.mxu0 0.0
    %507 = vmatpush1.msra.mxu0 %v473
    %508 = vmatprep.subr.mxu0 0.0
    %509 = vmatpush1.msra.mxu0 %v474
    %510 = vmatprep.subr.mxu0 0.0
    %511 = vmatpush1.msra.mxu0 %v475
    %512 = vmatprep.subr.mxu0 0.0
    %513 = vmatpush1.msra.mxu0 %v476
    %514 = vmatprep.subr.mxu0 0.0
    %515 = vmatpush1.msra.mxu0 %v477
    %516 = vmatprep.subr.mxu0 0.0
    %517 = vmatpush1.msra.mxu0 %v478
    %518 = vmatprep.subr.mxu0 0.0
    %519 = vmatpush1.msra.mxu0 %v479
    %520 = vmatprep.subr.mxu0 0.0
    %521 = vmatpush1.msra.mxu0 %v480
    %522 = vmatprep.subr.mxu0 0.0
    %523 = vmatpush1.msra.mxu0 %v481
    %524 = vmatprep.subr.mxu0 0.0
    %525 = vmatpush1.msra.mxu0 %v482
    %526 = vmatprep.subr.mxu0 0.0
    %527 = vmatpush1.msra.mxu0 %v483
    %528 = vmatprep.subr.mxu0 0.0
    %529 = vmatpush1.msra.mxu0 %v484
    %530 = vmatprep.subr.mxu0 0.0
    %531 = vmatpush1.msra.mxu0 %v485
    %532 = vmatprep.subr.mxu0 0.0
    %533 = vmatpush1.msra.mxu0 %v486
    %534 = vmatprep.subr.mxu0 0.0
    %535 = vmatpush1.msra.mxu0 %v487
    %536 = vmatprep.subr.mxu0 0.0
    %537 = vmatpush1.msra.mxu0 %v488
    %538 = vmatprep.subr.mxu0 0.0
    %539 = vmatpush1.msra.mxu0 %v489
    %540 = vmatprep.subr.mxu0 0.0
    %541 = vmatpush1.msra.mxu0 %v490
    %542 = vmatprep.subr.mxu0 0.0
    %543 = vmatpush1.msra.mxu0 %v491
    %544 = vmatprep.subr.mxu0 0.0
    %545 = vmatpush1.msra.mxu0 %v492
    %546 = vmatprep.subr.mxu0 0.0
    %547 = vmatpush1.msra.mxu0 %v493
    %548 = vmatprep.subr.mxu0 0.0
    %549 = vmatpush1.msra.mxu0 %v494
    %550 = vmatprep.subr.mxu0 0.0
    %551 = vmatpush1.msra.mxu0 %v495
    %552 = vmatprep.subr.mxu0 0.0
    %553 = vmatpush1.msra.mxu0 %v496
    %554 = vmatprep.subr.mxu0 0.0
    %555 = vmatpush1.msra.mxu0 %v497
    %556 = vmatprep.subr.mxu0 0.0
    %557 = vmatpush1.msra.mxu0 %v498
    %558 = vmatprep.subr.mxu0 0.0
    %559 = vmatpush1.msra.mxu0 %v499
    %560 = vmatprep.subr.mxu0 0.0
    %561 = vmatpush1.msra.mxu0 %v500
    %562 = vmatprep.subr.mxu0 0.0
    %563 = vmatpush1.msra.mxu0 %v501
    %564 = vmatprep.subr.mxu0 0.0
    %565 = vmatpush1.msra.mxu0 %v502
    %566 = vmatprep.subr.mxu0 0.0
    %567 = vmatpush1.msra.mxu0 %v503
    %568 = vmatprep.mubr.f32.mxu0 %v465
    %569 = vmatmul.mubr.f32.gmra.mrb[0].mxu0 %v464
    %v570 = vpop.f32.mrb[0].mxu0
    %v571 = vadd.f32 0.0, %v570
    %v572 = vpop.f32.mrb[0].mxu0
    %573 = vmatprep.mubr.f32.mxu0 %v467
    %574 = vmatmul.mubr.f32.gmra.mrb[0].mxu0 %v466
    %v575 = vpop.f32.mrb[0].mxu0
    %v576 = vadd.f32 0.0, %v575
    %v577 = vpop.f32.mrb[0].mxu0
    %578 = vmatprep.mubr.f32.mxu0 %v469
    %579 = vmatmul.mubr.f32.gmra.mrb[0].mxu0 %v468
    %v580 = vpop.f32.mrb[0].mxu0
    %v581 = vadd.f32 0.0, %v580
    %v582 = vpop.f32.mrb[0].mxu0
    %583 = vmatprep.mubr.f32.mxu0 %v471
    %584 = vmatmul.mubr.f32.gmra.mrb[0].mxu0 %v470
    %v585 = vpop.f32.mrb[0].mxu0
    %v586 = vadd.f32 0.0, %v585
    %v587 = vpop.f32.mrb[0].mxu0
    %588 = vdwg.mxu0
    %v589 = vld [vmem:[%s4 + $0x2] ss:$0 sm:$0xff]
    %v590 = vld [vmem:[%s4 + $0x3] ss:$0 sm:$0xff]
    %591 = vrot.lane.b32.xlu0 %v571, 1
    %v592 = vpop.permute.xlu0 %591
    %593 = vrot.lane.b32.xlu0 %v576, 1
    %v594 = vpop.permute.xlu0 %593
    %595 = vrot.lane.b32.xlu0 %v581, 1
    %v596 = vpop.permute.xlu0 %595
    %597 = vrot.lane.b32.xlu0 %v586, 1
    %v598 = vpop.permute.xlu0 %597
    %v599 = vmul.f32 %v592, %v589
    %v600 = vmul.f32 %v594, %v589
    %v601 = vmul.f32 %v596, %v589
    %v602 = vmul.f32 %v598, %v589
    %603 = vrot.lane.b32.xlu0 %v571, 127
    %v604 = vpop.permute.xlu0 %603
    %605 = vrot.lane.b32.xlu0 %v576, 127
    %v606 = vpop.permute.xlu0 %605
    %607 = vrot.lane.b32.xlu0 %v581, 127
    %v608 = vpop.permute.xlu0 %607
    %609 = vrot.lane.b32.xlu0 %v586, 127
    %v610 = vpop.permute.xlu0 %609
    %v611 = vmul.f32 %v604, %v590
    %v612 = vmul.f32 %v606, %v590
    %v613 = vmul.f32 %v608, %v590
    %v614 = vmul.f32 %v610, %v590
    %s615 = scalar_lea.vmem %s1, 96
    %v616 = vld [vmem:[%s615] sm:$0xff]
    %v617 = vld [vmem:[%s615 + $0x8] sm:$0xff]
    %v618 = vld [vmem:[%s615 + $0x10] sm:$0xff]
    %v619 = vld [vmem:[%s615 + $0x18] sm:$0xff]
    %s620 = scalar_lea.vmem %s1, 128
    %v621 = vld [vmem:[%s620] sm:$0xff]
    %v622 = vld [vmem:[%s620 + $0x8] sm:$0xff]
    %v623 = vld [vmem:[%s620 + $0x10] sm:$0xff]
    %v624 = vld [vmem:[%s620 + $0x18] sm:$0xff]
    %s625 = scalar_lea.vmem %s1, 160
    %v626 = vld [vmem:[%s625] sm:$0xff]
    %v627 = vld [vmem:[%s625 + $0x8] sm:$0xff]
    %v628 = vld [vmem:[%s625 + $0x10] sm:$0xff]
    %v629 = vld [vmem:[%s625 + $0x18] sm:$0xff]
    %v631 = vsel %vm136, %v621, 0
    %v634 = vsel %vm136, %v622, 0
    %v637 = vsel %vm136, %v623, 0
    %v640 = vsel %vm136, %v624, 0
    %642 = vmatprep.subr.mxu0 0.0
    %643 = vmatpush1.msra.mxu0 %v571
    %644 = vmatprep.subr.mxu0 0.0
    %645 = vmatpush1.msra.mxu0 %v576
    %646 = vmatprep.subr.mxu0 0.0
    %647 = vmatpush1.msra.mxu0 %v581
    %648 = vmatprep.subr.mxu0 0.0
    %649 = vmatpush1.msra.mxu0 %v586
    %650 = vmatprep.subr.mxu0 0.0
    %651 = vmatpush1.msra.mxu0 0.0
    %652 = vmatprep.subr.mxu0 0.0
    %653 = vmatpush1.msra.mxu0 0.0
    %654 = vmatprep.subr.mxu0 0.0
    %655 = vmatpush1.msra.mxu0 0.0
    %656 = vmatprep.subr.mxu0 0.0
    %657 = vmatpush1.msra.mxu0 0.0
    %658 = vmatprep.subr.mxu0 0.0
    %659 = vmatpush1.msra.mxu0 0.0
    %660 = vmatprep.subr.mxu0 0.0
    %661 = vmatpush1.msra.mxu0 0.0
    %662 = vmatprep.subr.mxu0 0.0
    %663 = vmatpush1.msra.mxu0 0.0
    %664 = vmatprep.subr.mxu0 0.0
    %665 = vmatpush1.msra.mxu0 0.0
    %666 = vmatprep.subr.mxu0 0.0
    %667 = vmatpush1.msra.mxu0 0.0
    %668 = vmatprep.subr.mxu0 0.0
    %669 = vmatpush1.msra.mxu0 0.0
    %670 = vmatprep.subr.mxu0 0.0
    %671 = vmatpush1.msra.mxu0 0.0
    %672 = vmatprep.subr.mxu0 0.0
    %673 = vmatpush1.msra.mxu0 0.0
    %674 = vmatprep.subr.mxu0 0.0
    %675 = vmatpush1.msra.mxu0 0.0
    %676 = vmatprep.subr.mxu0 0.0
    %677 = vmatpush1.msra.mxu0 0.0
    %678 = vmatprep.subr.mxu0 0.0
    %679 = vmatpush1.msra.mxu0 0.0
    %680 = vmatprep.subr.mxu0 0.0
    %681 = vmatpush1.msra.mxu0 0.0
    %682 = vmatprep.subr.mxu0 0.0
    %683 = vmatpush1.msra.mxu0 0.0
    %684 = vmatprep.subr.mxu0 0.0
    %685 = vmatpush1.msra.mxu0 0.0
    %686 = vmatprep.subr.mxu0 0.0
    %687 = vmatpush1.msra.mxu0 0.0
    %688 = vmatprep.subr.mxu0 0.0
    %689 = vmatpush1.msra.mxu0 0.0
    %690 = vmatprep.subr.mxu0 0.0
    %691 = vmatpush1.msra.mxu0 0.0
    %692 = vmatprep.subr.mxu0 0.0
    %693 = vmatpush1.msra.mxu0 0.0
    %694 = vmatprep.subr.mxu0 0.0
    %695 = vmatpush1.msra.mxu0 0.0
    %696 = vmatprep.subr.mxu0 0.0
    %697 = vmatpush1.msra.mxu0 0.0
    %698 = vmatprep.subr.mxu0 0.0
    %699 = vmatpush1.msra.mxu0 0.0
    %700 = vmatprep.subr.mxu0 0.0
    %701 = vmatpush1.msra.mxu0 0.0
    %702 = vmatprep.subr.mxu0 0.0
    %703 = vmatpush1.msra.mxu0 0.0
    %704 = vmatprep.subr.mxu0 0.0
    %705 = vmatpush1.msra.mxu0 0.0
    %706 = vmatprep.mubr.f32.mxu0 0.0
    %707 = vmatmul.mubr.f32.gmra.mrb[0].mxu0 %v631
    %v708 = vpop.f32.mrb[0].mxu0
    %v709 = vadd.f32 0.0, %v708
    %v710 = vpop.f32.mrb[0].mxu0
    %711 = vmatprep.mubr.f32.mxu0 0.0
    %712 = vmatmul.mubr.f32.gmra.mrb[0].mxu0 %v634
    %v713 = vpop.f32.mrb[0].mxu0
    %v714 = vadd.f32 0.0, %v713
    %v715 = vpop.f32.mrb[0].mxu0
    %716 = vmatprep.mubr.f32.mxu0 0.0
    %717 = vmatmul.mubr.f32.gmra.mrb[0].mxu0 %v637
    %v718 = vpop.f32.mrb[0].mxu0
    %v719 = vadd.f32 0.0, %v718
    %v720 = vpop.f32.mrb[0].mxu0
    %721 = vmatprep.mubr.f32.mxu0 0.0
    %722 = vmatmul.mubr.f32.gmra.mrb[0].mxu0 %v640
    %v723 = vpop.f32.mrb[0].mxu0
    %v724 = vadd.f32 0.0, %v723
    %v725 = vpop.f32.mrb[0].mxu0
    %726 = vdwg.mxu0
    %v728 = vsel %vm136, %v616, 0
    %v731 = vsel %vm136, %v617, 0
    %v734 = vsel %vm136, %v618, 0
    %v737 = vsel %vm136, %v619, 0
    %739 = vmatprep.subr.mxu0 0.0
    %740 = vmatpush1.msra.mxu0 %v599
    %741 = vmatprep.subr.mxu0 0.0
    %742 = vmatpush1.msra.mxu0 %v600
    %743 = vmatprep.subr.mxu0 0.0
    %744 = vmatpush1.msra.mxu0 %v601
    %745 = vmatprep.subr.mxu0 0.0
    %746 = vmatpush1.msra.mxu0 %v602
    %747 = vmatprep.subr.mxu0 0.0
    %748 = vmatpush1.msra.mxu0 0.0
    %749 = vmatprep.subr.mxu0 0.0
    %750 = vmatpush1.msra.mxu0 0.0
    %751 = vmatprep.subr.mxu0 0.0
    %752 = vmatpush1.msra.mxu0 0.0
    %753 = vmatprep.subr.mxu0 0.0
    %754 = vmatpush1.msra.mxu0 0.0
    %755 = vmatprep.subr.mxu0 0.0
    %756 = vmatpush1.msra.mxu0 0.0
    %757 = vmatprep.subr.mxu0 0.0
    %758 = vmatpush1.msra.mxu0 0.0
    %759 = vmatprep.subr.mxu0 0.0
    %760 = vmatpush1.msra.mxu0 0.0
    %761 = vmatprep.subr.mxu0 0.0
    %762 = vmatpush1.msra.mxu0 0.0
    %763 = vmatprep.subr.mxu0 0.0
    %764 = vmatpush1.msra.mxu0 0.0
    %765 = vmatprep.subr.mxu0 0.0
    %766 = vmatpush1.msra.mxu0 0.0
    %767 = vmatprep.subr.mxu0 0.0
    %768 = vmatpush1.msra.mxu0 0.0
    %769 = vmatprep.subr.mxu0 0.0
    %770 = vmatpush1.msra.mxu0 0.0
    %771 = vmatprep.subr.mxu0 0.0
    %772 = vmatpush1.msra.mxu0 0.0
    %773 = vmatprep.subr.mxu0 0.0
    %774 = vmatpush1.msra.mxu0 0.0
    %775 = vmatprep.subr.mxu0 0.0
    %776 = vmatpush1.msra.mxu0 0.0
    %777 = vmatprep.subr.mxu0 0.0
    %778 = vmatpush1.msra.mxu0 0.0
    %779 = vmatprep.subr.mxu0 0.0
    %780 = vmatpush1.msra.mxu0 0.0
    %781 = vmatprep.subr.mxu0 0.0
    %782 = vmatpush1.msra.mxu0 0.0
    %783 = vmatprep.subr.mxu0 0.0
    %784 = vmatpush1.msra.mxu0 0.0
    %785 = vmatprep.subr.mxu0 0.0
    %786 = vmatpush1.msra.mxu0 0.0
    %787 = vmatprep.subr.mxu0 0.0
    %788 = vmatpush1.msra.mxu0 0.0
    %789 = vmatprep.subr.mxu0 0.0
    %790 = vmatpush1.msra.mxu0 0.0
    %791 = vmatprep.subr.mxu0 0.0
    %792 = vmatpush1.msra.mxu0 0.0
    %793 = vmatprep.subr.mxu0 0.0
    %794 = vmatpush1.msra.mxu0 0.0
    %795 = vmatprep.subr.mxu0 0.0
    %796 = vmatpush1.msra.mxu0 0.0
    %797 = vmatprep.subr.mxu0 0.0
    %798 = vmatpush1.msra.mxu0 0.0
    %799 = vmatprep.subr.mxu0 0.0
    %800 = vmatpush1.msra.mxu0 0.0
    %801 = vmatprep.subr.mxu0 0.0
    %802 = vmatpush1.msra.mxu0 0.0
    %803 = vmatprep.mubr.f32.mxu0 0.0
    %804 = vmatmul.mubr.f32.gmra.mrb[0].mxu0 %v728
    %v805 = vpop.f32.mrb[0].mxu0
    %v806 = vadd.f32 %v709, %v805
    %v807 = vpop.f32.mrb[0].mxu0
    %808 = vmatprep.mubr.f32.mxu0 0.0
    %809 = vmatmul.mubr.f32.gmra.mrb[0].mxu0 %v731
    %v810 = vpop.f32.mrb[0].mxu0
    %v811 = vadd.f32 %v714, %v810
    %v812 = vpop.f32.mrb[0].mxu0
    %813 = vmatprep.mubr.f32.mxu0 0.0
    %814 = vmatmul.mubr.f32.gmra.mrb[0].mxu0 %v734
    %v815 = vpop.f32.mrb[0].mxu0
    %v816 = vadd.f32 %v719, %v815
    %v817 = vpop.f32.mrb[0].mxu0
    %818 = vmatprep.mubr.f32.mxu0 0.0
    %819 = vmatmul.mubr.f32.gmra.mrb[0].mxu0 %v737
    %v820 = vpop.f32.mrb[0].mxu0
    %v821 = vadd.f32 %v724, %v820
    %v822 = vpop.f32.mrb[0].mxu0
    %823 = vdwg.mxu0
    %v825 = vsel %vm136, %v626, 0
    %v828 = vsel %vm136, %v627, 0
    %v831 = vsel %vm136, %v628, 0
    %v834 = vsel %vm136, %v629, 0
    %836 = vmatprep.subr.mxu0 0.0
    %837 = vmatpush1.msra.mxu0 %v611
    %838 = vmatprep.subr.mxu0 0.0
    %839 = vmatpush1.msra.mxu0 %v612
    %840 = vmatprep.subr.mxu0 0.0
    %841 = vmatpush1.msra.mxu0 %v613
    %842 = vmatprep.subr.mxu0 0.0
    %843 = vmatpush1.msra.mxu0 %v614
    %844 = vmatprep.subr.mxu0 0.0
    %845 = vmatpush1.msra.mxu0 0.0
    %846 = vmatprep.subr.mxu0 0.0
    %847 = vmatpush1.msra.mxu0 0.0
    %848 = vmatprep.subr.mxu0 0.0
    %849 = vmatpush1.msra.mxu0 0.0
    %850 = vmatprep.subr.mxu0 0.0
    %851 = vmatpush1.msra.mxu0 0.0
    %852 = vmatprep.subr.mxu0 0.0
    %853 = vmatpush1.msra.mxu0 0.0
    %854 = vmatprep.subr.mxu0 0.0
    %855 = vmatpush1.msra.mxu0 0.0
    %856 = vmatprep.subr.mxu0 0.0
    %857 = vmatpush1.msra.mxu0 0.0
    %858 = vmatprep.subr.mxu0 0.0
    %859 = vmatpush1.msra.mxu0 0.0
    %860 = vmatprep.subr.mxu0 0.0
    %861 = vmatpush1.msra.mxu0 0.0
    %862 = vmatprep.subr.mxu0 0.0
    %863 = vmatpush1.msra.mxu0 0.0
    %864 = vmatprep.subr.mxu0 0.0
    %865 = vmatpush1.msra.mxu0 0.0
    %866 = vmatprep.subr.mxu0 0.0
    %867 = vmatpush1.msra.mxu0 0.0
    %868 = vmatprep.subr.mxu0 0.0
    %869 = vmatpush1.msra.mxu0 0.0
    %870 = vmatprep.subr.mxu0 0.0
    %871 = vmatpush1.msra.mxu0 0.0
    %872 = vmatprep.subr.mxu0 0.0
    %873 = vmatpush1.msra.mxu0 0.0
    %874 = vmatprep.subr.mxu0 0.0
    %875 = vmatpush1.msra.mxu0 0.0
    %876 = vmatprep.subr.mxu0 0.0
    %877 = vmatpush1.msra.mxu0 0.0
    %878 = vmatprep.subr.mxu0 0.0
    %879 = vmatpush1.msra.mxu0 0.0
    %880 = vmatprep.subr.mxu0 0.0
    %881 = vmatpush1.msra.mxu0 0.0
    %882 = vmatprep.subr.mxu0 0.0
    %883 = vmatpush1.msra.mxu0 0.0
    %884 = vmatprep.subr.mxu0 0.0
    %885 = vmatpush1.msra.mxu0 0.0
    %886 = vmatprep.subr.mxu0 0.0
    %887 = vmatpush1.msra.mxu0 0.0
    %888 = vmatprep.subr.mxu0 0.0
    %889 = vmatpush1.msra.mxu0 0.0
    %890 = vmatprep.subr.mxu0 0.0
    %891 = vmatpush1.msra.mxu0 0.0
    %892 = vmatprep.subr.mxu0 0.0
    %893 = vmatpush1.msra.mxu0 0.0
    %894 = vmatprep.subr.mxu0 0.0
    %895 = vmatpush1.msra.mxu0 0.0
    %896 = vmatprep.subr.mxu0 0.0
    %897 = vmatpush1.msra.mxu0 0.0
    %898 = vmatprep.subr.mxu0 0.0
    %899 = vmatpush1.msra.mxu0 0.0
    %900 = vmatprep.mubr.f32.mxu0 0.0
    %901 = vmatmul.mubr.f32.gmra.mrb[0].mxu0 %v825
    %v902 = vpop.f32.mrb[0].mxu0
    %v903 = vadd.f32 0.0, %v902
    %v904 = vpop.f32.mrb[0].mxu0
    %905 = vmatprep.mubr.f32.mxu0 0.0
    %906 = vmatmul.mubr.f32.gmra.mrb[0].mxu0 %v828
    %v907 = vpop.f32.mrb[0].mxu0
    %v908 = vadd.f32 0.0, %v907
    %v909 = vpop.f32.mrb[0].mxu0
    %910 = vmatprep.mubr.f32.mxu0 0.0
    %911 = vmatmul.mubr.f32.gmra.mrb[0].mxu0 %v831
    %v912 = vpop.f32.mrb[0].mxu0
    %v913 = vadd.f32 0.0, %v912
    %v914 = vpop.f32.mrb[0].mxu0
    %915 = vmatprep.mubr.f32.mxu0 0.0
    %916 = vmatmul.mubr.f32.gmra.mrb[0].mxu0 %v834
    %v917 = vpop.f32.mrb[0].mxu0
    %v918 = vadd.f32 0.0, %v917
    %v919 = vpop.f32.mrb[0].mxu0
    %920 = vdwg.mxu0
    %v921 = vadd.f32 %v806, %v903
    %v922 = vadd.f32 %v811, %v908
    %v923 = vadd.f32 %v816, %v913
    %v924 = vadd.f32 %v821, %v918
    %vm925 = vcmp.gt.f32.partialorder %v921, 0.0
    %vm926 = vcmp.gt.f32.partialorder %v922, 0.0
    %vm927 = vcmp.gt.f32.partialorder %v923, 0.0
    %vm928 = vcmp.gt.f32.partialorder %v924, 0.0
    %v929 = vmul.f32 %v921, 0.2
    %v930 = vmul.f32 %v922, 0.2
    %v931 = vmul.f32 %v923, 0.2
    %v932 = vmul.f32 %v924, 0.2
    %v933 = vsel %vm925, %v921, %v929
    %v934 = vsel %vm926, %v922, %v930
    %v935 = vsel %vm927, %v923, %v931
    %v936 = vsel %vm928, %v924, %v932
    %v937 = vld [vmem:[%s2 + $0x8] sm:$0xff]
    %v938 = vld [vmem:[%s2 + $0x18] sm:$0xff]
    %v939 = vld [vmem:[%s2 + $0x28] sm:$0xff]
    %v940 = vld [vmem:[%s2 + $0x38] sm:$0xff]
    %v941 = vld [vmem:[%s2 + $0x48] sm:$0xff]
    %v942 = vld [vmem:[%s2 + $0x58] sm:$0xff]
    %v943 = vld [vmem:[%s2 + $0x68] sm:$0xff]
    %v944 = vld [vmem:[%s2 + $0x78] sm:$0xff]
    %v945 = vld [vmem:[%s2 + $0x88] sm:$0xff]
    %v946 = vld [vmem:[%s2 + $0x98] sm:$0xff]
    %v947 = vld [vmem:[%s2 + $0xa8] sm:$0xff]
    %v948 = vld [vmem:[%s2 + $0xb8] sm:$0xff]
    %v949 = vld [vmem:[%s2 + $0xc8] sm:$0xff]
    %v950 = vld [vmem:[%s2 + $0xd8] sm:$0xff]
    %v951 = vld [vmem:[%s2 + $0xe8] sm:$0xff]
    %v952 = vld [vmem:[%s2 + $0xf8] sm:$0xff]
    %953 = vmatprep.subr.mxu0 0.0
    %954 = vmatpush1.msra.mxu0 %v937
    %955 = vmatprep.subr.mxu0 0.0
    %956 = vmatpush1.msra.mxu0 %v938
    %957 = vmatprep.subr.mxu0 0.0
    %958 = vmatpush1.msra.mxu0 %v939
    %959 = vmatprep.subr.mxu0 0.0
    %960 = vmatpush1.msra.mxu0 %v940
    %961 = vmatprep.subr.mxu0 0.0
    %962 = vmatpush1.msra.mxu0 %v941
    %963 = vmatprep.subr.mxu0 0.0
    %964 = vmatpush1.msra.mxu0 %v942
    %965 = vmatprep.subr.mxu0 0.0
    %966 = vmatpush1.msra.mxu0 %v943
    %967 = vmatprep.subr.mxu0 0.0
    %968 = vmatpush1.msra.mxu0 %v944
    %969 = vmatprep.subr.mxu0 0.0
    %970 = vmatpush1.msra.mxu0 %v945
    %971 = vmatprep.subr.mxu0 0.0
    %972 = vmatpush1.msra.mxu0 %v946
    %973 = vmatprep.subr.mxu0 0.0
    %974 = vmatpush1.msra.mxu0 %v947
    %975 = vmatprep.subr.mxu0 0.0
    %976 = vmatpush1.msra.mxu0 %v948
    %977 = vmatprep.subr.mxu0 0.0
    %978 = vmatpush1.msra.mxu0 %v949
    %979 = vmatprep.subr.mxu0 0.0
    %980 = vmatpush1.msra.mxu0 %v950
    %981 = vmatprep.subr.mxu0 0.0
    %982 = vmatpush1.msra.mxu0 %v951
    %983 = vmatprep.subr.mxu0 0.0
    %984 = vmatpush1.msra.mxu0 %v952
    %985 = vmatprep.subr.mxu0 0.0
    %986 = vmatpush1.msra.mxu0 0.0
    %987 = vmatprep.subr.mxu0 0.0
    %988 = vmatpush1.msra.mxu0 0.0
    %989 = vmatprep.subr.mxu0 0.0
    %990 = vmatpush1.msra.mxu0 0.0
    %991 = vmatprep.subr.mxu0 0.0
    %992 = vmatpush1.msra.mxu0 0.0
    %993 = vmatprep.subr.mxu0 0.0
    %994 = vmatpush1.msra.mxu0 0.0
    %995 = vmatprep.subr.mxu0 0.0
    %996 = vmatpush1.msra.mxu0 0.0
    %997 = vmatprep.subr.mxu0 0.0
    %998 = vmatpush1.msra.mxu0 0.0
    %999 = vmatprep.subr.mxu0 0.0
    %1000 = vmatpush1.msra.mxu0 0.0
    %1001 = vmatprep.subr.mxu0 0.0
    %1002 = vmatpush1.msra.mxu0 0.0
    %1003 = vmatprep.subr.mxu0 0.0
    %1004 = vmatpush1.msra.mxu0 0.0
    %1005 = vmatprep.subr.mxu0 0.0
    %1006 = vmatpush1.msra.mxu0 0.0
    %1007 = vmatprep.subr.mxu0 0.0
    %1008 = vmatpush1.msra.mxu0 0.0
    %1009 = vmatprep.subr.mxu0 0.0
    %1010 = vmatpush1.msra.mxu0 0.0
    %1011 = vmatprep.subr.mxu0 0.0
    %1012 = vmatpush1.msra.mxu0 0.0
    %1013 = vmatprep.subr.mxu0 0.0
    %1014 = vmatpush1.msra.mxu0 0.0
    %1015 = vmatprep.subr.mxu0 0.0
    %1016 = vmatpush1.msra.mxu0 0.0
    %1017 = vmatprep.mubr.f32.mxu0 0.0
    %1018 = vmatmul.mubr.f32.gmra.mrb[0].mxu0 %v933
    %v1019 = vpop.f32.mrb[0].mxu0
    %v1020 = vadd.f32 0.0, %v1019
    %v1021 = vpop.f32.mrb[0].mxu0
    %1022 = vmatprep.mubr.f32.mxu0 0.0
    %1023 = vmatmul.mubr.f32.gmra.mrb[0].mxu0 %v934
    %v1024 = vpop.f32.mrb[0].mxu0
    %v1025 = vadd.f32 0.0, %v1024
    %v1026 = vpop.f32.mrb[0].mxu0
    %1027 = vmatprep.mubr.f32.mxu0 0.0
    %1028 = vmatmul.mubr.f32.gmra.mrb[0].mxu0 %v935
    %v1029 = vpop.f32.mrb[0].mxu0
    %v1030 = vadd.f32 0.0, %v1029
    %v1031 = vpop.f32.mrb[0].mxu0
    %1032 = vmatprep.mubr.f32.mxu0 0.0
    %1033 = vmatmul.mubr.f32.gmra.mrb[0].mxu0 %v936
    %v1034 = vpop.f32.mrb[0].mxu0
    %v1035 = vadd.f32 0.0, %v1034
    %v1036 = vpop.f32.mrb[0].mxu0
    %1037 = vdwg.mxu0
    %v1038 = vld [vmem:[%s4 + $0x4] ss:$0 sm:$0xff]
    %v1039 = vld [vmem:[%s4 + $0x5] ss:$0 sm:$0xff]
    %vm1040 = vcmask 1048064
    %1041 = vrot.lane.b32.xlu0 %v1020, 64
    %v1042 = vpop.permute.xlu0 %1041
    %v1043 = vsel %vm1040, %v1042, %v1020
    %1044 = vrot.lane.b32.xlu0 %v1025, 64
    %v1045 = vpop.permute.xlu0 %1044
    %v1046 = vsel %vm1040, %v1045, %v1025
    %1047 = vrot.lane.b32.xlu0 %v1030, 64
    %v1048 = vpop.permute.xlu0 %1047
    %v1049 = vsel %vm1040, %v1048, %v1030
    %1050 = vrot.lane.b32.xlu0 %v1035, 64
    %v1051 = vpop.permute.xlu0 %1050
    %v1052 = vsel %vm1040, %v1051, %v1035
    %1053 = vrot.lane.b32.xlu0 %v1043, 64
    %v1054 = vpop.permute.xlu0 %1053
    %1055 = vrot.lane.b32.xlu0 %v1046, 64
    %v1056 = vpop.permute.xlu0 %1055
    %1057 = vrot.lane.b32.xlu0 %v1049, 64
    %v1058 = vpop.permute.xlu0 %1057
    %1059 = vrot.lane.b32.xlu0 %v1052, 64
    %v1060 = vpop.permute.xlu0 %1059
    %v1061 = vsel %vm1040, %v1054, %v1020
    %v1062 = vsel %vm1040, %v1056, %v1025
    %v1063 = vsel %vm1040, %v1058, %v1030
    %v1064 = vsel %vm1040, %v1060, %v1035
    %1066 = vrot.lane.b32.xlu0 %v1038, 63
    %v1067 = vpop.permute.xlu0 %1066
    %v1069 = vmul.f32 %v1061, %v1067
    %v1070 = vmul.f32 %v1062, %v1067
    %v1071 = vmul.f32 %v1063, %v1067
    %v1072 = vmul.f32 %v1064, %v1067
    %1074 = vrot.lane.b32.xlu0 %v1039, 1
    %v1075 = vpop.permute.xlu0 %1074
    %v1077 = vmul.f32 %v1061, %v1075
    %v1078 = vmul.f32 %v1062, %v1075
    %v1079 = vmul.f32 %v1063, %v1075
    %v1080 = vmul.f32 %v1064, %v1075
    %s1081 = scalar_lea.vmem %s1, 192
    %v1082 = vld [vmem:[%s1081] sm:$0xff]
    %v1083 = vld [vmem:[%s1081 + $0x8] sm:$0xff]
    %v1084 = vld [vmem:[%s1081 + $0x10] sm:$0xff]
    %v1085 = vld [vmem:[%s1081 + $0x18] sm:$0xff]
    %s1086 = scalar_lea.vmem %s1, 224
    %v1087 = vld [vmem:[%s1086] sm:$0xff]
    %v1088 = vld [vmem:[%s1086 + $0x8] sm:$0xff]
    %v1089 = vld [vmem:[%s1086 + $0x10] sm:$0xff]
    %v1090 = vld [vmem:[%s1086 + $0x18] sm:$0xff]
    %s1091 = scalar_lea.vmem %s1, 256
    %v1092 = vld [vmem:[%s1091] sm:$0xff]
    %v1093 = vld [vmem:[%s1091 + $0x8] sm:$0xff]
    %v1094 = vld [vmem:[%s1091 + $0x10] sm:$0xff]
    %v1095 = vld [vmem:[%s1091 + $0x18] sm:$0xff]
    %v1097 = vsel %vm136, %v1087, 0
    %v1100 = vsel %vm136, %v1088, 0
    %v1103 = vsel %vm136, %v1089, 0
    %v1106 = vsel %vm136, %v1090, 0
    %1108 = vmatprep.subr.mxu0 0.0
    %1109 = vmatpush1.msra.mxu0 %v1020
    %1110 = vmatprep.subr.mxu0 0.0
    %1111 = vmatpush1.msra.mxu0 %v1025
    %1112 = vmatprep.subr.mxu0 0.0
    %1113 = vmatpush1.msra.mxu0 %v1030
    %1114 = vmatprep.subr.mxu0 0.0
    %1115 = vmatpush1.msra.mxu0 %v1035
    %1116 = vmatprep.subr.mxu0 0.0
    %1117 = vmatpush1.msra.mxu0 0.0
    %1118 = vmatprep.subr.mxu0 0.0
    %1119 = vmatpush1.msra.mxu0 0.0
    %1120 = vmatprep.subr.mxu0 0.0
    %1121 = vmatpush1.msra.mxu0 0.0
    %1122 = vmatprep.subr.mxu0 0.0
    %1123 = vmatpush1.msra.mxu0 0.0
    %1124 = vmatprep.subr.mxu0 0.0
    %1125 = vmatpush1.msra.mxu0 0.0
    %1126 = vmatprep.subr.mxu0 0.0
    %1127 = vmatpush1.msra.mxu0 0.0
    %1128 = vmatprep.subr.mxu0 0.0
    %1129 = vmatpush1.msra.mxu0 0.0
    %1130 = vmatprep.subr.mxu0 0.0
    %1131 = vmatpush1.msra.mxu0 0.0
    %1132 = vmatprep.subr.mxu0 0.0
    %1133 = vmatpush1.msra.mxu0 0.0
    %1134 = vmatprep.subr.mxu0 0.0
    %1135 = vmatpush1.msra.mxu0 0.0
    %1136 = vmatprep.subr.mxu0 0.0
    %1137 = vmatpush1.msra.mxu0 0.0
    %1138 = vmatprep.subr.mxu0 0.0
    %1139 = vmatpush1.msra.mxu0 0.0
    %1140 = vmatprep.subr.mxu0 0.0
    %1141 = vmatpush1.msra.mxu0 0.0
    %1142 = vmatprep.subr.mxu0 0.0
    %1143 = vmatpush1.msra.mxu0 0.0
    %1144 = vmatprep.subr.mxu0 0.0
    %1145 = vmatpush1.msra.mxu0 0.0
    %1146 = vmatprep.subr.mxu0 0.0
    %1147 = vmatpush1.msra.mxu0 0.0
    %1148 = vmatprep.subr.mxu0 0.0
    %1149 = vmatpush1.msra.mxu0 0.0
    %1150 = vmatprep.subr.mxu0 0.0
    %1151 = vmatpush1.msra.mxu0 0.0
    %1152 = vmatprep.subr.mxu0 0.0
    %1153 = vmatpush1.msra.mxu0 0.0
    %1154 = vmatprep.subr.mxu0 0.0
    %1155 = vmatpush1.msra.mxu0 0.0
    %1156 = vmatprep.subr.mxu0 0.0
    %1157 = vmatpush1.msra.mxu0 0.0
    %1158 = vmatprep.subr.mxu0 0.0
    %1159 = vmatpush1.msra.mxu0 0.0
    %1160 = vmatprep.subr.mxu0 0.0
    %1161 = vmatpush1.msra.mxu0 0.0
    %1162 = vmatprep.subr.mxu0 0.0
    %1163 = vmatpush1.msra.mxu0 0.0
    %1164 = vmatprep.subr.mxu0 0.0
    %1165 = vmatpush1.msra.mxu0 0.0
    %1166 = vmatprep.subr.mxu0 0.0
    %1167 = vmatpush1.msra.mxu0 0.0
    %1168 = vmatprep.subr.mxu0 0.0
    %1169 = vmatpush1.msra.mxu0 0.0
    %1170 = vmatprep.subr.mxu0 0.0
    %1171 = vmatpush1.msra.mxu0 0.0
    %1172 = vmatprep.mubr.f32.mxu0 0.0
    %1173 = vmatmul.mubr.f32.gmra.mrb[0].mxu0 %v1097
    %v1174 = vpop.f32.mrb[0].mxu0
    %v1175 = vadd.f32 0.0, %v1174
    %v1176 = vpop.f32.mrb[0].mxu0
    %1177 = vmatprep.mubr.f32.mxu0 0.0
    %1178 = vmatmul.mubr.f32.gmra.mrb[0].mxu0 %v1100
    %v1179 = vpop.f32.mrb[0].mxu0
    %v1180 = vadd.f32 0.0, %v1179
    %v1181 = vpop.f32.mrb[0].mxu0
    %1182 = vmatprep.mubr.f32.mxu0 0.0
    %1183 = vmatmul.mubr.f32.gmra.mrb[0].mxu0 %v1103
    %v1184 = vpop.f32.mrb[0].mxu0
    %v1185 = vadd.f32 0.0, %v1184
    %v1186 = vpop.f32.mrb[0].mxu0
    %1187 = vmatprep.mubr.f32.mxu0 0.0
    %1188 = vmatmul.mubr.f32.gmra.mrb[0].mxu0 %v1106
    %v1189 = vpop.f32.mrb[0].mxu0
    %v1190 = vadd.f32 0.0, %v1189
    %v1191 = vpop.f32.mrb[0].mxu0
    %1192 = vdwg.mxu0
    %1197 = vrot.lane.b32.xlu0 %v1069, 65
    %v1198 = vpop.permute.xlu0 %1197
    %1199 = vrot.lane.b32.xlu0 %v1070, 65
    %v1200 = vpop.permute.xlu0 %1199
    %1201 = vrot.lane.b32.xlu0 %v1071, 65
    %v1202 = vpop.permute.xlu0 %1201
    %1203 = vrot.lane.b32.xlu0 %v1072, 65
    %v1204 = vpop.permute.xlu0 %1203
    %v1210 = vsel %vm136, %v1082, 0
    %v1213 = vsel %vm136, %v1083, 0
    %v1216 = vsel %vm136, %v1084, 0
    %v1219 = vsel %vm136, %v1085, 0
    %1221 = vmatprep.subr.mxu0 0.0
    %1222 = vmatpush1.msra.mxu0 %v1198
    %1223 = vmatprep.subr.mxu0 0.0
    %1224 = vmatpush1.msra.mxu0 %v1200
    %1225 = vmatprep.subr.mxu0 0.0
    %1226 = vmatpush1.msra.mxu0 %v1202
    %1227 = vmatprep.subr.mxu0 0.0
    %1228 = vmatpush1.msra.mxu0 %v1204
    %1229 = vmatprep.subr.mxu0 0.0
    %1230 = vmatpush1.msra.mxu0 0.0
    %1231 = vmatprep.subr.mxu0 0.0
    %1232 = vmatpush1.msra.mxu0 0.0
    %1233 = vmatprep.subr.mxu0 0.0
    %1234 = vmatpush1.msra.mxu0 0.0
    %1235 = vmatprep.subr.mxu0 0.0
    %1236 = vmatpush1.msra.mxu0 0.0
    %1237 = vmatprep.subr.mxu0 0.0
    %1238 = vmatpush1.msra.mxu0 0.0
    %1239 = vmatprep.subr.mxu0 0.0
    %1240 = vmatpush1.msra.mxu0 0.0
    %1241 = vmatprep.subr.mxu0 0.0
    %1242 = vmatpush1.msra.mxu0 0.0
    %1243 = vmatprep.subr.mxu0 0.0
    %1244 = vmatpush1.msra.mxu0 0.0
    %1245 = vmatprep.subr.mxu0 0.0
    %1246 = vmatpush1.msra.mxu0 0.0
    %1247 = vmatprep.subr.mxu0 0.0
    %1248 = vmatpush1.msra.mxu0 0.0
    %1249 = vmatprep.subr.mxu0 0.0
    %1250 = vmatpush1.msra.mxu0 0.0
    %1251 = vmatprep.subr.mxu0 0.0
    %1252 = vmatpush1.msra.mxu0 0.0
    %1253 = vmatprep.subr.mxu0 0.0
    %1254 = vmatpush1.msra.mxu0 0.0
    %1255 = vmatprep.subr.mxu0 0.0
    %1256 = vmatpush1.msra.mxu0 0.0
    %1257 = vmatprep.subr.mxu0 0.0
    %1258 = vmatpush1.msra.mxu0 0.0
    %1259 = vmatprep.subr.mxu0 0.0
    %1260 = vmatpush1.msra.mxu0 0.0
    %1261 = vmatprep.subr.mxu0 0.0
    %1262 = vmatpush1.msra.mxu0 0.0
    %1263 = vmatprep.subr.mxu0 0.0
    %1264 = vmatpush1.msra.mxu0 0.0
    %1265 = vmatprep.subr.mxu0 0.0
    %1266 = vmatpush1.msra.mxu0 0.0
    %1267 = vmatprep.subr.mxu0 0.0
    %1268 = vmatpush1.msra.mxu0 0.0
    %1269 = vmatprep.subr.mxu0 0.0
    %1270 = vmatpush1.msra.mxu0 0.0
    %1271 = vmatprep.subr.mxu0 0.0
    %1272 = vmatpush1.msra.mxu0 0.0
    %1273 = vmatprep.subr.mxu0 0.0
    %1274 = vmatpush1.msra.mxu0 0.0
    %1275 = vmatprep.subr.mxu0 0.0
    %1276 = vmatpush1.msra.mxu0 0.0
    %1277 = vmatprep.subr.mxu0 0.0
    %1278 = vmatpush1.msra.mxu0 0.0
    %1279 = vmatprep.subr.mxu0 0.0
    %1280 = vmatpush1.msra.mxu0 0.0
    %1281 = vmatprep.subr.mxu0 0.0
    %1282 = vmatpush1.msra.mxu0 0.0
    %1283 = vmatprep.subr.mxu0 0.0
    %1284 = vmatpush1.msra.mxu0 0.0
    %1285 = vmatprep.mubr.f32.mxu0 0.0
    %1286 = vmatmul.mubr.f32.gmra.mrb[0].mxu0 %v1210
    %v1287 = vpop.f32.mrb[0].mxu0
    %v1288 = vadd.f32 %v1175, %v1287
    %v1289 = vpop.f32.mrb[0].mxu0
    %1290 = vmatprep.mubr.f32.mxu0 0.0
    %1291 = vmatmul.mubr.f32.gmra.mrb[0].mxu0 %v1213
    %v1292 = vpop.f32.mrb[0].mxu0
    %v1293 = vadd.f32 %v1180, %v1292
    %v1294 = vpop.f32.mrb[0].mxu0
    %1295 = vmatprep.mubr.f32.mxu0 0.0
    %1296 = vmatmul.mubr.f32.gmra.mrb[0].mxu0 %v1216
    %v1297 = vpop.f32.mrb[0].mxu0
    %v1298 = vadd.f32 %v1185, %v1297
    %v1299 = vpop.f32.mrb[0].mxu0
    %1300 = vmatprep.mubr.f32.mxu0 0.0
    %1301 = vmatmul.mubr.f32.gmra.mrb[0].mxu0 %v1219
    %v1302 = vpop.f32.mrb[0].mxu0
    %v1303 = vadd.f32 %v1190, %v1302
    %v1304 = vpop.f32.mrb[0].mxu0
    %1305 = vdwg.mxu0
    %1310 = vrot.lane.b32.xlu0 %v1077, 127
    %v1311 = vpop.permute.xlu0 %1310
    %1312 = vrot.lane.b32.xlu0 %v1078, 127
    %v1313 = vpop.permute.xlu0 %1312
    %1314 = vrot.lane.b32.xlu0 %v1079, 127
    %v1315 = vpop.permute.xlu0 %1314
    %1316 = vrot.lane.b32.xlu0 %v1080, 127
    %v1317 = vpop.permute.xlu0 %1316
    %v1323 = vsel %vm136, %v1092, 0
    %v1326 = vsel %vm136, %v1093, 0
    %v1329 = vsel %vm136, %v1094, 0
    %v1332 = vsel %vm136, %v1095, 0
    %1334 = vmatprep.subr.mxu0 0.0
    %1335 = vmatpush1.msra.mxu0 %v1311
    %1336 = vmatprep.subr.mxu0 0.0
    %1337 = vmatpush1.msra.mxu0 %v1313
    %1338 = vmatprep.subr.mxu0 0.0
    %1339 = vmatpush1.msra.mxu0 %v1315
    %1340 = vmatprep.subr.mxu0 0.0
    %1341 = vmatpush1.msra.mxu0 %v1317
    %1342 = vmatprep.subr.mxu0 0.0
    %1343 = vmatpush1.msra.mxu0 0.0
    %1344 = vmatprep.subr.mxu0 0.0
    %1345 = vmatpush1.msra.mxu0 0.0
    %1346 = vmatprep.subr.mxu0 0.0
    %1347 = vmatpush1.msra.mxu0 0.0
    %1348 = vmatprep.subr.mxu0 0.0
    %1349 = vmatpush1.msra.mxu0 0.0
    %1350 = vmatprep.subr.mxu0 0.0
    %1351 = vmatpush1.msra.mxu0 0.0
    %1352 = vmatprep.subr.mxu0 0.0
    %1353 = vmatpush1.msra.mxu0 0.0
    %1354 = vmatprep.subr.mxu0 0.0
    %1355 = vmatpush1.msra.mxu0 0.0
    %1356 = vmatprep.subr.mxu0 0.0
    %1357 = vmatpush1.msra.mxu0 0.0
    %1358 = vmatprep.subr.mxu0 0.0
    %1359 = vmatpush1.msra.mxu0 0.0
    %1360 = vmatprep.subr.mxu0 0.0
    %1361 = vmatpush1.msra.mxu0 0.0
    %1362 = vmatprep.subr.mxu0 0.0
    %1363 = vmatpush1.msra.mxu0 0.0
    %1364 = vmatprep.subr.mxu0 0.0
    %1365 = vmatpush1.msra.mxu0 0.0
    %1366 = vmatprep.subr.mxu0 0.0
    %1367 = vmatpush1.msra.mxu0 0.0
    %1368 = vmatprep.subr.mxu0 0.0
    %1369 = vmatpush1.msra.mxu0 0.0
    %1370 = vmatprep.subr.mxu0 0.0
    %1371 = vmatpush1.msra.mxu0 0.0
    %1372 = vmatprep.subr.mxu0 0.0
    %1373 = vmatpush1.msra.mxu0 0.0
    %1374 = vmatprep.subr.mxu0 0.0
    %1375 = vmatpush1.msra.mxu0 0.0
    %1376 = vmatprep.subr.mxu0 0.0
    %1377 = vmatpush1.msra.mxu0 0.0
    %1378 = vmatprep.subr.mxu0 0.0
    %1379 = vmatpush1.msra.mxu0 0.0
    %1380 = vmatprep.subr.mxu0 0.0
    %1381 = vmatpush1.msra.mxu0 0.0
    %1382 = vmatprep.subr.mxu0 0.0
    %1383 = vmatpush1.msra.mxu0 0.0
    %1384 = vmatprep.subr.mxu0 0.0
    %1385 = vmatpush1.msra.mxu0 0.0
    %1386 = vmatprep.subr.mxu0 0.0
    %1387 = vmatpush1.msra.mxu0 0.0
    %1388 = vmatprep.subr.mxu0 0.0
    %1389 = vmatpush1.msra.mxu0 0.0
    %1390 = vmatprep.subr.mxu0 0.0
    %1391 = vmatpush1.msra.mxu0 0.0
    %1392 = vmatprep.subr.mxu0 0.0
    %1393 = vmatpush1.msra.mxu0 0.0
    %1394 = vmatprep.subr.mxu0 0.0
    %1395 = vmatpush1.msra.mxu0 0.0
    %1396 = vmatprep.subr.mxu0 0.0
    %1397 = vmatpush1.msra.mxu0 0.0
    %1398 = vmatprep.mubr.f32.mxu0 0.0
    %1399 = vmatmul.mubr.f32.gmra.mrb[0].mxu0 %v1323
    %v1400 = vpop.f32.mrb[0].mxu0
    %v1401 = vadd.f32 0.0, %v1400
    %v1402 = vpop.f32.mrb[0].mxu0
    %1403 = vmatprep.mubr.f32.mxu0 0.0
    %1404 = vmatmul.mubr.f32.gmra.mrb[0].mxu0 %v1326
    %v1405 = vpop.f32.mrb[0].mxu0
    %v1406 = vadd.f32 0.0, %v1405
    %v1407 = vpop.f32.mrb[0].mxu0
    %1408 = vmatprep.mubr.f32.mxu0 0.0
    %1409 = vmatmul.mubr.f32.gmra.mrb[0].mxu0 %v1329
    %v1410 = vpop.f32.mrb[0].mxu0
    %v1411 = vadd.f32 0.0, %v1410
    %v1412 = vpop.f32.mrb[0].mxu0
    %1413 = vmatprep.mubr.f32.mxu0 0.0
    %1414 = vmatmul.mubr.f32.gmra.mrb[0].mxu0 %v1332
    %v1415 = vpop.f32.mrb[0].mxu0
    %v1416 = vadd.f32 0.0, %v1415
    %v1417 = vpop.f32.mrb[0].mxu0
    %1418 = vdwg.mxu0
    %v1419 = vadd.f32 %v1288, %v1401
    %v1420 = vadd.f32 %v1293, %v1406
    %v1421 = vadd.f32 %v1298, %v1411
    %v1422 = vadd.f32 %v1303, %v1416
    %vm1423 = vcmp.gt.f32.partialorder %v1419, 0.0
    %vm1424 = vcmp.gt.f32.partialorder %v1420, 0.0
    %vm1425 = vcmp.gt.f32.partialorder %v1421, 0.0
    %vm1426 = vcmp.gt.f32.partialorder %v1422, 0.0
    %v1427 = vmul.f32 %v1419, 0.2
    %v1428 = vmul.f32 %v1420, 0.2
    %v1429 = vmul.f32 %v1421, 0.2
    %v1430 = vmul.f32 %v1422, 0.2
    %v1431 = vsel %vm1423, %v1419, %v1427
    %v1432 = vsel %vm1424, %v1420, %v1428
    %v1433 = vsel %vm1425, %v1421, %v1429
    %v1434 = vsel %vm1426, %v1422, %v1430
    %v1435 = vld [vmem:[%s2 + $0x8] sm:$0xff]
    %v1436 = vld [vmem:[%s2 + $0x18] sm:$0xff]
    %v1437 = vld [vmem:[%s2 + $0x28] sm:$0xff]
    %v1438 = vld [vmem:[%s2 + $0x38] sm:$0xff]
    %v1439 = vld [vmem:[%s2 + $0x48] sm:$0xff]
    %v1440 = vld [vmem:[%s2 + $0x58] sm:$0xff]
    %v1441 = vld [vmem:[%s2 + $0x68] sm:$0xff]
    %v1442 = vld [vmem:[%s2 + $0x78] sm:$0xff]
    %1451 = vrot.lane.b32.xlu0 %v1435, 64
    %v1452 = vpop.permute.xlu0 %1451
    %1453 = vrot.lane.b32.xlu0 %v1436, 64
    %v1454 = vpop.permute.xlu0 %1453
    %1455 = vrot.lane.b32.xlu0 %v1437, 64
    %v1456 = vpop.permute.xlu0 %1455
    %1457 = vrot.lane.b32.xlu0 %v1438, 64
    %v1458 = vpop.permute.xlu0 %1457
    %1459 = vrot.lane.b32.xlu0 %v1439, 64
    %v1460 = vpop.permute.xlu0 %1459
    %1461 = vrot.lane.b32.xlu0 %v1440, 64
    %v1462 = vpop.permute.xlu0 %1461
    %1463 = vrot.lane.b32.xlu0 %v1441, 64
    %v1464 = vpop.permute.xlu0 %1463
    %1465 = vrot.lane.b32.xlu0 %v1442, 64
    %v1466 = vpop.permute.xlu0 %1465
    %vm1475 = vcmask 523264
    %v1477 = vsel %vm1475, %v1431, 0
    %v1480 = vsel %vm1475, %v1432, 0
    %v1483 = vsel %vm1475, %v1433, 0
    %v1486 = vsel %vm1475, %v1434, 0
    %1488 = vmatprep.subr.mxu0 0.0
    %1489 = vmatpush1.msra.mxu0 %v1452
    %1490 = vmatprep.subr.mxu0 0.0
    %1491 = vmatpush1.msra.mxu0 %v1454
    %1492 = vmatprep.subr.mxu0 0.0
    %1493 = vmatpush1.msra.mxu0 %v1456
    %1494 = vmatprep.subr.mxu0 0.0
    %1495 = vmatpush1.msra.mxu0 %v1458
    %1496 = vmatprep.subr.mxu0 0.0
    %1497 = vmatpush1.msra.mxu0 %v1460
    %1498 = vmatprep.subr.mxu0 0.0
    %1499 = vmatpush1.msra.mxu0 %v1462
    %1500 = vmatprep.subr.mxu0 0.0
    %1501 = vmatpush1.msra.mxu0 %v1464
    %1502 = vmatprep.subr.mxu0 0.0
    %1503 = vmatpush1.msra.mxu0 %v1466
    %1504 = vmatprep.subr.mxu0 0.0
    %1505 = vmatpush1.msra.mxu0 0.0
    %1506 = vmatprep.subr.mxu0 0.0
    %1507 = vmatpush1.msra.mxu0 0.0
    %1508 = vmatprep.subr.mxu0 0.0
    %1509 = vmatpush1.msra.mxu0 0.0
    %1510 = vmatprep.subr.mxu0 0.0
    %1511 = vmatpush1.msra.mxu0 0.0
    %1512 = vmatprep.subr.mxu0 0.0
    %1513 = vmatpush1.msra.mxu0 0.0
    %1514 = vmatprep.subr.mxu0 0.0
    %1515 = vmatpush1.msra.mxu0 0.0
    %1516 = vmatprep.subr.mxu0 0.0
    %1517 = vmatpush1.msra.mxu0 0.0
    %1518 = vmatprep.subr.mxu0 0.0
    %1519 = vmatpush1.msra.mxu0 0.0
    %1520 = vmatprep.subr.mxu0 0.0
    %1521 = vmatpush1.msra.mxu0 0.0
    %1522 = vmatprep.subr.mxu0 0.0
    %1523 = vmatpush1.msra.mxu0 0.0
    %1524 = vmatprep.subr.mxu0 0.0
    %1525 = vmatpush1.msra.mxu0 0.0
    %1526 = vmatprep.subr.mxu0 0.0
    %1527 = vmatpush1.msra.mxu0 0.0
    %1528 = vmatprep.subr.mxu0 0.0
    %1529 = vmatpush1.msra.mxu0 0.0
    %1530 = vmatprep.subr.mxu0 0.0
    %1531 = vmatpush1.msra.mxu0 0.0
    %1532 = vmatprep.subr.mxu0 0.0
    %1533 = vmatpush1.msra.mxu0 0.0
    %1534 = vmatprep.subr.mxu0 0.0
    %1535 = vmatpush1.msra.mxu0 0.0
    %1536 = vmatprep.subr.mxu0 0.0
    %1537 = vmatpush1.msra.mxu0 0.0
    %1538 = vmatprep.subr.mxu0 0.0
    %1539 = vmatpush1.msra.mxu0 0.0
    %1540 = vmatprep.subr.mxu0 0.0
    %1541 = vmatpush1.msra.mxu0 0.0
    %1542 = vmatprep.subr.mxu0 0.0
    %1543 = vmatpush1.msra.mxu0 0.0
    %1544 = vmatprep.subr.mxu0 0.0
    %1545 = vmatpush1.msra.mxu0 0.0
    %1546 = vmatprep.subr.mxu0 0.0
    %1547 = vmatpush1.msra.mxu0 0.0
    %1548 = vmatprep.subr.mxu0 0.0
    %1549 = vmatpush1.msra.mxu0 0.0
    %1550 = vmatprep.subr.mxu0 0.0
    %1551 = vmatpush1.msra.mxu0 0.0
    %1552 = vmatprep.mubr.f32.mxu0 0.0
    %1553 = vmatmul.mubr.f32.gmra.mrb[0].mxu0 %v1477
    %v1554 = vpop.f32.mrb[0].mxu0
    %v1555 = vadd.f32 0.0, %v1554
    %v1556 = vpop.f32.mrb[0].mxu0
    %1557 = vmatprep.mubr.f32.mxu0 0.0
    %1558 = vmatmul.mubr.f32.gmra.mrb[0].mxu0 %v1480
    %v1559 = vpop.f32.mrb[0].mxu0
    %v1560 = vadd.f32 0.0, %v1559
    %v1561 = vpop.f32.mrb[0].mxu0
    %1562 = vmatprep.mubr.f32.mxu0 0.0
    %1563 = vmatmul.mubr.f32.gmra.mrb[0].mxu0 %v1483
    %v1564 = vpop.f32.mrb[0].mxu0
    %v1565 = vadd.f32 0.0, %v1564
    %v1566 = vpop.f32.mrb[0].mxu0
    %1567 = vmatprep.mubr.f32.mxu0 0.0
    %1568 = vmatmul.mubr.f32.gmra.mrb[0].mxu0 %v1486
    %v1569 = vpop.f32.mrb[0].mxu0
    %v1570 = vadd.f32 0.0, %v1569
    %v1571 = vpop.f32.mrb[0].mxu0
    %1572 = vdwg.mxu0
    %v1573 = vld [vmem:[%s4 + $0x6] ss:$0 sm:$0xff]
    %v1574 = vld [vmem:[%s4 + $0x7] ss:$0 sm:$0xff]
    %vm1575 = vcmask 1047808
    %1576 = vrot.lane.b32.xlu0 %v1555, 32
    %v1577 = vpop.permute.xlu0 %1576
    %v1578 = vsel %vm1575, %v1577, %v1555
    %1579 = vrot.lane.b32.xlu0 %v1560, 32
    %v1580 = vpop.permute.xlu0 %1579
    %v1581 = vsel %vm1575, %v1580, %v1560
    %1582 = vrot.lane.b32.xlu0 %v1565, 32
    %v1583 = vpop.permute.xlu0 %1582
    %v1584 = vsel %vm1575, %v1583, %v1565
    %1585 = vrot.lane.b32.xlu0 %v1570, 32
    %v1586 = vpop.permute.xlu0 %1585
    %v1587 = vsel %vm1575, %v1586, %v1570
    %1588 = vrot.lane.b32.xlu0 %v1578, 32
    %v1589 = vpop.permute.xlu0 %1588
    %1590 = vrot.lane.b32.xlu0 %v1581, 32
    %v1591 = vpop.permute.xlu0 %1590
    %1592 = vrot.lane.b32.xlu0 %v1584, 32
    %v1593 = vpop.permute.xlu0 %1592
    %1594 = vrot.lane.b32.xlu0 %v1587, 32
    %v1595 = vpop.permute.xlu0 %1594
    %v1596 = vsel %vm1575, %v1589, %v1555
    %v1597 = vsel %vm1575, %v1591, %v1560
    %v1598 = vsel %vm1575, %v1593, %v1565
    %v1599 = vsel %vm1575, %v1595, %v1570
    %1601 = vrot.lane.b32.xlu0 %v1573, 31
    %v1602 = vpop.permute.xlu0 %1601
    %v1604 = vmul.f32 %v1596, %v1602
    %v1605 = vmul.f32 %v1597, %v1602
    %v1606 = vmul.f32 %v1598, %v1602
    %v1607 = vmul.f32 %v1599, %v1602
    %1609 = vrot.lane.b32.xlu0 %v1574, 1
    %v1610 = vpop.permute.xlu0 %1609
    %v1612 = vmul.f32 %v1596, %v1610
    %v1613 = vmul.f32 %v1597, %v1610
    %v1614 = vmul.f32 %v1598, %v1610
    %v1615 = vmul.f32 %v1599, %v1610
    %s1616 = scalar_lea.vmem %s1, 288
    %v1617 = vld [vmem:[%s1616] sm:$0xff]
    %v1618 = vld [vmem:[%s1616 + $0x8] sm:$0xff]
    %v1619 = vld [vmem:[%s1616 + $0x10] sm:$0xff]
    %v1620 = vld [vmem:[%s1616 + $0x18] sm:$0xff]
    %s1621 = scalar_lea.vmem %s1, 320
    %v1622 = vld [vmem:[%s1621] sm:$0xff]
    %v1623 = vld [vmem:[%s1621 + $0x8] sm:$0xff]
    %v1624 = vld [vmem:[%s1621 + $0x10] sm:$0xff]
    %v1625 = vld [vmem:[%s1621 + $0x18] sm:$0xff]
    %s1626 = scalar_lea.vmem %s1, 352
    %v1627 = vld [vmem:[%s1626] sm:$0xff]
    %v1628 = vld [vmem:[%s1626 + $0x8] sm:$0xff]
    %v1629 = vld [vmem:[%s1626 + $0x10] sm:$0xff]
    %v1630 = vld [vmem:[%s1626 + $0x18] sm:$0xff]
    %v1632 = vsel %vm136, %v1622, 0
    %v1635 = vsel %vm136, %v1623, 0
    %v1638 = vsel %vm136, %v1624, 0
    %v1641 = vsel %vm136, %v1625, 0
    %1643 = vmatprep.subr.mxu0 0.0
    %1644 = vmatpush1.msra.mxu0 %v1555
    %1645 = vmatprep.subr.mxu0 0.0
    %1646 = vmatpush1.msra.mxu0 %v1560
    %1647 = vmatprep.subr.mxu0 0.0
    %1648 = vmatpush1.msra.mxu0 %v1565
    %1649 = vmatprep.subr.mxu0 0.0
    %1650 = vmatpush1.msra.mxu0 %v1570
    %1651 = vmatprep.subr.mxu0 0.0
    %1652 = vmatpush1.msra.mxu0 0.0
    %1653 = vmatprep.subr.mxu0 0.0
    %1654 = vmatpush1.msra.mxu0 0.0
    %1655 = vmatprep.subr.mxu0 0.0
    %1656 = vmatpush1.msra.mxu0 0.0
    %1657 = vmatprep.subr.mxu0 0.0
    %1658 = vmatpush1.msra.mxu0 0.0
    %1659 = vmatprep.subr.mxu0 0.0
    %1660 = vmatpush1.msra.mxu0 0.0
    %1661 = vmatprep.subr.mxu0 0.0
    %1662 = vmatpush1.msra.mxu0 0.0
    %1663 = vmatprep.subr.mxu0 0.0
    %1664 = vmatpush1.msra.mxu0 0.0
    %1665 = vmatprep.subr.mxu0 0.0
    %1666 = vmatpush1.msra.mxu0 0.0
    %1667 = vmatprep.subr.mxu0 0.0
    %1668 = vmatpush1.msra.mxu0 0.0
    %1669 = vmatprep.subr.mxu0 0.0
    %1670 = vmatpush1.msra.mxu0 0.0
    %1671 = vmatprep.subr.mxu0 0.0
    %1672 = vmatpush1.msra.mxu0 0.0
    %1673 = vmatprep.subr.mxu0 0.0
    %1674 = vmatpush1.msra.mxu0 0.0
    %1675 = vmatprep.subr.mxu0 0.0
    %1676 = vmatpush1.msra.mxu0 0.0
    %1677 = vmatprep.subr.mxu0 0.0
    %1678 = vmatpush1.msra.mxu0 0.0
    %1679 = vmatprep.subr.mxu0 0.0
    %1680 = vmatpush1.msra.mxu0 0.0
    %1681 = vmatprep.subr.mxu0 0.0
    %1682 = vmatpush1.msra.mxu0 0.0
    %1683 = vmatprep.subr.mxu0 0.0
    %1684 = vmatpush1.msra.mxu0 0.0
    %1685 = vmatprep.subr.mxu0 0.0
    %1686 = vmatpush1.msra.mxu0 0.0
    %1687 = vmatprep.subr.mxu0 0.0
    %1688 = vmatpush1.msra.mxu0 0.0
    %1689 = vmatprep.subr.mxu0 0.0
    %1690 = vmatpush1.msra.mxu0 0.0
    %1691 = vmatprep.subr.mxu0 0.0
    %1692 = vmatpush1.msra.mxu0 0.0
    %1693 = vmatprep.subr.mxu0 0.0
    %1694 = vmatpush1.msra.mxu0 0.0
    %1695 = vmatprep.subr.mxu0 0.0
    %1696 = vmatpush1.msra.mxu0 0.0
    %1697 = vmatprep.subr.mxu0 0.0
    %1698 = vmatpush1.msra.mxu0 0.0
    %1699 = vmatprep.subr.mxu0 0.0
    %1700 = vmatpush1.msra.mxu0 0.0
    %1701 = vmatprep.subr.mxu0 0.0
    %1702 = vmatpush1.msra.mxu0 0.0
    %1703 = vmatprep.subr.mxu0 0.0
    %1704 = vmatpush1.msra.mxu0 0.0
    %1705 = vmatprep.subr.mxu0 0.0
    %1706 = vmatpush1.msra.mxu0 0.0
    %1707 = vmatprep.mubr.f32.mxu0 0.0
    %1708 = vmatmul.mubr.f32.gmra.mrb[0].mxu0 %v1632
    %v1709 = vpop.f32.mrb[0].mxu0
    %v1710 = vadd.f32 0.0, %v1709
    %v1711 = vpop.f32.mrb[0].mxu0
    %1712 = vmatprep.mubr.f32.mxu0 0.0
    %1713 = vmatmul.mubr.f32.gmra.mrb[0].mxu0 %v1635
    %v1714 = vpop.f32.mrb[0].mxu0
    %v1715 = vadd.f32 0.0, %v1714
    %v1716 = vpop.f32.mrb[0].mxu0
    %1717 = vmatprep.mubr.f32.mxu0 0.0
    %1718 = vmatmul.mubr.f32.gmra.mrb[0].mxu0 %v1638
    %v1719 = vpop.f32.mrb[0].mxu0
    %v1720 = vadd.f32 0.0, %v1719
    %v1721 = vpop.f32.mrb[0].mxu0
    %1722 = vmatprep.mubr.f32.mxu0 0.0
    %1723 = vmatmul.mubr.f32.gmra.mrb[0].mxu0 %v1641
    %v1724 = vpop.f32.mrb[0].mxu0
    %v1725 = vadd.f32 0.0, %v1724
    %v1726 = vpop.f32.mrb[0].mxu0
    %1727 = vdwg.mxu0
    %1732 = vrot.lane.b32.xlu0 %v1604, 97
    %v1733 = vpop.permute.xlu0 %1732
    %1734 = vrot.lane.b32.xlu0 %v1605, 97
    %v1735 = vpop.permute.xlu0 %1734
    %1736 = vrot.lane.b32.xlu0 %v1606, 97
    %v1737 = vpop.permute.xlu0 %1736
    %1738 = vrot.lane.b32.xlu0 %v1607, 97
    %v1739 = vpop.permute.xlu0 %1738
    %v1745 = vsel %vm136, %v1617, 0
    %v1748 = vsel %vm136, %v1618, 0
    %v1751 = vsel %vm136, %v1619, 0
    %v1754 = vsel %vm136, %v1620, 0
    %1756 = vmatprep.subr.mxu0 0.0
    %1757 = vmatpush1.msra.mxu0 %v1733
    %1758 = vmatprep.subr.mxu0 0.0
    %1759 = vmatpush1.msra.mxu0 %v1735
    %1760 = vmatprep.subr.mxu0 0.0
    %1761 = vmatpush1.msra.mxu0 %v1737
    %1762 = vmatprep.subr.mxu0 0.0
    %1763 = vmatpush1.msra.mxu0 %v1739
    %1764 = vmatprep.subr.mxu0 0.0
    %1765 = vmatpush1.msra.mxu0 0.0
    %1766 = vmatprep.subr.mxu0 0.0
    %1767 = vmatpush1.msra.mxu0 0.0
    %1768 = vmatprep.subr.mxu0 0.0
    %1769 = vmatpush1.msra.mxu0 0.0
    %1770 = vmatprep.subr.mxu0 0.0
    %1771 = vmatpush1.msra.mxu0 0.0
    %1772 = vmatprep.subr.mxu0 0.0
    %1773 = vmatpush1.msra.mxu0 0.0
    %1774 = vmatprep.subr.mxu0 0.0
    %1775 = vmatpush1.msra.mxu0 0.0
    %1776 = vmatprep.subr.mxu0 0.0
    %1777 = vmatpush1.msra.mxu0 0.0
    %1778 = vmatprep.subr.mxu0 0.0
    %1779 = vmatpush1.msra.mxu0 0.0
    %1780 = vmatprep.subr.mxu0 0.0
    %1781 = vmatpush1.msra.mxu0 0.0
    %1782 = vmatprep.subr.mxu0 0.0
    %1783 = vmatpush1.msra.mxu0 0.0
    %1784 = vmatprep.subr.mxu0 0.0
    %1785 = vmatpush1.msra.mxu0 0.0
    %1786 = vmatprep.subr.mxu0 0.0
    %1787 = vmatpush1.msra.mxu0 0.0
    %1788 = vmatprep.subr.mxu0 0.0
    %1789 = vmatpush1.msra.mxu0 0.0
    %1790 = vmatprep.subr.mxu0 0.0
    %1791 = vmatpush1.msra.mxu0 0.0
    %1792 = vmatprep.subr.mxu0 0.0
    %1793 = vmatpush1.msra.mxu0 0.0
    %1794 = vmatprep.subr.mxu0 0.0
    %1795 = vmatpush1.msra.mxu0 0.0
    %1796 = vmatprep.subr.mxu0 0.0
    %1797 = vmatpush1.msra.mxu0 0.0
    %1798 = vmatprep.subr.mxu0 0.0
    %1799 = vmatpush1.msra.mxu0 0.0
    %1800 = vmatprep.subr.mxu0 0.0
    %1801 = vmatpush1.msra.mxu0 0.0
    %1802 = vmatprep.subr.mxu0 0.0
    %1803 = vmatpush1.msra.mxu0 0.0
    %1804 = vmatprep.subr.mxu0 0.0
    %1805 = vmatpush1.msra.mxu0 0.0
    %1806 = vmatprep.subr.mxu0 0.0
    %1807 = vmatpush1.msra.mxu0 0.0
    %1808 = vmatprep.subr.mxu0 0.0
    %1809 = vmatpush1.msra.mxu0 0.0
    %1810 = vmatprep.subr.mxu0 0.0
    %1811 = vmatpush1.msra.mxu0 0.0
    %1812 = vmatprep.subr.mxu0 0.0
    %1813 = vmatpush1.msra.mxu0 0.0
    %1814 = vmatprep.subr.mxu0 0.0
    %1815 = vmatpush1.msra.mxu0 0.0
    %1816 = vmatprep.subr.mxu0 0.0
    %1817 = vmatpush1.msra.mxu0 0.0
    %1818 = vmatprep.subr.mxu0 0.0
    %1819 = vmatpush1.msra.mxu0 0.0
    %1820 = vmatprep.mubr.f32.mxu0 0.0
    %1821 = vmatmul.mubr.f32.gmra.mrb[0].mxu0 %v1745
    %v1822 = vpop.f32.mrb[0].mxu0
    %v1823 = vadd.f32 %v1710, %v1822
    %v1824 = vpop.f32.mrb[0].mxu0
    %1825 = vmatprep.mubr.f32.mxu0 0.0
    %1826 = vmatmul.mubr.f32.gmra.mrb[0].mxu0 %v1748
    %v1827 = vpop.f32.mrb[0].mxu0
    %v1828 = vadd.f32 %v1715, %v1827
    %v1829 = vpop.f32.mrb[0].mxu0
    %1830 = vmatprep.mubr.f32.mxu0 0.0
    %1831 = vmatmul.mubr.f32.gmra.mrb[0].mxu0 %v1751
    %v1832 = vpop.f32.mrb[0].mxu0
    %v1833 = vadd.f32 %v1720, %v1832
    %v1834 = vpop.f32.mrb[0].mxu0
    %1835 = vmatprep.mubr.f32.mxu0 0.0
    %1836 = vmatmul.mubr.f32.gmra.mrb[0].mxu0 %v1754
    %v1837 = vpop.f32.mrb[0].mxu0
    %v1838 = vadd.f32 %v1725, %v1837
    %v1839 = vpop.f32.mrb[0].mxu0
    %1840 = vdwg.mxu0
    %1845 = vrot.lane.b32.xlu0 %v1612, 127
    %v1846 = vpop.permute.xlu0 %1845
    %1847 = vrot.lane.b32.xlu0 %v1613, 127
    %v1848 = vpop.permute.xlu0 %1847
    %1849 = vrot.lane.b32.xlu0 %v1614, 127
    %v1850 = vpop.permute.xlu0 %1849
    %1851 = vrot.lane.b32.xlu0 %v1615, 127
    %v1852 = vpop.permute.xlu0 %1851
    %v1858 = vsel %vm136, %v1627, 0
    %v1861 = vsel %vm136, %v1628, 0
    %v1864 = vsel %vm136, %v1629, 0
    %v1867 = vsel %vm136, %v1630, 0
    %1869 = vmatprep.subr.mxu0 0.0
    %1870 = vmatpush1.msra.mxu0 %v1846
    %1871 = vmatprep.subr.mxu0 0.0
    %1872 = vmatpush1.msra.mxu0 %v1848
    %1873 = vmatprep.subr.mxu0 0.0
    %1874 = vmatpush1.msra.mxu0 %v1850
    %1875 = vmatprep.subr.mxu0 0.0
    %1876 = vmatpush1.msra.mxu0 %v1852
    %1877 = vmatprep.subr.mxu0 0.0
    %1878 = vmatpush1.msra.mxu0 0.0
    %1879 = vmatprep.subr.mxu0 0.0
    %1880 = vmatpush1.msra.mxu0 0.0
    %1881 = vmatprep.subr.mxu0 0.0
    %1882 = vmatpush1.msra.mxu0 0.0
    %1883 = vmatprep.subr.mxu0 0.0
    %1884 = vmatpush1.msra.mxu0 0.0
    %1885 = vmatprep.subr.mxu0 0.0
    %1886 = vmatpush1.msra.mxu0 0.0
    %1887 = vmatprep.subr.mxu0 0.0
    %1888 = vmatpush1.msra.mxu0 0.0
    %1889 = vmatprep.subr.mxu0 0.0
    %1890 = vmatpush1.msra.mxu0 0.0
    %1891 = vmatprep.subr.mxu0 0.0
    %1892 = vmatpush1.msra.mxu0 0.0
    %1893 = vmatprep.subr.mxu0 0.0
    %1894 = vmatpush1.msra.mxu0 0.0
    %1895 = vmatprep.subr.mxu0 0.0
    %1896 = vmatpush1.msra.mxu0 0.0
    %1897 = vmatprep.subr.mxu0 0.0
    %1898 = vmatpush1.msra.mxu0 0.0
    %1899 = vmatprep.subr.mxu0 0.0
    %1900 = vmatpush1.msra.mxu0 0.0
    %1901 = vmatprep.subr.mxu0 0.0
    %1902 = vmatpush1.msra.mxu0 0.0
    %1903 = vmatprep.subr.mxu0 0.0
    %1904 = vmatpush1.msra.mxu0 0.0
    %1905 = vmatprep.subr.mxu0 0.0
    %1906 = vmatpush1.msra.mxu0 0.0
    %1907 = vmatprep.subr.mxu0 0.0
    %1908 = vmatpush1.msra.mxu0 0.0
    %1909 = vmatprep.subr.mxu0 0.0
    %1910 = vmatpush1.msra.mxu0 0.0
    %1911 = vmatprep.subr.mxu0 0.0
    %1912 = vmatpush1.msra.mxu0 0.0
    %1913 = vmatprep.subr.mxu0 0.0
    %1914 = vmatpush1.msra.mxu0 0.0
    %1915 = vmatprep.subr.mxu0 0.0
    %1916 = vmatpush1.msra.mxu0 0.0
    %1917 = vmatprep.subr.mxu0 0.0
    %1918 = vmatpush1.msra.mxu0 0.0
    %1919 = vmatprep.subr.mxu0 0.0
    %1920 = vmatpush1.msra.mxu0 0.0
    %1921 = vmatprep.subr.mxu0 0.0
    %1922 = vmatpush1.msra.mxu0 0.0
    %1923 = vmatprep.subr.mxu0 0.0
    %1924 = vmatpush1.msra.mxu0 0.0
    %1925 = vmatprep.subr.mxu0 0.0
    %1926 = vmatpush1.msra.mxu0 0.0
    %1927 = vmatprep.subr.mxu0 0.0
    %1928 = vmatpush1.msra.mxu0 0.0
    %1929 = vmatprep.subr.mxu0 0.0
    %1930 = vmatpush1.msra.mxu0 0.0
    %1931 = vmatprep.subr.mxu0 0.0
    %1932 = vmatpush1.msra.mxu0 0.0
    %1933 = vmatprep.mubr.f32.mxu0 0.0
    %1934 = vmatmul.mubr.f32.gmra.mrb[0].mxu0 %v1858
    %v1935 = vpop.f32.mrb[0].mxu0
    %v1936 = vadd.f32 0.0, %v1935
    %v1937 = vpop.f32.mrb[0].mxu0
    %1938 = vmatprep.mubr.f32.mxu0 0.0
    %1939 = vmatmul.mubr.f32.gmra.mrb[0].mxu0 %v1861
    %v1940 = vpop.f32.mrb[0].mxu0
    %v1941 = vadd.f32 0.0, %v1940
    %v1942 = vpop.f32.mrb[0].mxu0
    %1943 = vmatprep.mubr.f32.mxu0 0.0
    %1944 = vmatmul.mubr.f32.gmra.mrb[0].mxu0 %v1864
    %v1945 = vpop.f32.mrb[0].mxu0
    %v1946 = vadd.f32 0.0, %v1945
    %v1947 = vpop.f32.mrb[0].mxu0
    %1948 = vmatprep.mubr.f32.mxu0 0.0
    %1949 = vmatmul.mubr.f32.gmra.mrb[0].mxu0 %v1867
    %v1950 = vpop.f32.mrb[0].mxu0
    %v1951 = vadd.f32 0.0, %v1950
    %v1952 = vpop.f32.mrb[0].mxu0
    %1953 = vdwg.mxu0
    %v1954 = vadd.f32 %v1823, %v1936
    %v1955 = vadd.f32 %v1828, %v1941
    %v1956 = vadd.f32 %v1833, %v1946
    %v1957 = vadd.f32 %v1838, %v1951
    %vm1958 = vcmp.gt.f32.partialorder %v1954, 0.0
    %vm1959 = vcmp.gt.f32.partialorder %v1955, 0.0
    %vm1960 = vcmp.gt.f32.partialorder %v1956, 0.0
    %vm1961 = vcmp.gt.f32.partialorder %v1957, 0.0
    %v1962 = vmul.f32 %v1954, 0.2
    %v1963 = vmul.f32 %v1955, 0.2
    %v1964 = vmul.f32 %v1956, 0.2
    %v1965 = vmul.f32 %v1957, 0.2
    %v1966 = vsel %vm1958, %v1954, %v1962
    %v1967 = vsel %vm1959, %v1955, %v1963
    %v1968 = vsel %vm1960, %v1956, %v1964
    %v1969 = vsel %vm1961, %v1957, %v1965
    %v1970 = vld [vmem:[%s2 + $0x8] sm:$0xff]
    %v1971 = vld [vmem:[%s2 + $0x18] sm:$0xff]
    %v1972 = vld [vmem:[%s2 + $0x28] sm:$0xff]
    %v1973 = vld [vmem:[%s2 + $0x38] sm:$0xff]
    %1978 = vrot.lane.b32.xlu0 %v1970, 32
    %v1979 = vpop.permute.xlu0 %1978
    %1980 = vrot.lane.b32.xlu0 %v1971, 32
    %v1981 = vpop.permute.xlu0 %1980
    %1982 = vrot.lane.b32.xlu0 %v1972, 32
    %v1983 = vpop.permute.xlu0 %1982
    %1984 = vrot.lane.b32.xlu0 %v1973, 32
    %v1985 = vpop.permute.xlu0 %1984
    %v1991 = vsel %vm136, %v1966, 0
    %v1994 = vsel %vm136, %v1967, 0
    %v1997 = vsel %vm136, %v1968, 0
    %v2000 = vsel %vm136, %v1969, 0
    %2002 = vmatprep.subr.mxu0 0.0
    %2003 = vmatpush1.msra.mxu0 %v1979
    %2004 = vmatprep.subr.mxu0 0.0
    %2005 = vmatpush1.msra.mxu0 %v1981
    %2006 = vmatprep.subr.mxu0 0.0
    %2007 = vmatpush1.msra.mxu0 %v1983
    %2008 = vmatprep.subr.mxu0 0.0
    %2009 = vmatpush1.msra.mxu0 %v1985
    %2010 = vmatprep.subr.mxu0 0.0
    %2011 = vmatpush1.msra.mxu0 0.0
    %2012 = vmatprep.subr.mxu0 0.0
    %2013 = vmatpush1.msra.mxu0 0.0
    %2014 = vmatprep.subr.mxu0 0.0
    %2015 = vmatpush1.msra.mxu0 0.0
    %2016 = vmatprep.subr.mxu0 0.0
    %2017 = vmatpush1.msra.mxu0 0.0
    %2018 = vmatprep.subr.mxu0 0.0
    %2019 = vmatpush1.msra.mxu0 0.0
    %2020 = vmatprep.subr.mxu0 0.0
    %2021 = vmatpush1.msra.mxu0 0.0
    %2022 = vmatprep.subr.mxu0 0.0
    %2023 = vmatpush1.msra.mxu0 0.0
    %2024 = vmatprep.subr.mxu0 0.0
    %2025 = vmatpush1.msra.mxu0 0.0
    %2026 = vmatprep.subr.mxu0 0.0
    %2027 = vmatpush1.msra.mxu0 0.0
    %2028 = vmatprep.subr.mxu0 0.0
    %2029 = vmatpush1.msra.mxu0 0.0
    %2030 = vmatprep.subr.mxu0 0.0
    %2031 = vmatpush1.msra.mxu0 0.0
    %2032 = vmatprep.subr.mxu0 0.0
    %2033 = vmatpush1.msra.mxu0 0.0
    %2034 = vmatprep.subr.mxu0 0.0
    %2035 = vmatpush1.msra.mxu0 0.0
    %2036 = vmatprep.subr.mxu0 0.0
    %2037 = vmatpush1.msra.mxu0 0.0
    %2038 = vmatprep.subr.mxu0 0.0
    %2039 = vmatpush1.msra.mxu0 0.0
    %2040 = vmatprep.subr.mxu0 0.0
    %2041 = vmatpush1.msra.mxu0 0.0
    %2042 = vmatprep.subr.mxu0 0.0
    %2043 = vmatpush1.msra.mxu0 0.0
    %2044 = vmatprep.subr.mxu0 0.0
    %2045 = vmatpush1.msra.mxu0 0.0
    %2046 = vmatprep.subr.mxu0 0.0
    %2047 = vmatpush1.msra.mxu0 0.0
    %2048 = vmatprep.subr.mxu0 0.0
    %2049 = vmatpush1.msra.mxu0 0.0
    %2050 = vmatprep.subr.mxu0 0.0
    %2051 = vmatpush1.msra.mxu0 0.0
    %2052 = vmatprep.subr.mxu0 0.0
    %2053 = vmatpush1.msra.mxu0 0.0
    %2054 = vmatprep.subr.mxu0 0.0
    %2055 = vmatpush1.msra.mxu0 0.0
    %2056 = vmatprep.subr.mxu0 0.0
    %2057 = vmatpush1.msra.mxu0 0.0
    %2058 = vmatprep.subr.mxu0 0.0
    %2059 = vmatpush1.msra.mxu0 0.0
    %2060 = vmatprep.subr.mxu0 0.0
    %2061 = vmatpush1.msra.mxu0 0.0
    %2062 = vmatprep.subr.mxu0 0.0
    %2063 = vmatpush1.msra.mxu0 0.0
    %2064 = vmatprep.subr.mxu0 0.0
    %2065 = vmatpush1.msra.mxu0 0.0
    %2066 = vmatprep.mubr.f32.mxu0 0.0
    %2067 = vmatmul.mubr.f32.gmra.mrb[0].mxu0 %v1991
    %v2068 = vpop.f32.mrb[0].mxu0
    %v2069 = vadd.f32 0.0, %v2068
    %v2070 = vpop.f32.mrb[0].mxu0
    %2071 = vmatprep.mubr.f32.mxu0 0.0
    %2072 = vmatmul.mubr.f32.gmra.mrb[0].mxu0 %v1994
    %v2073 = vpop.f32.mrb[0].mxu0
    %v2074 = vadd.f32 0.0, %v2073
    %v2075 = vpop.f32.mrb[0].mxu0
    %2076 = vmatprep.mubr.f32.mxu0 0.0
    %2077 = vmatmul.mubr.f32.gmra.mrb[0].mxu0 %v1997
    %v2078 = vpop.f32.mrb[0].mxu0
    %v2079 = vadd.f32 0.0, %v2078
    %v2080 = vpop.f32.mrb[0].mxu0
    %2081 = vmatprep.mubr.f32.mxu0 0.0
    %2082 = vmatmul.mubr.f32.gmra.mrb[0].mxu0 %v2000
    %v2083 = vpop.f32.mrb[0].mxu0
    %v2084 = vadd.f32 0.0, %v2083
    %v2085 = vpop.f32.mrb[0].mxu0
    %2086 = vdwg.mxu0
    %v2087 = vld [vmem:[%s4 + $0x10] sm:$0xff]
    %v2088 = vld [vmem:[%s4 + $0x28] sm:$0xff]
    %s2089 = scalar_lea.vmem %s1, 384
    %v2090 = vld [vmem:[%s2089] sm:$0xff]
    %v2091 = vld [vmem:[%s2089 + $0x8] sm:$0xff]
    %v2092 = vld [vmem:[%s2089 + $0x10] sm:$0xff]
    %v2093 = vld [vmem:[%s2089 + $0x18] sm:$0xff]
    %vm2094 = vcmask 130048
    %v2096 = vsel %vm2094, %v2069, 0
    %v2099 = vsel %vm2094, %v2074, 0
    %v2102 = vsel %vm2094, %v2079, 0
    %v2105 = vsel %vm2094, %v2084, 0
    %2107 = vmatprep.subr.mxu0 0.0
    %2108 = vmatpush1.msra.mxu0 %v2087
    %2109 = vmatprep.subr.mxu0 0.0
    %2110 = vmatpush1.msra.mxu0 %v2088
    %2111 = vmatprep.subr.mxu0 0.0
    %2112 = vmatpush1.msra.mxu0 0.0
    %2113 = vmatprep.subr.mxu0 0.0
    %2114 = vmatpush1.msra.mxu0 0.0
    %2115 = vmatprep.subr.mxu0 0.0
    %2116 = vmatpush1.msra.mxu0 0.0
    %2117 = vmatprep.subr.mxu0 0.0
    %2118 = vmatpush1.msra.mxu0 0.0
    %2119 = vmatprep.subr.mxu0 0.0
    %2120 = vmatpush1.msra.mxu0 0.0
    %2121 = vmatprep.subr.mxu0 0.0
    %2122 = vmatpush1.msra.mxu0 0.0
    %2123 = vmatprep.subr.mxu0 0.0
    %2124 = vmatpush1.msra.mxu0 0.0
    %2125 = vmatprep.subr.mxu0 0.0
    %2126 = vmatpush1.msra.mxu0 0.0
    %2127 = vmatprep.subr.mxu0 0.0
    %2128 = vmatpush1.msra.mxu0 0.0
    %2129 = vmatprep.subr.mxu0 0.0
    %2130 = vmatpush1.msra.mxu0 0.0
    %2131 = vmatprep.subr.mxu0 0.0
    %2132 = vmatpush1.msra.mxu0 0.0
    %2133 = vmatprep.subr.mxu0 0.0
    %2134 = vmatpush1.msra.mxu0 0.0
    %2135 = vmatprep.subr.mxu0 0.0
    %2136 = vmatpush1.msra.mxu0 0.0
    %2137 = vmatprep.subr.mxu0 0.0
    %2138 = vmatpush1.msra.mxu0 0.0
    %2139 = vmatprep.subr.mxu0 0.0
    %2140 = vmatpush1.msra.mxu0 0.0
    %2141 = vmatprep.subr.mxu0 0.0
    %2142 = vmatpush1.msra.mxu0 0.0
    %2143 = vmatprep.subr.mxu0 0.0
    %2144 = vmatpush1.msra.mxu0 0.0
    %2145 = vmatprep.subr.mxu0 0.0
    %2146 = vmatpush1.msra.mxu0 0.0
    %2147 = vmatprep.subr.mxu0 0.0
    %2148 = vmatpush1.msra.mxu0 0.0
    %2149 = vmatprep.subr.mxu0 0.0
    %2150 = vmatpush1.msra.mxu0 0.0
    %2151 = vmatprep.subr.mxu0 0.0
    %2152 = vmatpush1.msra.mxu0 0.0
    %2153 = vmatprep.subr.mxu0 0.0
    %2154 = vmatpush1.msra.mxu0 0.0
    %2155 = vmatprep.subr.mxu0 0.0
    %2156 = vmatpush1.msra.mxu0 0.0
    %2157 = vmatprep.subr.mxu0 0.0
    %2158 = vmatpush1.msra.mxu0 0.0
    %2159 = vmatprep.subr.mxu0 0.0
    %2160 = vmatpush1.msra.mxu0 0.0
    %2161 = vmatprep.subr.mxu0 0.0
    %2162 = vmatpush1.msra.mxu0 0.0
    %2163 = vmatprep.subr.mxu0 0.0
    %2164 = vmatpush1.msra.mxu0 0.0
    %2165 = vmatprep.subr.mxu0 0.0
    %2166 = vmatpush1.msra.mxu0 0.0
    %2167 = vmatprep.subr.mxu0 0.0
    %2168 = vmatpush1.msra.mxu0 0.0
    %2169 = vmatprep.subr.mxu0 0.0
    %2170 = vmatpush1.msra.mxu0 0.0
    %2171 = vmatprep.mubr.f32.mxu0 0.0
    %2172 = vmatmul.mubr.f32.gmra.mrb[0].mxu0 %v2096
    %v2173 = vpop.f32.mrb[0].mxu0
    %v2174 = vadd.f32 0.0, %v2173
    %v2175 = vpop.f32.mrb[0].mxu0
    %2176 = vmatprep.mubr.f32.mxu0 0.0
    %2177 = vmatmul.mubr.f32.gmra.mrb[0].mxu0 %v2099
    %v2178 = vpop.f32.mrb[0].mxu0
    %v2179 = vadd.f32 0.0, %v2178
    %v2180 = vpop.f32.mrb[0].mxu0
    %2181 = vmatprep.mubr.f32.mxu0 0.0
    %2182 = vmatmul.mubr.f32.gmra.mrb[0].mxu0 %v2102
    %v2183 = vpop.f32.mrb[0].mxu0
    %v2184 = vadd.f32 0.0, %v2183
    %v2185 = vpop.f32.mrb[0].mxu0
    %2186 = vmatprep.mubr.f32.mxu0 0.0
    %2187 = vmatmul.mubr.f32.gmra.mrb[0].mxu0 %v2105
    %v2188 = vpop.f32.mrb[0].mxu0
    %v2189 = vadd.f32 0.0, %v2188
    %v2190 = vpop.f32.mrb[0].mxu0
    %2191 = vdwg.mxu0
    %s2192 = scalar_lea.vmem %s1, 416
    %v2193 = vld [vmem:[%s2192] sm:$0xff]
    %v2194 = vld [vmem:[%s2192 + $0x8] sm:$0xff]
    %v2195 = vld [vmem:[%s2192 + $0x10] sm:$0xff]
    %v2196 = vld [vmem:[%s2192 + $0x18] sm:$0xff]
    %2199 = vrot.lane.b32.xlu0 %v2087, 120
    %v2200 = vpop.permute.xlu0 %2199
    %2201 = vrot.lane.b32.xlu0 %v2088, 120
    %v2202 = vpop.permute.xlu0 %2201
    %2205 = vmatprep.subr.mxu0 0.0
    %2206 = vmatpush1.msra.mxu0 %v2200
    %2207 = vmatprep.subr.mxu0 0.0
    %2208 = vmatpush1.msra.mxu0 %v2202
    %2209 = vmatprep.subr.mxu0 0.0
    %2210 = vmatpush1.msra.mxu0 0.0
    %2211 = vmatprep.subr.mxu0 0.0
    %2212 = vmatpush1.msra.mxu0 0.0
    %2213 = vmatprep.subr.mxu0 0.0
    %2214 = vmatpush1.msra.mxu0 0.0
    %2215 = vmatprep.subr.mxu0 0.0
    %2216 = vmatpush1.msra.mxu0 0.0
    %2217 = vmatprep.subr.mxu0 0.0
    %2218 = vmatpush1.msra.mxu0 0.0
    %2219 = vmatprep.subr.mxu0 0.0
    %2220 = vmatpush1.msra.mxu0 0.0
    %2221 = vmatprep.subr.mxu0 0.0
    %2222 = vmatpush1.msra.mxu0 0.0
    %2223 = vmatprep.subr.mxu0 0.0
    %2224 = vmatpush1.msra.mxu0 0.0
    %2225 = vmatprep.subr.mxu0 0.0
    %2226 = vmatpush1.msra.mxu0 0.0
    %2227 = vmatprep.subr.mxu0 0.0
    %2228 = vmatpush1.msra.mxu0 0.0
    %2229 = vmatprep.subr.mxu0 0.0
    %2230 = vmatpush1.msra.mxu0 0.0
    %2231 = vmatprep.subr.mxu0 0.0
    %2232 = vmatpush1.msra.mxu0 0.0
    %2233 = vmatprep.subr.mxu0 0.0
    %2234 = vmatpush1.msra.mxu0 0.0
    %2235 = vmatprep.subr.mxu0 0.0
    %2236 = vmatpush1.msra.mxu0 0.0
    %2237 = vmatprep.subr.mxu0 0.0
    %2238 = vmatpush1.msra.mxu0 0.0
    %2239 = vmatprep.subr.mxu0 0.0
    %2240 = vmatpush1.msra.mxu0 0.0
    %2241 = vmatprep.subr.mxu0 0.0
    %2242 = vmatpush1.msra.mxu0 0.0
    %2243 = vmatprep.subr.mxu0 0.0
    %2244 = vmatpush1.msra.mxu0 0.0
    %2245 = vmatprep.subr.mxu0 0.0
    %2246 = vmatpush1.msra.mxu0 0.0
    %2247 = vmatprep.subr.mxu0 0.0
    %2248 = vmatpush1.msra.mxu0 0.0
    %2249 = vmatprep.subr.mxu0 0.0
    %2250 = vmatpush1.msra.mxu0 0.0
    %2251 = vmatprep.subr.mxu0 0.0
    %2252 = vmatpush1.msra.mxu0 0.0
    %2253 = vmatprep.subr.mxu0 0.0
    %2254 = vmatpush1.msra.mxu0 0.0
    %2255 = vmatprep.subr.mxu0 0.0
    %2256 = vmatpush1.msra.mxu0 0.0
    %2257 = vmatprep.subr.mxu0 0.0
    %2258 = vmatpush1.msra.mxu0 0.0
    %2259 = vmatprep.subr.mxu0 0.0
    %2260 = vmatpush1.msra.mxu0 0.0
    %2261 = vmatprep.subr.mxu0 0.0
    %2262 = vmatpush1.msra.mxu0 0.0
    %2263 = vmatprep.subr.mxu0 0.0
    %2264 = vmatpush1.msra.mxu0 0.0
    %2265 = vmatprep.subr.mxu0 0.0
    %2266 = vmatpush1.msra.mxu0 0.0
    %2267 = vmatprep.subr.mxu0 0.0
    %2268 = vmatpush1.msra.mxu0 0.0
    %2269 = vmatprep.mubr.f32.mxu0 0.0
    %2270 = vmatmul.mubr.f32.gmra.mrb[0].mxu0 %v2096
    %v2271 = vpop.f32.mrb[0].mxu0
    %v2272 = vadd.f32 0.0, %v2271
    %v2273 = vpop.f32.mrb[0].mxu0
    %2274 = vmatprep.mubr.f32.mxu0 0.0
    %2275 = vmatmul.mubr.f32.gmra.mrb[0].mxu0 %v2099
    %v2276 = vpop.f32.mrb[0].mxu0
    %v2277 = vadd.f32 0.0, %v2276
    %v2278 = vpop.f32.mrb[0].mxu0
    %2279 = vmatprep.mubr.f32.mxu0 0.0
    %2280 = vmatmul.mubr.f32.gmra.mrb[0].mxu0 %v2102
    %v2281 = vpop.f32.mrb[0].mxu0
    %v2282 = vadd.f32 0.0, %v2281
    %v2283 = vpop.f32.mrb[0].mxu0
    %2284 = vmatprep.mubr.f32.mxu0 0.0
    %2285 = vmatmul.mubr.f32.gmra.mrb[0].mxu0 %v2105
    %v2286 = vpop.f32.mrb[0].mxu0
    %v2287 = vadd.f32 0.0, %v2286
    %v2288 = vpop.f32.mrb[0].mxu0
    %2289 = vdwg.mxu0
    %v2291 = vsel %vm136, %v2193, 0
    %v2294 = vsel %vm136, %v2194, 0
    %v2297 = vsel %vm136, %v2195, 0
    %v2300 = vsel %vm136, %v2196, 0
    %2302 = vmatprep.subr.mxu0 0.0
    %2303 = vmatpush1.msra.mxu0 %v2272
    %2304 = vmatprep.subr.mxu0 0.0
    %2305 = vmatpush1.msra.mxu0 %v2277
    %2306 = vmatprep.subr.mxu0 0.0
    %2307 = vmatpush1.msra.mxu0 %v2282
    %2308 = vmatprep.subr.mxu0 0.0
    %2309 = vmatpush1.msra.mxu0 %v2287
    %2310 = vmatprep.subr.mxu0 0.0
    %2311 = vmatpush1.msra.mxu0 0.0
    %2312 = vmatprep.subr.mxu0 0.0
    %2313 = vmatpush1.msra.mxu0 0.0
    %2314 = vmatprep.subr.mxu0 0.0
    %2315 = vmatpush1.msra.mxu0 0.0
    %2316 = vmatprep.subr.mxu0 0.0
    %2317 = vmatpush1.msra.mxu0 0.0
    %2318 = vmatprep.subr.mxu0 0.0
    %2319 = vmatpush1.msra.mxu0 0.0
    %2320 = vmatprep.subr.mxu0 0.0
    %2321 = vmatpush1.msra.mxu0 0.0
    %2322 = vmatprep.subr.mxu0 0.0
    %2323 = vmatpush1.msra.mxu0 0.0
    %2324 = vmatprep.subr.mxu0 0.0
    %2325 = vmatpush1.msra.mxu0 0.0
    %2326 = vmatprep.subr.mxu0 0.0
    %2327 = vmatpush1.msra.mxu0 0.0
    %2328 = vmatprep.subr.mxu0 0.0
    %2329 = vmatpush1.msra.mxu0 0.0
    %2330 = vmatprep.subr.mxu0 0.0
    %2331 = vmatpush1.msra.mxu0 0.0
    %2332 = vmatprep.subr.mxu0 0.0
    %2333 = vmatpush1.msra.mxu0 0.0
    %2334 = vmatprep.subr.mxu0 0.0
    %2335 = vmatpush1.msra.mxu0 0.0
    %2336 = vmatprep.subr.mxu0 0.0
    %2337 = vmatpush1.msra.mxu0 0.0
    %2338 = vmatprep.subr.mxu0 0.0
    %2339 = vmatpush1.msra.mxu0 0.0
    %2340 = vmatprep.subr.mxu0 0.0
    %2341 = vmatpush1.msra.mxu0 0.0
    %2342 = vmatprep.subr.mxu0 0.0
    %2343 = vmatpush1.msra.mxu0 0.0
    %2344 = vmatprep.subr.mxu0 0.0
    %2345 = vmatpush1.msra.mxu0 0.0
    %2346 = vmatprep.subr.mxu0 0.0
    %2347 = vmatpush1.msra.mxu0 0.0
    %2348 = vmatprep.subr.mxu0 0.0
    %2349 = vmatpush1.msra.mxu0 0.0
    %2350 = vmatprep.subr.mxu0 0.0
    %2351 = vmatpush1.msra.mxu0 0.0
    %2352 = vmatprep.subr.mxu0 0.0
    %2353 = vmatpush1.msra.mxu0 0.0
    %2354 = vmatprep.subr.mxu0 0.0
    %2355 = vmatpush1.msra.mxu0 0.0
    %2356 = vmatprep.subr.mxu0 0.0
    %2357 = vmatpush1.msra.mxu0 0.0
    %2358 = vmatprep.subr.mxu0 0.0
    %2359 = vmatpush1.msra.mxu0 0.0
    %2360 = vmatprep.subr.mxu0 0.0
    %2361 = vmatpush1.msra.mxu0 0.0
    %2362 = vmatprep.subr.mxu0 0.0
    %2363 = vmatpush1.msra.mxu0 0.0
    %2364 = vmatprep.subr.mxu0 0.0
    %2365 = vmatpush1.msra.mxu0 0.0
    %2366 = vmatprep.mubr.f32.mxu0 0.0
    %2367 = vmatmul.mubr.f32.gmra.mrb[0].mxu0 %v2291
    %v2368 = vpop.f32.mrb[0].mxu0
    %v2369 = vadd.f32 0.0, %v2368
    %v2370 = vpop.f32.mrb[0].mxu0
    %2371 = vmatprep.mubr.f32.mxu0 0.0
    %2372 = vmatmul.mubr.f32.gmra.mrb[0].mxu0 %v2294
    %v2373 = vpop.f32.mrb[0].mxu0
    %v2374 = vadd.f32 0.0, %v2373
    %v2375 = vpop.f32.mrb[0].mxu0
    %2376 = vmatprep.mubr.f32.mxu0 0.0
    %2377 = vmatmul.mubr.f32.gmra.mrb[0].mxu0 %v2297
    %v2378 = vpop.f32.mrb[0].mxu0
    %v2379 = vadd.f32 0.0, %v2378
    %v2380 = vpop.f32.mrb[0].mxu0
    %2381 = vmatprep.mubr.f32.mxu0 0.0
    %2382 = vmatmul.mubr.f32.gmra.mrb[0].mxu0 %v2300
    %v2383 = vpop.f32.mrb[0].mxu0
    %v2384 = vadd.f32 0.0, %v2383
    %v2385 = vpop.f32.mrb[0].mxu0
    %2386 = vdwg.mxu0
    %v2388 = vsel %vm136, %v2090, 0
    %v2391 = vsel %vm136, %v2091, 0
    %v2394 = vsel %vm136, %v2092, 0
    %v2397 = vsel %vm136, %v2093, 0
    %2399 = vmatprep.subr.mxu0 0.0
    %2400 = vmatpush1.msra.mxu0 %v2174
    %2401 = vmatprep.subr.mxu0 0.0
    %2402 = vmatpush1.msra.mxu0 %v2179
    %2403 = vmatprep.subr.mxu0 0.0
    %2404 = vmatpush1.msra.mxu0 %v2184
    %2405 = vmatprep.subr.mxu0 0.0
    %2406 = vmatpush1.msra.mxu0 %v2189
    %2407 = vmatprep.subr.mxu0 0.0
    %2408 = vmatpush1.msra.mxu0 0.0
    %2409 = vmatprep.subr.mxu0 0.0
    %2410 = vmatpush1.msra.mxu0 0.0
    %2411 = vmatprep.subr.mxu0 0.0
    %2412 = vmatpush1.msra.mxu0 0.0
    %2413 = vmatprep.subr.mxu0 0.0
    %2414 = vmatpush1.msra.mxu0 0.0
    %2415 = vmatprep.subr.mxu0 0.0
    %2416 = vmatpush1.msra.mxu0 0.0
    %2417 = vmatprep.subr.mxu0 0.0
    %2418 = vmatpush1.msra.mxu0 0.0
    %2419 = vmatprep.subr.mxu0 0.0
    %2420 = vmatpush1.msra.mxu0 0.0
    %2421 = vmatprep.subr.mxu0 0.0
    %2422 = vmatpush1.msra.mxu0 0.0
    %2423 = vmatprep.subr.mxu0 0.0
    %2424 = vmatpush1.msra.mxu0 0.0
    %2425 = vmatprep.subr.mxu0 0.0
    %2426 = vmatpush1.msra.mxu0 0.0
    %2427 = vmatprep.subr.mxu0 0.0
    %2428 = vmatpush1.msra.mxu0 0.0
    %2429 = vmatprep.subr.mxu0 0.0
    %2430 = vmatpush1.msra.mxu0 0.0
    %2431 = vmatprep.subr.mxu0 0.0
    %2432 = vmatpush1.msra.mxu0 0.0
    %2433 = vmatprep.subr.mxu0 0.0
    %2434 = vmatpush1.msra.mxu0 0.0
    %2435 = vmatprep.subr.mxu0 0.0
    %2436 = vmatpush1.msra.mxu0 0.0
    %2437 = vmatprep.subr.mxu0 0.0
    %2438 = vmatpush1.msra.mxu0 0.0
    %2439 = vmatprep.subr.mxu0 0.0
    %2440 = vmatpush1.msra.mxu0 0.0
    %2441 = vmatprep.subr.mxu0 0.0
    %2442 = vmatpush1.msra.mxu0 0.0
    %2443 = vmatprep.subr.mxu0 0.0
    %2444 = vmatpush1.msra.mxu0 0.0
    %2445 = vmatprep.subr.mxu0 0.0
    %2446 = vmatpush1.msra.mxu0 0.0
    %2447 = vmatprep.subr.mxu0 0.0
    %2448 = vmatpush1.msra.mxu0 0.0
    %2449 = vmatprep.subr.mxu0 0.0
    %2450 = vmatpush1.msra.mxu0 0.0
    %2451 = vmatprep.subr.mxu0 0.0
    %2452 = vmatpush1.msra.mxu0 0.0
    %2453 = vmatprep.subr.mxu0 0.0
    %2454 = vmatpush1.msra.mxu0 0.0
    %2455 = vmatprep.subr.mxu0 0.0
    %2456 = vmatpush1.msra.mxu0 0.0
    %2457 = vmatprep.subr.mxu0 0.0
    %2458 = vmatpush1.msra.mxu0 0.0
    %2459 = vmatprep.subr.mxu0 0.0
    %2460 = vmatpush1.msra.mxu0 0.0
    %2461 = vmatprep.subr.mxu0 0.0
    %2462 = vmatpush1.msra.mxu0 0.0
    %2463 = vmatprep.mubr.f32.mxu0 0.0
    %2464 = vmatmul.mubr.f32.gmra.mrb[0].mxu0 %v2388
    %v2465 = vpop.f32.mrb[0].mxu0
    %v2466 = vadd.f32 %v2369, %v2465
    %v2467 = vpop.f32.mrb[0].mxu0
    %2468 = vmatprep.mubr.f32.mxu0 0.0
    %2469 = vmatmul.mubr.f32.gmra.mrb[0].mxu0 %v2391
    %v2470 = vpop.f32.mrb[0].mxu0
    %v2471 = vadd.f32 %v2374, %v2470
    %v2472 = vpop.f32.mrb[0].mxu0
    %2473 = vmatprep.mubr.f32.mxu0 0.0
    %2474 = vmatmul.mubr.f32.gmra.mrb[0].mxu0 %v2394
    %v2475 = vpop.f32.mrb[0].mxu0
    %v2476 = vadd.f32 %v2379, %v2475
    %v2477 = vpop.f32.mrb[0].mxu0
    %2478 = vmatprep.mubr.f32.mxu0 0.0
    %2479 = vmatmul.mubr.f32.gmra.mrb[0].mxu0 %v2397
    %v2480 = vpop.f32.mrb[0].mxu0
    %v2481 = vadd.f32 %v2384, %v2480
    %v2482 = vpop.f32.mrb[0].mxu0
    %2483 = vdwg.mxu0
    %v2484 = vld [vmem:[%s4 + $0x10] sm:$0xff]
    %s2485 = scalar_lea.vmem %s1, 448
    %v2486 = vld [vmem:[%s2485] sm:$0xff]
    %v2487 = vld [vmem:[%s2485 + $0x8] sm:$0xff]
    %v2488 = vld [vmem:[%s2485 + $0x10] sm:$0xff]
    %v2489 = vld [vmem:[%s2485 + $0x18] sm:$0xff]
    %v2491 = vsel %vm136, %v2486, 0
    %v2494 = vsel %vm136, %v2487, 0
    %v2497 = vsel %vm136, %v2488, 0
    %v2500 = vsel %vm136, %v2489, 0
    %2502 = vmatprep.subr.mxu0 0.0
    %2503 = vmatpush1.msra.mxu0 %v2466
    %2504 = vmatprep.subr.mxu0 0.0
    %2505 = vmatpush1.msra.mxu0 %v2471
    %2506 = vmatprep.subr.mxu0 0.0
    %2507 = vmatpush1.msra.mxu0 %v2476
    %2508 = vmatprep.subr.mxu0 0.0
    %2509 = vmatpush1.msra.mxu0 %v2481
    %2510 = vmatprep.subr.mxu0 0.0
    %2511 = vmatpush1.msra.mxu0 0.0
    %2512 = vmatprep.subr.mxu0 0.0
    %2513 = vmatpush1.msra.mxu0 0.0
    %2514 = vmatprep.subr.mxu0 0.0
    %2515 = vmatpush1.msra.mxu0 0.0
    %2516 = vmatprep.subr.mxu0 0.0
    %2517 = vmatpush1.msra.mxu0 0.0
    %2518 = vmatprep.subr.mxu0 0.0
    %2519 = vmatpush1.msra.mxu0 0.0
    %2520 = vmatprep.subr.mxu0 0.0
    %2521 = vmatpush1.msra.mxu0 0.0
    %2522 = vmatprep.subr.mxu0 0.0
    %2523 = vmatpush1.msra.mxu0 0.0
    %2524 = vmatprep.subr.mxu0 0.0
    %2525 = vmatpush1.msra.mxu0 0.0
    %2526 = vmatprep.subr.mxu0 0.0
    %2527 = vmatpush1.msra.mxu0 0.0
    %2528 = vmatprep.subr.mxu0 0.0
    %2529 = vmatpush1.msra.mxu0 0.0
    %2530 = vmatprep.subr.mxu0 0.0
    %2531 = vmatpush1.msra.mxu0 0.0
    %2532 = vmatprep.subr.mxu0 0.0
    %2533 = vmatpush1.msra.mxu0 0.0
    %2534 = vmatprep.subr.mxu0 0.0
    %2535 = vmatpush1.msra.mxu0 0.0
    %2536 = vmatprep.subr.mxu0 0.0
    %2537 = vmatpush1.msra.mxu0 0.0
    %2538 = vmatprep.subr.mxu0 0.0
    %2539 = vmatpush1.msra.mxu0 0.0
    %2540 = vmatprep.subr.mxu0 0.0
    %2541 = vmatpush1.msra.mxu0 0.0
    %2542 = vmatprep.subr.mxu0 0.0
    %2543 = vmatpush1.msra.mxu0 0.0
    %2544 = vmatprep.subr.mxu0 0.0
    %2545 = vmatpush1.msra.mxu0 0.0
    %2546 = vmatprep.subr.mxu0 0.0
    %2547 = vmatpush1.msra.mxu0 0.0
    %2548 = vmatprep.subr.mxu0 0.0
    %2549 = vmatpush1.msra.mxu0 0.0
    %2550 = vmatprep.subr.mxu0 0.0
    %2551 = vmatpush1.msra.mxu0 0.0
    %2552 = vmatprep.subr.mxu0 0.0
    %2553 = vmatpush1.msra.mxu0 0.0
    %2554 = vmatprep.subr.mxu0 0.0
    %2555 = vmatpush1.msra.mxu0 0.0
    %2556 = vmatprep.subr.mxu0 0.0
    %2557 = vmatpush1.msra.mxu0 0.0
    %2558 = vmatprep.subr.mxu0 0.0
    %2559 = vmatpush1.msra.mxu0 0.0
    %2560 = vmatprep.subr.mxu0 0.0
    %2561 = vmatpush1.msra.mxu0 0.0
    %2562 = vmatprep.subr.mxu0 0.0
    %2563 = vmatpush1.msra.mxu0 0.0
    %2564 = vmatprep.subr.mxu0 0.0
    %2565 = vmatpush1.msra.mxu0 0.0
    %2566 = vmatprep.mubr.f32.mxu0 0.0
    %2567 = vmatmul.mubr.f32.gmra.mrb[0].mxu0 %v2491
    %v2568 = vpop.f32.mrb[0].mxu0
    %v2569 = vadd.f32 0.0, %v2568
    %v2570 = vpop.f32.mrb[0].mxu0
    %2571 = vmatprep.mubr.f32.mxu0 0.0
    %2572 = vmatmul.mubr.f32.gmra.mrb[0].mxu0 %v2494
    %v2573 = vpop.f32.mrb[0].mxu0
    %v2574 = vadd.f32 0.0, %v2573
    %v2575 = vpop.f32.mrb[0].mxu0
    %2576 = vmatprep.mubr.f32.mxu0 0.0
    %2577 = vmatmul.mubr.f32.gmra.mrb[0].mxu0 %v2497
    %v2578 = vpop.f32.mrb[0].mxu0
    %v2579 = vadd.f32 0.0, %v2578
    %v2580 = vpop.f32.mrb[0].mxu0
    %2581 = vmatprep.mubr.f32.mxu0 0.0
    %2582 = vmatmul.mubr.f32.gmra.mrb[0].mxu0 %v2500
    %v2583 = vpop.f32.mrb[0].mxu0
    %v2584 = vadd.f32 0.0, %v2583
    %v2585 = vpop.f32.mrb[0].mxu0
    %2586 = vdwg.mxu0
    %s2587 = scalar_lea.vmem %s1, 480
    %v2588 = vld [vmem:[%s2587] sm:$0xff]
    %v2589 = vld [vmem:[%s2587 + $0x8] sm:$0xff]
    %v2590 = vld [vmem:[%s2587 + $0x10] sm:$0xff]
    %v2591 = vld [vmem:[%s2587 + $0x18] sm:$0xff]
    %v2593 = vsel %vm136, %v2588, 0
    %v2596 = vsel %vm136, %v2589, 0
    %v2599 = vsel %vm136, %v2590, 0
    %v2602 = vsel %vm136, %v2591, 0
    %2604 = vmatprep.subr.mxu0 0.0
    %2605 = vmatpush1.msra.mxu0 %v2466
    %2606 = vmatprep.subr.mxu0 0.0
    %2607 = vmatpush1.msra.mxu0 %v2471
    %2608 = vmatprep.subr.mxu0 0.0
    %2609 = vmatpush1.msra.mxu0 %v2476
    %2610 = vmatprep.subr.mxu0 0.0
    %2611 = vmatpush1.msra.mxu0 %v2481
    %2612 = vmatprep.subr.mxu0 0.0
    %2613 = vmatpush1.msra.mxu0 0.0
    %2614 = vmatprep.subr.mxu0 0.0
    %2615 = vmatpush1.msra.mxu0 0.0
    %2616 = vmatprep.subr.mxu0 0.0
    %2617 = vmatpush1.msra.mxu0 0.0
    %2618 = vmatprep.subr.mxu0 0.0
    %2619 = vmatpush1.msra.mxu0 0.0
    %2620 = vmatprep.subr.mxu0 0.0
    %2621 = vmatpush1.msra.mxu0 0.0
    %2622 = vmatprep.subr.mxu0 0.0
    %2623 = vmatpush1.msra.mxu0 0.0
    %2624 = vmatprep.subr.mxu0 0.0
    %2625 = vmatpush1.msra.mxu0 0.0
    %2626 = vmatprep.subr.mxu0 0.0
    %2627 = vmatpush1.msra.mxu0 0.0
    %2628 = vmatprep.subr.mxu0 0.0
    %2629 = vmatpush1.msra.mxu0 0.0
    %2630 = vmatprep.subr.mxu0 0.0
    %2631 = vmatpush1.msra.mxu0 0.0
    %2632 = vmatprep.subr.mxu0 0.0
    %2633 = vmatpush1.msra.mxu0 0.0
    %2634 = vmatprep.subr.mxu0 0.0
    %2635 = vmatpush1.msra.mxu0 0.0
    %2636 = vmatprep.subr.mxu0 0.0
    %2637 = vmatpush1.msra.mxu0 0.0
    %2638 = vmatprep.subr.mxu0 0.0
    %2639 = vmatpush1.msra.mxu0 0.0
    %2640 = vmatprep.subr.mxu0 0.0
    %2641 = vmatpush1.msra.mxu0 0.0
    %2642 = vmatprep.subr.mxu0 0.0
    %2643 = vmatpush1.msra.mxu0 0.0
    %2644 = vmatprep.subr.mxu0 0.0
    %2645 = vmatpush1.msra.mxu0 0.0
    %2646 = vmatprep.subr.mxu0 0.0
    %2647 = vmatpush1.msra.mxu0 0.0
    %2648 = vmatprep.subr.mxu0 0.0
    %2649 = vmatpush1.msra.mxu0 0.0
    %2650 = vmatprep.subr.mxu0 0.0
    %2651 = vmatpush1.msra.mxu0 0.0
    %2652 = vmatprep.subr.mxu0 0.0
    %2653 = vmatpush1.msra.mxu0 0.0
    %2654 = vmatprep.subr.mxu0 0.0
    %2655 = vmatpush1.msra.mxu0 0.0
    %2656 = vmatprep.subr.mxu0 0.0
    %2657 = vmatpush1.msra.mxu0 0.0
    %2658 = vmatprep.subr.mxu0 0.0
    %2659 = vmatpush1.msra.mxu0 0.0
    %2660 = vmatprep.subr.mxu0 0.0
    %2661 = vmatpush1.msra.mxu0 0.0
    %2662 = vmatprep.subr.mxu0 0.0
    %2663 = vmatpush1.msra.mxu0 0.0
    %2664 = vmatprep.subr.mxu0 0.0
    %2665 = vmatpush1.msra.mxu0 0.0
    %2666 = vmatprep.subr.mxu0 0.0
    %2667 = vmatpush1.msra.mxu0 0.0
    %2668 = vmatprep.mubr.f32.mxu0 0.0
    %2669 = vmatmul.mubr.f32.gmra.mrb[0].mxu0 %v2593
    %v2670 = vpop.f32.mrb[0].mxu0
    %v2671 = vadd.f32 0.0, %v2670
    %v2672 = vpop.f32.mrb[0].mxu0
    %2673 = vmatprep.mubr.f32.mxu0 0.0
    %2674 = vmatmul.mubr.f32.gmra.mrb[0].mxu0 %v2596
    %v2675 = vpop.f32.mrb[0].mxu0
    %v2676 = vadd.f32 0.0, %v2675
    %v2677 = vpop.f32.mrb[0].mxu0
    %2678 = vmatprep.mubr.f32.mxu0 0.0
    %2679 = vmatmul.mubr.f32.gmra.mrb[0].mxu0 %v2599
    %v2680 = vpop.f32.mrb[0].mxu0
    %v2681 = vadd.f32 0.0, %v2680
    %v2682 = vpop.f32.mrb[0].mxu0
    %2683 = vmatprep.mubr.f32.mxu0 0.0
    %2684 = vmatmul.mubr.f32.gmra.mrb[0].mxu0 %v2602
    %v2685 = vpop.f32.mrb[0].mxu0
    %v2686 = vadd.f32 0.0, %v2685
    %v2687 = vpop.f32.mrb[0].mxu0
    %2688 = vdwg.mxu0
    %2690 = vrot.lane.b32.xlu0 %v2484, 96
    %v2691 = vpop.permute.xlu0 %2690
    %vm2693 = vcmask 64512
    %v2695 = vsel %vm2693, %v2671, 0
    %v2698 = vsel %vm2693, %v2676, 0
    %v2701 = vsel %vm2693, %v2681, 0
    %v2704 = vsel %vm2693, %v2686, 0
    %2706 = vmatprep.subr.mxu0 0.0
    %2707 = vmatpush1.msra.mxu0 %v2691
    %2708 = vmatprep.subr.mxu0 0.0
    %2709 = vmatpush1.msra.mxu0 0.0
    %2710 = vmatprep.subr.mxu0 0.0
    %2711 = vmatpush1.msra.mxu0 0.0
    %2712 = vmatprep.subr.mxu0 0.0
    %2713 = vmatpush1.msra.mxu0 0.0
    %2714 = vmatprep.subr.mxu0 0.0
    %2715 = vmatpush1.msra.mxu0 0.0
    %2716 = vmatprep.subr.mxu0 0.0
    %2717 = vmatpush1.msra.mxu0 0.0
    %2718 = vmatprep.subr.mxu0 0.0
    %2719 = vmatpush1.msra.mxu0 0.0
    %2720 = vmatprep.subr.mxu0 0.0
    %2721 = vmatpush1.msra.mxu0 0.0
    %2722 = vmatprep.subr.mxu0 0.0
    %2723 = vmatpush1.msra.mxu0 0.0
    %2724 = vmatprep.subr.mxu0 0.0
    %2725 = vmatpush1.msra.mxu0 0.0
    %2726 = vmatprep.subr.mxu0 0.0
    %2727 = vmatpush1.msra.mxu0 0.0
    %2728 = vmatprep.subr.mxu0 0.0
    %2729 = vmatpush1.msra.mxu0 0.0
    %2730 = vmatprep.subr.mxu0 0.0
    %2731 = vmatpush1.msra.mxu0 0.0
    %2732 = vmatprep.subr.mxu0 0.0
    %2733 = vmatpush1.msra.mxu0 0.0
    %2734 = vmatprep.subr.mxu0 0.0
    %2735 = vmatpush1.msra.mxu0 0.0
    %2736 = vmatprep.subr.mxu0 0.0
    %2737 = vmatpush1.msra.mxu0 0.0
    %2738 = vmatprep.subr.mxu0 0.0
    %2739 = vmatpush1.msra.mxu0 0.0
    %2740 = vmatprep.subr.mxu0 0.0
    %2741 = vmatpush1.msra.mxu0 0.0
    %2742 = vmatprep.subr.mxu0 0.0
    %2743 = vmatpush1.msra.mxu0 0.0
    %2744 = vmatprep.subr.mxu0 0.0
    %2745 = vmatpush1.msra.mxu0 0.0
    %2746 = vmatprep.subr.mxu0 0.0
    %2747 = vmatpush1.msra.mxu0 0.0
    %2748 = vmatprep.subr.mxu0 0.0
    %2749 = vmatpush1.msra.mxu0 0.0
    %2750 = vmatprep.subr.mxu0 0.0
    %2751 = vmatpush1.msra.mxu0 0.0
    %2752 = vmatprep.subr.mxu0 0.0
    %2753 = vmatpush1.msra.mxu0 0.0
    %2754 = vmatprep.subr.mxu0 0.0
    %2755 = vmatpush1.msra.mxu0 0.0
    %2756 = vmatprep.subr.mxu0 0.0
    %2757 = vmatpush1.msra.mxu0 0.0
    %2758 = vmatprep.subr.mxu0 0.0
    %2759 = vmatpush1.msra.mxu0 0.0
    %2760 = vmatprep.subr.mxu0 0.0
    %2761 = vmatpush1.msra.mxu0 0.0
    %2762 = vmatprep.subr.mxu0 0.0
    %2763 = vmatpush1.msra.mxu0 0.0
    %2764 = vmatprep.subr.mxu0 0.0
    %2765 = vmatpush1.msra.mxu0 0.0
    %2766 = vmatprep.subr.mxu0 0.0
    %2767 = vmatpush1.msra.mxu0 0.0
    %2768 = vmatprep.subr.mxu0 0.0
    %2769 = vmatpush1.msra.mxu0 0.0
    %2770 = vmatprep.mubr.f32.mxu0 0.0
    %2771 = vmatmul.mubr.f32.gmra.mrb[0].mxu0 %v2695
    %v2772 = vpop.f32.mrb[0].mxu0
    %v2773 = vadd.f32 0.0, %v2772
    %v2774 = vpop.f32.mrb[0].mxu0
    %2775 = vmatprep.mubr.f32.mxu0 0.0
    %2776 = vmatmul.mubr.f32.gmra.mrb[0].mxu0 %v2698
    %v2777 = vpop.f32.mrb[0].mxu0
    %v2778 = vadd.f32 0.0, %v2777
    %v2779 = vpop.f32.mrb[0].mxu0
    %2780 = vmatprep.mubr.f32.mxu0 0.0
    %2781 = vmatmul.mubr.f32.gmra.mrb[0].mxu0 %v2701
    %v2782 = vpop.f32.mrb[0].mxu0
    %v2783 = vadd.f32 0.0, %v2782
    %v2784 = vpop.f32.mrb[0].mxu0
    %2785 = vmatprep.mubr.f32.mxu0 0.0
    %2786 = vmatmul.mubr.f32.gmra.mrb[0].mxu0 %v2704
    %v2787 = vpop.f32.mrb[0].mxu0
    %v2788 = vadd.f32 0.0, %v2787
    %v2789 = vpop.f32.mrb[0].mxu0
    %2790 = vdwg.mxu0
    %2791 = vrot.lane.b32.xlu0 %v2484, 112
    %v2792 = vpop.permute.xlu0 %2791
    %v2795 = vsel %vm2693, %v2569, 0
    %v2798 = vsel %vm2693, %v2574, 0
    %v2801 = vsel %vm2693, %v2579, 0
    %v2804 = vsel %vm2693, %v2584, 0
    %2806 = vmatprep.subr.mxu0 0.0
    %2807 = vmatpush1.msra.mxu0 %v2792
    %2808 = vmatprep.subr.mxu0 0.0
    %2809 = vmatpush1.msra.mxu0 0.0
    %2810 = vmatprep.subr.mxu0 0.0
    %2811 = vmatpush1.msra.mxu0 0.0
    %2812 = vmatprep.subr.mxu0 0.0
    %2813 = vmatpush1.msra.mxu0 0.0
    %2814 = vmatprep.subr.mxu0 0.0
    %2815 = vmatpush1.msra.mxu0 0.0
    %2816 = vmatprep.subr.mxu0 0.0
    %2817 = vmatpush1.msra.mxu0 0.0
    %2818 = vmatprep.subr.mxu0 0.0
    %2819 = vmatpush1.msra.mxu0 0.0
    %2820 = vmatprep.subr.mxu0 0.0
    %2821 = vmatpush1.msra.mxu0 0.0
    %2822 = vmatprep.subr.mxu0 0.0
    %2823 = vmatpush1.msra.mxu0 0.0
    %2824 = vmatprep.subr.mxu0 0.0
    %2825 = vmatpush1.msra.mxu0 0.0
    %2826 = vmatprep.subr.mxu0 0.0
    %2827 = vmatpush1.msra.mxu0 0.0
    %2828 = vmatprep.subr.mxu0 0.0
    %2829 = vmatpush1.msra.mxu0 0.0
    %2830 = vmatprep.subr.mxu0 0.0
    %2831 = vmatpush1.msra.mxu0 0.0
    %2832 = vmatprep.subr.mxu0 0.0
    %2833 = vmatpush1.msra.mxu0 0.0
    %2834 = vmatprep.subr.mxu0 0.0
    %2835 = vmatpush1.msra.mxu0 0.0
    %2836 = vmatprep.subr.mxu0 0.0
    %2837 = vmatpush1.msra.mxu0 0.0
    %2838 = vmatprep.subr.mxu0 0.0
    %2839 = vmatpush1.msra.mxu0 0.0
    %2840 = vmatprep.subr.mxu0 0.0
    %2841 = vmatpush1.msra.mxu0 0.0
    %2842 = vmatprep.subr.mxu0 0.0
    %2843 = vmatpush1.msra.mxu0 0.0
    %2844 = vmatprep.subr.mxu0 0.0
    %2845 = vmatpush1.msra.mxu0 0.0
    %2846 = vmatprep.subr.mxu0 0.0
    %2847 = vmatpush1.msra.mxu0 0.0
    %2848 = vmatprep.subr.mxu0 0.0
    %2849 = vmatpush1.msra.mxu0 0.0
    %2850 = vmatprep.subr.mxu0 0.0
    %2851 = vmatpush1.msra.mxu0 0.0
    %2852 = vmatprep.subr.mxu0 0.0
    %2853 = vmatpush1.msra.mxu0 0.0
    %2854 = vmatprep.subr.mxu0 0.0
    %2855 = vmatpush1.msra.mxu0 0.0
    %2856 = vmatprep.subr.mxu0 0.0
    %2857 = vmatpush1.msra.mxu0 0.0
    %2858 = vmatprep.subr.mxu0 0.0
    %2859 = vmatpush1.msra.mxu0 0.0
    %2860 = vmatprep.subr.mxu0 0.0
    %2861 = vmatpush1.msra.mxu0 0.0
    %2862 = vmatprep.subr.mxu0 0.0
    %2863 = vmatpush1.msra.mxu0 0.0
    %2864 = vmatprep.subr.mxu0 0.0
    %2865 = vmatpush1.msra.mxu0 0.0
    %2866 = vmatprep.subr.mxu0 0.0
    %2867 = vmatpush1.msra.mxu0 0.0
    %2868 = vmatprep.subr.mxu0 0.0
    %2869 = vmatpush1.msra.mxu0 0.0
    %2870 = vmatprep.mubr.f32.mxu0 0.0
    %2871 = vmatmul.mubr.f32.gmra.mrb[0].mxu0 %v2795
    %v2872 = vpop.f32.mrb[0].mxu0
    %v2873 = vadd.f32 %v2773, %v2872
    %v2874 = vpop.f32.mrb[0].mxu0
    %2875 = vmatprep.mubr.f32.mxu0 0.0
    %2876 = vmatmul.mubr.f32.gmra.mrb[0].mxu0 %v2798
    %v2877 = vpop.f32.mrb[0].mxu0
    %v2878 = vadd.f32 %v2778, %v2877
    %v2879 = vpop.f32.mrb[0].mxu0
    %2880 = vmatprep.mubr.f32.mxu0 0.0
    %2881 = vmatmul.mubr.f32.gmra.mrb[0].mxu0 %v2801
    %v2882 = vpop.f32.mrb[0].mxu0
    %v2883 = vadd.f32 %v2783, %v2882
    %v2884 = vpop.f32.mrb[0].mxu0
    %2885 = vmatprep.mubr.f32.mxu0 0.0
    %2886 = vmatmul.mubr.f32.gmra.mrb[0].mxu0 %v2804
    %v2887 = vpop.f32.mrb[0].mxu0
    %v2888 = vadd.f32 %v2788, %v2887
    %v2889 = vpop.f32.mrb[0].mxu0
    %2890 = vdwg.mxu0
    %vm2891 = vcmp.gt.f32.partialorder %v2873, 0.0
    %vm2892 = vcmp.gt.f32.partialorder %v2878, 0.0
    %vm2893 = vcmp.gt.f32.partialorder %v2883, 0.0
    %vm2894 = vcmp.gt.f32.partialorder %v2888, 0.0
    %v2895 = vmul.f32 %v2873, 0.2
    %v2896 = vmul.f32 %v2878, 0.2
    %v2897 = vmul.f32 %v2883, 0.2
    %v2898 = vmul.f32 %v2888, 0.2
    %v2899 = vsel %vm2891, %v2873, %v2895
    %v2900 = vsel %vm2892, %v2878, %v2896
    %v2901 = vsel %vm2893, %v2883, %v2897
    %v2902 = vsel %vm2894, %v2888, %v2898
    %v2903 = vld [vmem:[%s3] sm:$0xff]
    %v2904 = vld [vmem:[%s3 + $0x20] sm:$0xff]
    %v2906 = vsel %vm2094, %v2899, 0
    %v2909 = vsel %vm2094, %v2900, 0
    %v2912 = vsel %vm2094, %v2901, 0
    %v2915 = vsel %vm2094, %v2902, 0
    %2917 = vmatprep.subr.mxu0 0.0
    %2918 = vmatpush1.msra.mxu0 %v2903
    %2919 = vmatprep.subr.mxu0 0.0
    %2920 = vmatpush1.msra.mxu0 %v2904
    %2921 = vmatprep.subr.mxu0 0.0
    %2922 = vmatpush1.msra.mxu0 0.0
    %2923 = vmatprep.subr.mxu0 0.0
    %2924 = vmatpush1.msra.mxu0 0.0
    %2925 = vmatprep.subr.mxu0 0.0
    %2926 = vmatpush1.msra.mxu0 0.0
    %2927 = vmatprep.subr.mxu0 0.0
    %2928 = vmatpush1.msra.mxu0 0.0
    %2929 = vmatprep.subr.mxu0 0.0
    %2930 = vmatpush1.msra.mxu0 0.0
    %2931 = vmatprep.subr.mxu0 0.0
    %2932 = vmatpush1.msra.mxu0 0.0
    %2933 = vmatprep.subr.mxu0 0.0
    %2934 = vmatpush1.msra.mxu0 0.0
    %2935 = vmatprep.subr.mxu0 0.0
    %2936 = vmatpush1.msra.mxu0 0.0
    %2937 = vmatprep.subr.mxu0 0.0
    %2938 = vmatpush1.msra.mxu0 0.0
    %2939 = vmatprep.subr.mxu0 0.0
    %2940 = vmatpush1.msra.mxu0 0.0
    %2941 = vmatprep.subr.mxu0 0.0
    %2942 = vmatpush1.msra.mxu0 0.0
    %2943 = vmatprep.subr.mxu0 0.0
    %2944 = vmatpush1.msra.mxu0 0.0
    %2945 = vmatprep.subr.mxu0 0.0
    %2946 = vmatpush1.msra.mxu0 0.0
    %2947 = vmatprep.subr.mxu0 0.0
    %2948 = vmatpush1.msra.mxu0 0.0
    %2949 = vmatprep.subr.mxu0 0.0
    %2950 = vmatpush1.msra.mxu0 0.0
    %2951 = vmatprep.subr.mxu0 0.0
    %2952 = vmatpush1.msra.mxu0 0.0
    %2953 = vmatprep.subr.mxu0 0.0
    %2954 = vmatpush1.msra.mxu0 0.0
    %2955 = vmatprep.subr.mxu0 0.0
    %2956 = vmatpush1.msra.mxu0 0.0
    %2957 = vmatprep.subr.mxu0 0.0
    %2958 = vmatpush1.msra.mxu0 0.0
    %2959 = vmatprep.subr.mxu0 0.0
    %2960 = vmatpush1.msra.mxu0 0.0
    %2961 = vmatprep.subr.mxu0 0.0
    %2962 = vmatpush1.msra.mxu0 0.0
    %2963 = vmatprep.subr.mxu0 0.0
    %2964 = vmatpush1.msra.mxu0 0.0
    %2965 = vmatprep.subr.mxu0 0.0
    %2966 = vmatpush1.msra.mxu0 0.0
    %2967 = vmatprep.subr.mxu0 0.0
    %2968 = vmatpush1.msra.mxu0 0.0
    %2969 = vmatprep.subr.mxu0 0.0
    %2970 = vmatpush1.msra.mxu0 0.0
    %2971 = vmatprep.subr.mxu0 0.0
    %2972 = vmatpush1.msra.mxu0 0.0
    %2973 = vmatprep.subr.mxu0 0.0
    %2974 = vmatpush1.msra.mxu0 0.0
    %2975 = vmatprep.subr.mxu0 0.0
    %2976 = vmatpush1.msra.mxu0 0.0
    %2977 = vmatprep.subr.mxu0 0.0
    %2978 = vmatpush1.msra.mxu0 0.0
    %2979 = vmatprep.subr.mxu0 0.0
    %2980 = vmatpush1.msra.mxu0 0.0
    %2981 = vmatprep.mubr.f32.mxu0 0.0
    %2982 = vmatmul.mubr.f32.gmra.mrb[0].mxu0 %v2906
    %v2983 = vpop.f32.mrb[0].mxu0
    %v2984 = vadd.f32 0.0, %v2983
    %v2985 = vpop.f32.mrb[0].mxu0
    %2986 = vmatprep.mubr.f32.mxu0 0.0
    %2987 = vmatmul.mubr.f32.gmra.mrb[0].mxu0 %v2909
    %v2988 = vpop.f32.mrb[0].mxu0
    %v2989 = vadd.f32 0.0, %v2988
    %v2990 = vpop.f32.mrb[0].mxu0
    %2991 = vmatprep.mubr.f32.mxu0 0.0
    %2992 = vmatmul.mubr.f32.gmra.mrb[0].mxu0 %v2912
    %v2993 = vpop.f32.mrb[0].mxu0
    %v2994 = vadd.f32 0.0, %v2993
    %v2995 = vpop.f32.mrb[0].mxu0
    %2996 = vmatprep.mubr.f32.mxu0 0.0
    %2997 = vmatmul.mubr.f32.gmra.mrb[0].mxu0 %v2915
    %v2998 = vpop.f32.mrb[0].mxu0
    %v2999 = vadd.f32 0.0, %v2998
    %v3000 = vpop.f32.mrb[0].mxu0
    %3001 = vdwg.mxu0
    %3002 = vrot.lane.b32.xlu0 %v2984, 32
    %v3003 = vpop.permute.xlu0 %3002
    %v3004 = vsel %vm1575, %v3003, %v2984
    %3005 = vrot.lane.b32.xlu0 %v2989, 32
    %v3006 = vpop.permute.xlu0 %3005
    %v3007 = vsel %vm1575, %v3006, %v2989
    %3008 = vrot.lane.b32.xlu0 %v2994, 32
    %v3009 = vpop.permute.xlu0 %3008
    %v3010 = vsel %vm1575, %v3009, %v2994
    %3011 = vrot.lane.b32.xlu0 %v2999, 32
    %v3012 = vpop.permute.xlu0 %3011
    %v3013 = vsel %vm1575, %v3012, %v2999
    %3014 = vrot.lane.b32.xlu0 %v3004, 32
    %v3015 = vpop.permute.xlu0 %3014
    %3016 = vrot.lane.b32.xlu0 %v3007, 32
    %v3017 = vpop.permute.xlu0 %3016
    %3018 = vrot.lane.b32.xlu0 %v3010, 32
    %v3019 = vpop.permute.xlu0 %3018
    %3020 = vrot.lane.b32.xlu0 %v3013, 32
    %v3021 = vpop.permute.xlu0 %3020
    %v3022 = vsel %vm1575, %v3015, %v2984
    %v3023 = vsel %vm1575, %v3017, %v2989
    %v3024 = vsel %vm1575, %v3019, %v2994
    %v3025 = vsel %vm1575, %v3021, %v2999
    %v3026 = vmul.f32 %v3022, %v1602
    %v3027 = vmul.f32 %v3023, %v1602
    %v3028 = vmul.f32 %v3024, %v1602
    %v3029 = vmul.f32 %v3025, %v1602
    %v3030 = vmul.f32 %v3022, %v1610
    %v3031 = vmul.f32 %v3023, %v1610
    %v3032 = vmul.f32 %v3024, %v1610
    %v3033 = vmul.f32 %v3025, %v1610
    %s3034 = scalar_lea.vmem %s1, 512
    %v3035 = vld [vmem:[%s3034] sm:$0xff]
    %v3036 = vld [vmem:[%s3034 + $0x8] sm:$0xff]
    %v3037 = vld [vmem:[%s3034 + $0x10] sm:$0xff]
    %v3038 = vld [vmem:[%s3034 + $0x18] sm:$0xff]
    %s3039 = scalar_lea.vmem %s1, 544
    %v3040 = vld [vmem:[%s3039] sm:$0xff]
    %v3041 = vld [vmem:[%s3039 + $0x8] sm:$0xff]
    %v3042 = vld [vmem:[%s3039 + $0x10] sm:$0xff]
    %v3043 = vld [vmem:[%s3039 + $0x18] sm:$0xff]
    %s3044 = scalar_lea.vmem %s1, 576
    %v3045 = vld [vmem:[%s3044] sm:$0xff]
    %v3046 = vld [vmem:[%s3044 + $0x8] sm:$0xff]
    %v3047 = vld [vmem:[%s3044 + $0x10] sm:$0xff]
    %v3048 = vld [vmem:[%s3044 + $0x18] sm:$0xff]
    %v3050 = vsel %vm136, %v3040, 0
    %v3053 = vsel %vm136, %v3041, 0
    %v3056 = vsel %vm136, %v3042, 0
    %v3059 = vsel %vm136, %v3043, 0
    %3061 = vmatprep.subr.mxu0 0.0
    %3062 = vmatpush1.msra.mxu0 %v2984
    %3063 = vmatprep.subr.mxu0 0.0
    %3064 = vmatpush1.msra.mxu0 %v2989
    %3065 = vmatprep.subr.mxu0 0.0
    %3066 = vmatpush1.msra.mxu0 %v2994
    %3067 = vmatprep.subr.mxu0 0.0
    %3068 = vmatpush1.msra.mxu0 %v2999
    %3069 = vmatprep.subr.mxu0 0.0
    %3070 = vmatpush1.msra.mxu0 0.0
    %3071 = vmatprep.subr.mxu0 0.0
    %3072 = vmatpush1.msra.mxu0 0.0
    %3073 = vmatprep.subr.mxu0 0.0
    %3074 = vmatpush1.msra.mxu0 0.0
    %3075 = vmatprep.subr.mxu0 0.0
    %3076 = vmatpush1.msra.mxu0 0.0
    %3077 = vmatprep.subr.mxu0 0.0
    %3078 = vmatpush1.msra.mxu0 0.0
    %3079 = vmatprep.subr.mxu0 0.0
    %3080 = vmatpush1.msra.mxu0 0.0
    %3081 = vmatprep.subr.mxu0 0.0
    %3082 = vmatpush1.msra.mxu0 0.0
    %3083 = vmatprep.subr.mxu0 0.0
    %3084 = vmatpush1.msra.mxu0 0.0
    %3085 = vmatprep.subr.mxu0 0.0
    %3086 = vmatpush1.msra.mxu0 0.0
    %3087 = vmatprep.subr.mxu0 0.0
    %3088 = vmatpush1.msra.mxu0 0.0
    %3089 = vmatprep.subr.mxu0 0.0
    %3090 = vmatpush1.msra.mxu0 0.0
    %3091 = vmatprep.subr.mxu0 0.0
    %3092 = vmatpush1.msra.mxu0 0.0
    %3093 = vmatprep.subr.mxu0 0.0
    %3094 = vmatpush1.msra.mxu0 0.0
    %3095 = vmatprep.subr.mxu0 0.0
    %3096 = vmatpush1.msra.mxu0 0.0
    %3097 = vmatprep.subr.mxu0 0.0
    %3098 = vmatpush1.msra.mxu0 0.0
    %3099 = vmatprep.subr.mxu0 0.0
    %3100 = vmatpush1.msra.mxu0 0.0
    %3101 = vmatprep.subr.mxu0 0.0
    %3102 = vmatpush1.msra.mxu0 0.0
    %3103 = vmatprep.subr.mxu0 0.0
    %3104 = vmatpush1.msra.mxu0 0.0
    %3105 = vmatprep.subr.mxu0 0.0
    %3106 = vmatpush1.msra.mxu0 0.0
    %3107 = vmatprep.subr.mxu0 0.0
    %3108 = vmatpush1.msra.mxu0 0.0
    %3109 = vmatprep.subr.mxu0 0.0
    %3110 = vmatpush1.msra.mxu0 0.0
    %3111 = vmatprep.subr.mxu0 0.0
    %3112 = vmatpush1.msra.mxu0 0.0
    %3113 = vmatprep.subr.mxu0 0.0
    %3114 = vmatpush1.msra.mxu0 0.0
    %3115 = vmatprep.subr.mxu0 0.0
    %3116 = vmatpush1.msra.mxu0 0.0
    %3117 = vmatprep.subr.mxu0 0.0
    %3118 = vmatpush1.msra.mxu0 0.0
    %3119 = vmatprep.subr.mxu0 0.0
    %3120 = vmatpush1.msra.mxu0 0.0
    %3121 = vmatprep.subr.mxu0 0.0
    %3122 = vmatpush1.msra.mxu0 0.0
    %3123 = vmatprep.subr.mxu0 0.0
    %3124 = vmatpush1.msra.mxu0 0.0
    %3125 = vmatprep.mubr.f32.mxu0 0.0
    %3126 = vmatmul.mubr.f32.gmra.mrb[0].mxu0 %v3050
    %v3127 = vpop.f32.mrb[0].mxu0
    %v3128 = vadd.f32 0.0, %v3127
    %v3129 = vpop.f32.mrb[0].mxu0
    %3130 = vmatprep.mubr.f32.mxu0 0.0
    %3131 = vmatmul.mubr.f32.gmra.mrb[0].mxu0 %v3053
    %v3132 = vpop.f32.mrb[0].mxu0
    %v3133 = vadd.f32 0.0, %v3132
    %v3134 = vpop.f32.mrb[0].mxu0
    %3135 = vmatprep.mubr.f32.mxu0 0.0
    %3136 = vmatmul.mubr.f32.gmra.mrb[0].mxu0 %v3056
    %v3137 = vpop.f32.mrb[0].mxu0
    %v3138 = vadd.f32 0.0, %v3137
    %v3139 = vpop.f32.mrb[0].mxu0
    %3140 = vmatprep.mubr.f32.mxu0 0.0
    %3141 = vmatmul.mubr.f32.gmra.mrb[0].mxu0 %v3059
    %v3142 = vpop.f32.mrb[0].mxu0
    %v3143 = vadd.f32 0.0, %v3142
    %v3144 = vpop.f32.mrb[0].mxu0
    %3145 = vdwg.mxu0
    %3150 = vrot.lane.b32.xlu0 %v3026, 97
    %v3151 = vpop.permute.xlu0 %3150
    %3152 = vrot.lane.b32.xlu0 %v3027, 97
    %v3153 = vpop.permute.xlu0 %3152
    %3154 = vrot.lane.b32.xlu0 %v3028, 97
    %v3155 = vpop.permute.xlu0 %3154
    %3156 = vrot.lane.b32.xlu0 %v3029, 97
    %v3157 = vpop.permute.xlu0 %3156
    %v3163 = vsel %vm136, %v3035, 0
    %v3166 = vsel %vm136, %v3036, 0
    %v3169 = vsel %vm136, %v3037, 0
    %v3172 = vsel %vm136, %v3038, 0
    %3174 = vmatprep.subr.mxu0 0.0
    %3175 = vmatpush1.msra.mxu0 %v3151
    %3176 = vmatprep.subr.mxu0 0.0
    %3177 = vmatpush1.msra.mxu0 %v3153
    %3178 = vmatprep.subr.mxu0 0.0
    %3179 = vmatpush1.msra.mxu0 %v3155
    %3180 = vmatprep.subr.mxu0 0.0
    %3181 = vmatpush1.msra.mxu0 %v3157
    %3182 = vmatprep.subr.mxu0 0.0
    %3183 = vmatpush1.msra.mxu0 0.0
    %3184 = vmatprep.subr.mxu0 0.0
    %3185 = vmatpush1.msra.mxu0 0.0
    %3186 = vmatprep.subr.mxu0 0.0
    %3187 = vmatpush1.msra.mxu0 0.0
    %3188 = vmatprep.subr.mxu0 0.0
    %3189 = vmatpush1.msra.mxu0 0.0
    %3190 = vmatprep.subr.mxu0 0.0
    %3191 = vmatpush1.msra.mxu0 0.0
    %3192 = vmatprep.subr.mxu0 0.0
    %3193 = vmatpush1.msra.mxu0 0.0
    %3194 = vmatprep.subr.mxu0 0.0
    %3195 = vmatpush1.msra.mxu0 0.0
    %3196 = vmatprep.subr.mxu0 0.0
    %3197 = vmatpush1.msra.mxu0 0.0
    %3198 = vmatprep.subr.mxu0 0.0
    %3199 = vmatpush1.msra.mxu0 0.0
    %3200 = vmatprep.subr.mxu0 0.0
    %3201 = vmatpush1.msra.mxu0 0.0
    %3202 = vmatprep.subr.mxu0 0.0
    %3203 = vmatpush1.msra.mxu0 0.0
    %3204 = vmatprep.subr.mxu0 0.0
    %3205 = vmatpush1.msra.mxu0 0.0
    %3206 = vmatprep.subr.mxu0 0.0
    %3207 = vmatpush1.msra.mxu0 0.0
    %3208 = vmatprep.subr.mxu0 0.0
    %3209 = vmatpush1.msra.mxu0 0.0
    %3210 = vmatprep.subr.mxu0 0.0
    %3211 = vmatpush1.msra.mxu0 0.0
    %3212 = vmatprep.subr.mxu0 0.0
    %3213 = vmatpush1.msra.mxu0 0.0
    %3214 = vmatprep.subr.mxu0 0.0
    %3215 = vmatpush1.msra.mxu0 0.0
    %3216 = vmatprep.subr.mxu0 0.0
    %3217 = vmatpush1.msra.mxu0 0.0
    %3218 = vmatprep.subr.mxu0 0.0
    %3219 = vmatpush1.msra.mxu0 0.0
    %3220 = vmatprep.subr.mxu0 0.0
    %3221 = vmatpush1.msra.mxu0 0.0
    %3222 = vmatprep.subr.mxu0 0.0
    %3223 = vmatpush1.msra.mxu0 0.0
    %3224 = vmatprep.subr.mxu0 0.0
    %3225 = vmatpush1.msra.mxu0 0.0
    %3226 = vmatprep.subr.mxu0 0.0
    %3227 = vmatpush1.msra.mxu0 0.0
    %3228 = vmatprep.subr.mxu0 0.0
    %3229 = vmatpush1.msra.mxu0 0.0
    %3230 = vmatprep.subr.mxu0 0.0
    %3231 = vmatpush1.msra.mxu0 0.0
    %3232 = vmatprep.subr.mxu0 0.0
    %3233 = vmatpush1.msra.mxu0 0.0
    %3234 = vmatprep.subr.mxu0 0.0
    %3235 = vmatpush1.msra.mxu0 0.0
    %3236 = vmatprep.subr.mxu0 0.0
    %3237 = vmatpush1.msra.mxu0 0.0
    %3238 = vmatprep.mubr.f32.mxu0 0.0
    %3239 = vmatmul.mubr.f32.gmra.mrb[0].mxu0 %v3163
    %v3240 = vpop.f32.mrb[0].mxu0
    %v3241 = vadd.f32 %v3128, %v3240
    %v3242 = vpop.f32.mrb[0].mxu0
    %3243 = vmatprep.mubr.f32.mxu0 0.0
    %3244 = vmatmul.mubr.f32.gmra.mrb[0].mxu0 %v3166
    %v3245 = vpop.f32.mrb[0].mxu0
    %v3246 = vadd.f32 %v3133, %v3245
    %v3247 = vpop.f32.mrb[0].mxu0
    %3248 = vmatprep.mubr.f32.mxu0 0.0
    %3249 = vmatmul.mubr.f32.gmra.mrb[0].mxu0 %v3169
    %v3250 = vpop.f32.mrb[0].mxu0
    %v3251 = vadd.f32 %v3138, %v3250
    %v3252 = vpop.f32.mrb[0].mxu0
    %3253 = vmatprep.mubr.f32.mxu0 0.0
    %3254 = vmatmul.mubr.f32.gmra.mrb[0].mxu0 %v3172
    %v3255 = vpop.f32.mrb[0].mxu0
    %v3256 = vadd.f32 %v3143, %v3255
    %v3257 = vpop.f32.mrb[0].mxu0
    %3258 = vdwg.mxu0
    %3263 = vrot.lane.b32.xlu0 %v3030, 127
    %v3264 = vpop.permute.xlu0 %3263
    %3265 = vrot.lane.b32.xlu0 %v3031, 127
    %v3266 = vpop.permute.xlu0 %3265
    %3267 = vrot.lane.b32.xlu0 %v3032, 127
    %v3268 = vpop.permute.xlu0 %3267
    %3269 = vrot.lane.b32.xlu0 %v3033, 127
    %v3270 = vpop.permute.xlu0 %3269
    %v3276 = vsel %vm136, %v3045, 0
    %v3279 = vsel %vm136, %v3046, 0
    %v3282 = vsel %vm136, %v3047, 0
    %v3285 = vsel %vm136, %v3048, 0
    %3287 = vmatprep.subr.mxu0 0.0
    %3288 = vmatpush1.msra.mxu0 %v3264
    %3289 = vmatprep.subr.mxu0 0.0
    %3290 = vmatpush1.msra.mxu0 %v3266
    %3291 = vmatprep.subr.mxu0 0.0
    %3292 = vmatpush1.msra.mxu0 %v3268
    %3293 = vmatprep.subr.mxu0 0.0
    %3294 = vmatpush1.msra.mxu0 %v3270
    %3295 = vmatprep.subr.mxu0 0.0
    %3296 = vmatpush1.msra.mxu0 0.0
    %3297 = vmatprep.subr.mxu0 0.0
    %3298 = vmatpush1.msra.mxu0 0.0
    %3299 = vmatprep.subr.mxu0 0.0
    %3300 = vmatpush1.msra.mxu0 0.0
    %3301 = vmatprep.subr.mxu0 0.0
    %3302 = vmatpush1.msra.mxu0 0.0
    %3303 = vmatprep.subr.mxu0 0.0
    %3304 = vmatpush1.msra.mxu0 0.0
    %3305 = vmatprep.subr.mxu0 0.0
    %3306 = vmatpush1.msra.mxu0 0.0
    %3307 = vmatprep.subr.mxu0 0.0
    %3308 = vmatpush1.msra.mxu0 0.0
    %3309 = vmatprep.subr.mxu0 0.0
    %3310 = vmatpush1.msra.mxu0 0.0
    %3311 = vmatprep.subr.mxu0 0.0
    %3312 = vmatpush1.msra.mxu0 0.0
    %3313 = vmatprep.subr.mxu0 0.0
    %3314 = vmatpush1.msra.mxu0 0.0
    %3315 = vmatprep.subr.mxu0 0.0
    %3316 = vmatpush1.msra.mxu0 0.0
    %3317 = vmatprep.subr.mxu0 0.0
    %3318 = vmatpush1.msra.mxu0 0.0
    %3319 = vmatprep.subr.mxu0 0.0
    %3320 = vmatpush1.msra.mxu0 0.0
    %3321 = vmatprep.subr.mxu0 0.0
    %3322 = vmatpush1.msra.mxu0 0.0
    %3323 = vmatprep.subr.mxu0 0.0
    %3324 = vmatpush1.msra.mxu0 0.0
    %3325 = vmatprep.subr.mxu0 0.0
    %3326 = vmatpush1.msra.mxu0 0.0
    %3327 = vmatprep.subr.mxu0 0.0
    %3328 = vmatpush1.msra.mxu0 0.0
    %3329 = vmatprep.subr.mxu0 0.0
    %3330 = vmatpush1.msra.mxu0 0.0
    %3331 = vmatprep.subr.mxu0 0.0
    %3332 = vmatpush1.msra.mxu0 0.0
    %3333 = vmatprep.subr.mxu0 0.0
    %3334 = vmatpush1.msra.mxu0 0.0
    %3335 = vmatprep.subr.mxu0 0.0
    %3336 = vmatpush1.msra.mxu0 0.0
    %3337 = vmatprep.subr.mxu0 0.0
    %3338 = vmatpush1.msra.mxu0 0.0
    %3339 = vmatprep.subr.mxu0 0.0
    %3340 = vmatpush1.msra.mxu0 0.0
    %3341 = vmatprep.subr.mxu0 0.0
    %3342 = vmatpush1.msra.mxu0 0.0
    %3343 = vmatprep.subr.mxu0 0.0
    %3344 = vmatpush1.msra.mxu0 0.0
    %3345 = vmatprep.subr.mxu0 0.0
    %3346 = vmatpush1.msra.mxu0 0.0
    %3347 = vmatprep.subr.mxu0 0.0
    %3348 = vmatpush1.msra.mxu0 0.0
    %3349 = vmatprep.subr.mxu0 0.0
    %3350 = vmatpush1.msra.mxu0 0.0
    %3351 = vmatprep.mubr.f32.mxu0 0.0
    %3352 = vmatmul.mubr.f32.gmra.mrb[0].mxu0 %v3276
    %v3353 = vpop.f32.mrb[0].mxu0
    %v3354 = vadd.f32 0.0, %v3353
    %v3355 = vpop.f32.mrb[0].mxu0
    %3356 = vmatprep.mubr.f32.mxu0 0.0
    %3357 = vmatmul.mubr.f32.gmra.mrb[0].mxu0 %v3279
    %v3358 = vpop.f32.mrb[0].mxu0
    %v3359 = vadd.f32 0.0, %v3358
    %v3360 = vpop.f32.mrb[0].mxu0
    %3361 = vmatprep.mubr.f32.mxu0 0.0
    %3362 = vmatmul.mubr.f32.gmra.mrb[0].mxu0 %v3282
    %v3363 = vpop.f32.mrb[0].mxu0
    %v3364 = vadd.f32 0.0, %v3363
    %v3365 = vpop.f32.mrb[0].mxu0
    %3366 = vmatprep.mubr.f32.mxu0 0.0
    %3367 = vmatmul.mubr.f32.gmra.mrb[0].mxu0 %v3285
    %v3368 = vpop.f32.mrb[0].mxu0
    %v3369 = vadd.f32 0.0, %v3368
    %v3370 = vpop.f32.mrb[0].mxu0
    %3371 = vdwg.mxu0
    %v3372 = vadd.f32 %v3241, %v3354
    %v3373 = vadd.f32 %v3246, %v3359
    %v3374 = vadd.f32 %v3251, %v3364
    %v3375 = vadd.f32 %v3256, %v3369
    %vm3376 = vcmp.gt.f32.partialorder %v3372, 0.0
    %vm3377 = vcmp.gt.f32.partialorder %v3373, 0.0
    %vm3378 = vcmp.gt.f32.partialorder %v3374, 0.0
    %vm3379 = vcmp.gt.f32.partialorder %v3375, 0.0
    %v3380 = vmul.f32 %v3372, 0.2
    %v3381 = vmul.f32 %v3373, 0.2
    %v3382 = vmul.f32 %v3374, 0.2
    %v3383 = vmul.f32 %v3375, 0.2
    %v3384 = vsel %vm3376, %v3372, %v3380
    %v3385 = vsel %vm3377, %v3373, %v3381
    %v3386 = vsel %vm3378, %v3374, %v3382
    %v3387 = vsel %vm3379, %v3375, %v3383
    %v3388 = vld [vmem:[%s3] sm:$0xff]
    %v3389 = vld [vmem:[%s3 + $0x20] sm:$0xff]
    %v3390 = vld [vmem:[%s3 + $0x40] sm:$0xff]
    %v3391 = vld [vmem:[%s3 + $0x60] sm:$0xff]
    %3396 = vrot.lane.b32.xlu0 %v3388, 96
    %v3397 = vpop.permute.xlu0 %3396
    %3398 = vrot.lane.b32.xlu0 %v3389, 96
    %v3399 = vpop.permute.xlu0 %3398
    %3400 = vrot.lane.b32.xlu0 %v3390, 96
    %v3401 = vpop.permute.xlu0 %3400
    %3402 = vrot.lane.b32.xlu0 %v3391, 96
    %v3403 = vpop.permute.xlu0 %3402
    %v3409 = vsel %vm136, %v3384, 0
    %v3412 = vsel %vm136, %v3385, 0
    %v3415 = vsel %vm136, %v3386, 0
    %v3418 = vsel %vm136, %v3387, 0
    %3420 = vmatprep.subr.mxu0 0.0
    %3421 = vmatpush1.msra.mxu0 %v3397
    %3422 = vmatprep.subr.mxu0 0.0
    %3423 = vmatpush1.msra.mxu0 %v3399
    %3424 = vmatprep.subr.mxu0 0.0
    %3425 = vmatpush1.msra.mxu0 %v3401
    %3426 = vmatprep.subr.mxu0 0.0
    %3427 = vmatpush1.msra.mxu0 %v3403
    %3428 = vmatprep.subr.mxu0 0.0
    %3429 = vmatpush1.msra.mxu0 0.0
    %3430 = vmatprep.subr.mxu0 0.0
    %3431 = vmatpush1.msra.mxu0 0.0
    %3432 = vmatprep.subr.mxu0 0.0
    %3433 = vmatpush1.msra.mxu0 0.0
    %3434 = vmatprep.subr.mxu0 0.0
    %3435 = vmatpush1.msra.mxu0 0.0
    %3436 = vmatprep.subr.mxu0 0.0
    %3437 = vmatpush1.msra.mxu0 0.0
    %3438 = vmatprep.subr.mxu0 0.0
    %3439 = vmatpush1.msra.mxu0 0.0
    %3440 = vmatprep.subr.mxu0 0.0
    %3441 = vmatpush1.msra.mxu0 0.0
    %3442 = vmatprep.subr.mxu0 0.0
    %3443 = vmatpush1.msra.mxu0 0.0
    %3444 = vmatprep.subr.mxu0 0.0
    %3445 = vmatpush1.msra.mxu0 0.0
    %3446 = vmatprep.subr.mxu0 0.0
    %3447 = vmatpush1.msra.mxu0 0.0
    %3448 = vmatprep.subr.mxu0 0.0
    %3449 = vmatpush1.msra.mxu0 0.0
    %3450 = vmatprep.subr.mxu0 0.0
    %3451 = vmatpush1.msra.mxu0 0.0
    %3452 = vmatprep.subr.mxu0 0.0
    %3453 = vmatpush1.msra.mxu0 0.0
    %3454 = vmatprep.subr.mxu0 0.0
    %3455 = vmatpush1.msra.mxu0 0.0
    %3456 = vmatprep.subr.mxu0 0.0
    %3457 = vmatpush1.msra.mxu0 0.0
    %3458 = vmatprep.subr.mxu0 0.0
    %3459 = vmatpush1.msra.mxu0 0.0
    %3460 = vmatprep.subr.mxu0 0.0
    %3461 = vmatpush1.msra.mxu0 0.0
    %3462 = vmatprep.subr.mxu0 0.0
    %3463 = vmatpush1.msra.mxu0 0.0
    %3464 = vmatprep.subr.mxu0 0.0
    %3465 = vmatpush1.msra.mxu0 0.0
    %3466 = vmatprep.subr.mxu0 0.0
    %3467 = vmatpush1.msra.mxu0 0.0
    %3468 = vmatprep.subr.mxu0 0.0
    %3469 = vmatpush1.msra.mxu0 0.0
    %3470 = vmatprep.subr.mxu0 0.0
    %3471 = vmatpush1.msra.mxu0 0.0
    %3472 = vmatprep.subr.mxu0 0.0
    %3473 = vmatpush1.msra.mxu0 0.0
    %3474 = vmatprep.subr.mxu0 0.0
    %3475 = vmatpush1.msra.mxu0 0.0
    %3476 = vmatprep.subr.mxu0 0.0
    %3477 = vmatpush1.msra.mxu0 0.0
    %3478 = vmatprep.subr.mxu0 0.0
    %3479 = vmatpush1.msra.mxu0 0.0
    %3480 = vmatprep.subr.mxu0 0.0
    %3481 = vmatpush1.msra.mxu0 0.0
    %3482 = vmatprep.subr.mxu0 0.0
    %3483 = vmatpush1.msra.mxu0 0.0
    %3484 = vmatprep.mubr.f32.mxu0 0.0
    %3485 = vmatmul.mubr.f32.gmra.mrb[0].mxu0 %v3409
    %v3486 = vpop.f32.mrb[0].mxu0
    %v3487 = vadd.f32 0.0, %v3486
    %v3488 = vpop.f32.mrb[0].mxu0
    %3489 = vmatprep.mubr.f32.mxu0 0.0
    %3490 = vmatmul.mubr.f32.gmra.mrb[0].mxu0 %v3412
    %v3491 = vpop.f32.mrb[0].mxu0
    %v3492 = vadd.f32 0.0, %v3491
    %v3493 = vpop.f32.mrb[0].mxu0
    %3494 = vmatprep.mubr.f32.mxu0 0.0
    %3495 = vmatmul.mubr.f32.gmra.mrb[0].mxu0 %v3415
    %v3496 = vpop.f32.mrb[0].mxu0
    %v3497 = vadd.f32 0.0, %v3496
    %v3498 = vpop.f32.mrb[0].mxu0
    %3499 = vmatprep.mubr.f32.mxu0 0.0
    %3500 = vmatmul.mubr.f32.gmra.mrb[0].mxu0 %v3418
    %v3501 = vpop.f32.mrb[0].mxu0
    %v3502 = vadd.f32 0.0, %v3501
    %v3503 = vpop.f32.mrb[0].mxu0
    %3504 = vdwg.mxu0
    %3505 = vrot.lane.b32.xlu0 %v3487, 64
    %v3506 = vpop.permute.xlu0 %3505
    %v3507 = vsel %vm1040, %v3506, %v3487
    %3508 = vrot.lane.b32.xlu0 %v3492, 64
    %v3509 = vpop.permute.xlu0 %3508
    %v3510 = vsel %vm1040, %v3509, %v3492
    %3511 = vrot.lane.b32.xlu0 %v3497, 64
    %v3512 = vpop.permute.xlu0 %3511
    %v3513 = vsel %vm1040, %v3512, %v3497
    %3514 = vrot.lane.b32.xlu0 %v3502, 64
    %v3515 = vpop.permute.xlu0 %3514
    %v3516 = vsel %vm1040, %v3515, %v3502
    %3517 = vrot.lane.b32.xlu0 %v3507, 64
    %v3518 = vpop.permute.xlu0 %3517
    %3519 = vrot.lane.b32.xlu0 %v3510, 64
    %v3520 = vpop.permute.xlu0 %3519
    %3521 = vrot.lane.b32.xlu0 %v3513, 64
    %v3522 = vpop.permute.xlu0 %3521
    %3523 = vrot.lane.b32.xlu0 %v3516, 64
    %v3524 = vpop.permute.xlu0 %3523
    %v3525 = vsel %vm1040, %v3518, %v3487
    %v3526 = vsel %vm1040, %v3520, %v3492
    %v3527 = vsel %vm1040, %v3522, %v3497
    %v3528 = vsel %vm1040, %v3524, %v3502
    %v3529 = vmul.f32 %v3525, %v1067
    %v3530 = vmul.f32 %v3526, %v1067
    %v3531 = vmul.f32 %v3527, %v1067
    %v3532 = vmul.f32 %v3528, %v1067
    %v3533 = vmul.f32 %v3525, %v1075
    %v3534 = vmul.f32 %v3526, %v1075
    %v3535 = vmul.f32 %v3527, %v1075
    %v3536 = vmul.f32 %v3528, %v1075
    %s3537 = scalar_lea.vmem %s1, 608
    %v3538 = vld [vmem:[%s3537] sm:$0xff]
    %v3539 = vld [vmem:[%s3537 + $0x8] sm:$0xff]
    %v3540 = vld [vmem:[%s3537 + $0x10] sm:$0xff]
    %v3541 = vld [vmem:[%s3537 + $0x18] sm:$0xff]
    %s3542 = scalar_lea.vmem %s1, 640
    %v3543 = vld [vmem:[%s3542] sm:$0xff]
    %v3544 = vld [vmem:[%s3542 + $0x8] sm:$0xff]
    %v3545 = vld [vmem:[%s3542 + $0x10] sm:$0xff]
    %v3546 = vld [vmem:[%s3542 + $0x18] sm:$0xff]
    %s3547 = scalar_lea.vmem %s1, 672
    %v3548 = vld [vmem:[%s3547] sm:$0xff]
    %v3549 = vld [vmem:[%s3547 + $0x8] sm:$0xff]
    %v3550 = vld [vmem:[%s3547 + $0x10] sm:$0xff]
    %v3551 = vld [vmem:[%s3547 + $0x18] sm:$0xff]
    %v3553 = vsel %vm136, %v3543, 0
    %v3556 = vsel %vm136, %v3544, 0
    %v3559 = vsel %vm136, %v3545, 0
    %v3562 = vsel %vm136, %v3546, 0
    %3564 = vmatprep.subr.mxu0 0.0
    %3565 = vmatpush1.msra.mxu0 %v3487
    %3566 = vmatprep.subr.mxu0 0.0
    %3567 = vmatpush1.msra.mxu0 %v3492
    %3568 = vmatprep.subr.mxu0 0.0
    %3569 = vmatpush1.msra.mxu0 %v3497
    %3570 = vmatprep.subr.mxu0 0.0
    %3571 = vmatpush1.msra.mxu0 %v3502
    %3572 = vmatprep.subr.mxu0 0.0
    %3573 = vmatpush1.msra.mxu0 0.0
    %3574 = vmatprep.subr.mxu0 0.0
    %3575 = vmatpush1.msra.mxu0 0.0
    %3576 = vmatprep.subr.mxu0 0.0
    %3577 = vmatpush1.msra.mxu0 0.0
    %3578 = vmatprep.subr.mxu0 0.0
    %3579 = vmatpush1.msra.mxu0 0.0
    %3580 = vmatprep.subr.mxu0 0.0
    %3581 = vmatpush1.msra.mxu0 0.0
    %3582 = vmatprep.subr.mxu0 0.0
    %3583 = vmatpush1.msra.mxu0 0.0
    %3584 = vmatprep.subr.mxu0 0.0
    %3585 = vmatpush1.msra.mxu0 0.0
    %3586 = vmatprep.subr.mxu0 0.0
    %3587 = vmatpush1.msra.mxu0 0.0
    %3588 = vmatprep.subr.mxu0 0.0
    %3589 = vmatpush1.msra.mxu0 0.0
    %3590 = vmatprep.subr.mxu0 0.0
    %3591 = vmatpush1.msra.mxu0 0.0
    %3592 = vmatprep.subr.mxu0 0.0
    %3593 = vmatpush1.msra.mxu0 0.0
    %3594 = vmatprep.subr.mxu0 0.0
    %3595 = vmatpush1.msra.mxu0 0.0
    %3596 = vmatprep.subr.mxu0 0.0
    %3597 = vmatpush1.msra.mxu0 0.0
    %3598 = vmatprep.subr.mxu0 0.0
    %3599 = vmatpush1.msra.mxu0 0.0
    %3600 = vmatprep.subr.mxu0 0.0
    %3601 = vmatpush1.msra.mxu0 0.0
    %3602 = vmatprep.subr.mxu0 0.0
    %3603 = vmatpush1.msra.mxu0 0.0
    %3604 = vmatprep.subr.mxu0 0.0
    %3605 = vmatpush1.msra.mxu0 0.0
    %3606 = vmatprep.subr.mxu0 0.0
    %3607 = vmatpush1.msra.mxu0 0.0
    %3608 = vmatprep.subr.mxu0 0.0
    %3609 = vmatpush1.msra.mxu0 0.0
    %3610 = vmatprep.subr.mxu0 0.0
    %3611 = vmatpush1.msra.mxu0 0.0
    %3612 = vmatprep.subr.mxu0 0.0
    %3613 = vmatpush1.msra.mxu0 0.0
    %3614 = vmatprep.subr.mxu0 0.0
    %3615 = vmatpush1.msra.mxu0 0.0
    %3616 = vmatprep.subr.mxu0 0.0
    %3617 = vmatpush1.msra.mxu0 0.0
    %3618 = vmatprep.subr.mxu0 0.0
    %3619 = vmatpush1.msra.mxu0 0.0
    %3620 = vmatprep.subr.mxu0 0.0
    %3621 = vmatpush1.msra.mxu0 0.0
    %3622 = vmatprep.subr.mxu0 0.0
    %3623 = vmatpush1.msra.mxu0 0.0
    %3624 = vmatprep.subr.mxu0 0.0
    %3625 = vmatpush1.msra.mxu0 0.0
    %3626 = vmatprep.subr.mxu0 0.0
    %3627 = vmatpush1.msra.mxu0 0.0
    %3628 = vmatprep.mubr.f32.mxu0 0.0
    %3629 = vmatmul.mubr.f32.gmra.mrb[0].mxu0 %v3553
    %v3630 = vpop.f32.mrb[0].mxu0
    %v3631 = vadd.f32 0.0, %v3630
    %v3632 = vpop.f32.mrb[0].mxu0
    %3633 = vmatprep.mubr.f32.mxu0 0.0
    %3634 = vmatmul.mubr.f32.gmra.mrb[0].mxu0 %v3556
    %v3635 = vpop.f32.mrb[0].mxu0
    %v3636 = vadd.f32 0.0, %v3635
    %v3637 = vpop.f32.mrb[0].mxu0
    %3638 = vmatprep.mubr.f32.mxu0 0.0
    %3639 = vmatmul.mubr.f32.gmra.mrb[0].mxu0 %v3559
    %v3640 = vpop.f32.mrb[0].mxu0
    %v3641 = vadd.f32 0.0, %v3640
    %v3642 = vpop.f32.mrb[0].mxu0
    %3643 = vmatprep.mubr.f32.mxu0 0.0
    %3644 = vmatmul.mubr.f32.gmra.mrb[0].mxu0 %v3562
    %v3645 = vpop.f32.mrb[0].mxu0
    %v3646 = vadd.f32 0.0, %v3645
    %v3647 = vpop.f32.mrb[0].mxu0
    %3648 = vdwg.mxu0
    %3653 = vrot.lane.b32.xlu0 %v3529, 65
    %v3654 = vpop.permute.xlu0 %3653
    %3655 = vrot.lane.b32.xlu0 %v3530, 65
    %v3656 = vpop.permute.xlu0 %3655
    %3657 = vrot.lane.b32.xlu0 %v3531, 65
    %v3658 = vpop.permute.xlu0 %3657
    %3659 = vrot.lane.b32.xlu0 %v3532, 65
    %v3660 = vpop.permute.xlu0 %3659
    %v3666 = vsel %vm136, %v3538, 0
    %v3669 = vsel %vm136, %v3539, 0
    %v3672 = vsel %vm136, %v3540, 0
    %v3675 = vsel %vm136, %v3541, 0
    %3677 = vmatprep.subr.mxu0 0.0
    %3678 = vmatpush1.msra.mxu0 %v3654
    %3679 = vmatprep.subr.mxu0 0.0
    %3680 = vmatpush1.msra.mxu0 %v3656
    %3681 = vmatprep.subr.mxu0 0.0
    %3682 = vmatpush1.msra.mxu0 %v3658
    %3683 = vmatprep.subr.mxu0 0.0
    %3684 = vmatpush1.msra.mxu0 %v3660
    %3685 = vmatprep.subr.mxu0 0.0
    %3686 = vmatpush1.msra.mxu0 0.0
    %3687 = vmatprep.subr.mxu0 0.0
    %3688 = vmatpush1.msra.mxu0 0.0
    %3689 = vmatprep.subr.mxu0 0.0
    %3690 = vmatpush1.msra.mxu0 0.0
    %3691 = vmatprep.subr.mxu0 0.0
    %3692 = vmatpush1.msra.mxu0 0.0
    %3693 = vmatprep.subr.mxu0 0.0
    %3694 = vmatpush1.msra.mxu0 0.0
    %3695 = vmatprep.subr.mxu0 0.0
    %3696 = vmatpush1.msra.mxu0 0.0
    %3697 = vmatprep.subr.mxu0 0.0
    %3698 = vmatpush1.msra.mxu0 0.0
    %3699 = vmatprep.subr.mxu0 0.0
    %3700 = vmatpush1.msra.mxu0 0.0
    %3701 = vmatprep.subr.mxu0 0.0
    %3702 = vmatpush1.msra.mxu0 0.0
    %3703 = vmatprep.subr.mxu0 0.0
    %3704 = vmatpush1.msra.mxu0 0.0
    %3705 = vmatprep.subr.mxu0 0.0
    %3706 = vmatpush1.msra.mxu0 0.0
    %3707 = vmatprep.subr.mxu0 0.0
    %3708 = vmatpush1.msra.mxu0 0.0
    %3709 = vmatprep.subr.mxu0 0.0
    %3710 = vmatpush1.msra.mxu0 0.0
    %3711 = vmatprep.subr.mxu0 0.0
    %3712 = vmatpush1.msra.mxu0 0.0
    %3713 = vmatprep.subr.mxu0 0.0
    %3714 = vmatpush1.msra.mxu0 0.0
    %3715 = vmatprep.subr.mxu0 0.0
    %3716 = vmatpush1.msra.mxu0 0.0
    %3717 = vmatprep.subr.mxu0 0.0
    %3718 = vmatpush1.msra.mxu0 0.0
    %3719 = vmatprep.subr.mxu0 0.0
    %3720 = vmatpush1.msra.mxu0 0.0
    %3721 = vmatprep.subr.mxu0 0.0
    %3722 = vmatpush1.msra.mxu0 0.0
    %3723 = vmatprep.subr.mxu0 0.0
    %3724 = vmatpush1.msra.mxu0 0.0
    %3725 = vmatprep.subr.mxu0 0.0
    %3726 = vmatpush1.msra.mxu0 0.0
    %3727 = vmatprep.subr.mxu0 0.0
    %3728 = vmatpush1.msra.mxu0 0.0
    %3729 = vmatprep.subr.mxu0 0.0
    %3730 = vmatpush1.msra.mxu0 0.0
    %3731 = vmatprep.subr.mxu0 0.0
    %3732 = vmatpush1.msra.mxu0 0.0
    %3733 = vmatprep.subr.mxu0 0.0
    %3734 = vmatpush1.msra.mxu0 0.0
    %3735 = vmatprep.subr.mxu0 0.0
    %3736 = vmatpush1.msra.mxu0 0.0
    %3737 = vmatprep.subr.mxu0 0.0
    %3738 = vmatpush1.msra.mxu0 0.0
    %3739 = vmatprep.subr.mxu0 0.0
    %3740 = vmatpush1.msra.mxu0 0.0
    %3741 = vmatprep.mubr.f32.mxu0 0.0
    %3742 = vmatmul.mubr.f32.gmra.mrb[0].mxu0 %v3666
    %v3743 = vpop.f32.mrb[0].mxu0
    %v3744 = vadd.f32 %v3631, %v3743
    %v3745 = vpop.f32.mrb[0].mxu0
    %3746 = vmatprep.mubr.f32.mxu0 0.0
    %3747 = vmatmul.mubr.f32.gmra.mrb[0].mxu0 %v3669
    %v3748 = vpop.f32.mrb[0].mxu0
    %v3749 = vadd.f32 %v3636, %v3748
    %v3750 = vpop.f32.mrb[0].mxu0
    %3751 = vmatprep.mubr.f32.mxu0 0.0
    %3752 = vmatmul.mubr.f32.gmra.mrb[0].mxu0 %v3672
    %v3753 = vpop.f32.mrb[0].mxu0
    %v3754 = vadd.f32 %v3641, %v3753
    %v3755 = vpop.f32.mrb[0].mxu0
    %3756 = vmatprep.mubr.f32.mxu0 0.0
    %3757 = vmatmul.mubr.f32.gmra.mrb[0].mxu0 %v3675
    %v3758 = vpop.f32.mrb[0].mxu0
    %v3759 = vadd.f32 %v3646, %v3758
    %v3760 = vpop.f32.mrb[0].mxu0
    %3761 = vdwg.mxu0
    %3766 = vrot.lane.b32.xlu0 %v3533, 127
    %v3767 = vpop.permute.xlu0 %3766
    %3768 = vrot.lane.b32.xlu0 %v3534, 127
    %v3769 = vpop.permute.xlu0 %3768
    %3770 = vrot.lane.b32.xlu0 %v3535, 127
    %v3771 = vpop.permute.xlu0 %3770
    %3772 = vrot.lane.b32.xlu0 %v3536, 127
    %v3773 = vpop.permute.xlu0 %3772
    %v3779 = vsel %vm136, %v3548, 0
    %v3782 = vsel %vm136, %v3549, 0
    %v3785 = vsel %vm136, %v3550, 0
    %v3788 = vsel %vm136, %v3551, 0
    %3790 = vmatprep.subr.mxu0 0.0
    %3791 = vmatpush1.msra.mxu0 %v3767
    %3792 = vmatprep.subr.mxu0 0.0
    %3793 = vmatpush1.msra.mxu0 %v3769
    %3794 = vmatprep.subr.mxu0 0.0
    %3795 = vmatpush1.msra.mxu0 %v3771
    %3796 = vmatprep.subr.mxu0 0.0
    %3797 = vmatpush1.msra.mxu0 %v3773
    %3798 = vmatprep.subr.mxu0 0.0
    %3799 = vmatpush1.msra.mxu0 0.0
    %3800 = vmatprep.subr.mxu0 0.0
    %3801 = vmatpush1.msra.mxu0 0.0
    %3802 = vmatprep.subr.mxu0 0.0
    %3803 = vmatpush1.msra.mxu0 0.0
    %3804 = vmatprep.subr.mxu0 0.0
    %3805 = vmatpush1.msra.mxu0 0.0
    %3806 = vmatprep.subr.mxu0 0.0
    %3807 = vmatpush1.msra.mxu0 0.0
    %3808 = vmatprep.subr.mxu0 0.0
    %3809 = vmatpush1.msra.mxu0 0.0
    %3810 = vmatprep.subr.mxu0 0.0
    %3811 = vmatpush1.msra.mxu0 0.0
    %3812 = vmatprep.subr.mxu0 0.0
    %3813 = vmatpush1.msra.mxu0 0.0
    %3814 = vmatprep.subr.mxu0 0.0
    %3815 = vmatpush1.msra.mxu0 0.0
    %3816 = vmatprep.subr.mxu0 0.0
    %3817 = vmatpush1.msra.mxu0 0.0
    %3818 = vmatprep.subr.mxu0 0.0
    %3819 = vmatpush1.msra.mxu0 0.0
    %3820 = vmatprep.subr.mxu0 0.0
    %3821 = vmatpush1.msra.mxu0 0.0
    %3822 = vmatprep.subr.mxu0 0.0
    %3823 = vmatpush1.msra.mxu0 0.0
    %3824 = vmatprep.subr.mxu0 0.0
    %3825 = vmatpush1.msra.mxu0 0.0
    %3826 = vmatprep.subr.mxu0 0.0
    %3827 = vmatpush1.msra.mxu0 0.0
    %3828 = vmatprep.subr.mxu0 0.0
    %3829 = vmatpush1.msra.mxu0 0.0
    %3830 = vmatprep.subr.mxu0 0.0
    %3831 = vmatpush1.msra.mxu0 0.0
    %3832 = vmatprep.subr.mxu0 0.0
    %3833 = vmatpush1.msra.mxu0 0.0
    %3834 = vmatprep.subr.mxu0 0.0
    %3835 = vmatpush1.msra.mxu0 0.0
    %3836 = vmatprep.subr.mxu0 0.0
    %3837 = vmatpush1.msra.mxu0 0.0
    %3838 = vmatprep.subr.mxu0 0.0
    %3839 = vmatpush1.msra.mxu0 0.0
    %3840 = vmatprep.subr.mxu0 0.0
    %3841 = vmatpush1.msra.mxu0 0.0
    %3842 = vmatprep.subr.mxu0 0.0
    %3843 = vmatpush1.msra.mxu0 0.0
    %3844 = vmatprep.subr.mxu0 0.0
    %3845 = vmatpush1.msra.mxu0 0.0
    %3846 = vmatprep.subr.mxu0 0.0
    %3847 = vmatpush1.msra.mxu0 0.0
    %3848 = vmatprep.subr.mxu0 0.0
    %3849 = vmatpush1.msra.mxu0 0.0
    %3850 = vmatprep.subr.mxu0 0.0
    %3851 = vmatpush1.msra.mxu0 0.0
    %3852 = vmatprep.subr.mxu0 0.0
    %3853 = vmatpush1.msra.mxu0 0.0
    %3854 = vmatprep.mubr.f32.mxu0 0.0
    %3855 = vmatmul.mubr.f32.gmra.mrb[0].mxu0 %v3779
    %v3856 = vpop.f32.mrb[0].mxu0
    %v3857 = vadd.f32 0.0, %v3856
    %v3858 = vpop.f32.mrb[0].mxu0
    %3859 = vmatprep.mubr.f32.mxu0 0.0
    %3860 = vmatmul.mubr.f32.gmra.mrb[0].mxu0 %v3782
    %v3861 = vpop.f32.mrb[0].mxu0
    %v3862 = vadd.f32 0.0, %v3861
    %v3863 = vpop.f32.mrb[0].mxu0
    %3864 = vmatprep.mubr.f32.mxu0 0.0
    %3865 = vmatmul.mubr.f32.gmra.mrb[0].mxu0 %v3785
    %v3866 = vpop.f32.mrb[0].mxu0
    %v3867 = vadd.f32 0.0, %v3866
    %v3868 = vpop.f32.mrb[0].mxu0
    %3869 = vmatprep.mubr.f32.mxu0 0.0
    %3870 = vmatmul.mubr.f32.gmra.mrb[0].mxu0 %v3788
    %v3871 = vpop.f32.mrb[0].mxu0
    %v3872 = vadd.f32 0.0, %v3871
    %v3873 = vpop.f32.mrb[0].mxu0
    %3874 = vdwg.mxu0
    %v3875 = vadd.f32 %v3744, %v3857
    %v3876 = vadd.f32 %v3749, %v3862
    %v3877 = vadd.f32 %v3754, %v3867
    %v3878 = vadd.f32 %v3759, %v3872
    %vm3879 = vcmp.gt.f32.partialorder %v3875, 0.0
    %vm3880 = vcmp.gt.f32.partialorder %v3876, 0.0
    %vm3881 = vcmp.gt.f32.partialorder %v3877, 0.0
    %vm3882 = vcmp.gt.f32.partialorder %v3878, 0.0
    %v3883 = vmul.f32 %v3875, 0.2
    %v3884 = vmul.f32 %v3876, 0.2
    %v3885 = vmul.f32 %v3877, 0.2
    %v3886 = vmul.f32 %v3878, 0.2
    %v3887 = vsel %vm3879, %v3875, %v3883
    %v3888 = vsel %vm3880, %v3876, %v3884
    %v3889 = vsel %vm3881, %v3877, %v3885
    %v3890 = vsel %vm3882, %v3878, %v3886
    %v3891 = vld [vmem:[%s3] sm:$0xff]
    %v3892 = vld [vmem:[%s3 + $0x8] sm:$0xff]
    %v3893 = vld [vmem:[%s3 + $0x20] sm:$0xff]
    %v3894 = vld [vmem:[%s3 + $0x28] sm:$0xff]
    %v3895 = vld [vmem:[%s3 + $0x40] sm:$0xff]
    %v3896 = vld [vmem:[%s3 + $0x48] sm:$0xff]
    %v3897 = vld [vmem:[%s3 + $0x60] sm:$0xff]
    %v3898 = vld [vmem:[%s3 + $0x68] sm:$0xff]
    %v3899 = vld [vmem:[%s3 + $0x80] sm:$0xff]
    %v3900 = vld [vmem:[%s3 + $0x88] sm:$0xff]
    %v3901 = vld [vmem:[%s3 + $0xa0] sm:$0xff]
    %v3902 = vld [vmem:[%s3 + $0xa8] sm:$0xff]
    %v3903 = vld [vmem:[%s3 + $0xc0] sm:$0xff]
    %v3904 = vld [vmem:[%s3 + $0xc8] sm:$0xff]
    %v3905 = vld [vmem:[%s3 + $0xe0] sm:$0xff]
    %v3906 = vld [vmem:[%s3 + $0xe8] sm:$0xff]
    %3923 = vrot.lane.b32.xlu0 %v3891, 32
    %v3924 = vpop.permute.xlu0 %3923
    %3925 = vrot.lane.b32.xlu0 %v3892, 32
    %v3926 = vpop.permute.xlu0 %3925
    %3927 = vrot.lane.b32.xlu0 %v3893, 32
    %v3928 = vpop.permute.xlu0 %3927
    %3929 = vrot.lane.b32.xlu0 %v3894, 32
    %v3930 = vpop.permute.xlu0 %3929
    %3931 = vrot.lane.b32.xlu0 %v3895, 32
    %v3932 = vpop.permute.xlu0 %3931
    %3933 = vrot.lane.b32.xlu0 %v3896, 32
    %v3934 = vpop.permute.xlu0 %3933
    %3935 = vrot.lane.b32.xlu0 %v3897, 32
    %v3936 = vpop.permute.xlu0 %3935
    %3937 = vrot.lane.b32.xlu0 %v3898, 32
    %v3938 = vpop.permute.xlu0 %3937
    %3939 = vrot.lane.b32.xlu0 %v3899, 32
    %v3940 = vpop.permute.xlu0 %3939
    %3941 = vrot.lane.b32.xlu0 %v3900, 32
    %v3942 = vpop.permute.xlu0 %3941
    %3943 = vrot.lane.b32.xlu0 %v3901, 32
    %v3944 = vpop.permute.xlu0 %3943
    %3945 = vrot.lane.b32.xlu0 %v3902, 32
    %v3946 = vpop.permute.xlu0 %3945
    %3947 = vrot.lane.b32.xlu0 %v3903, 32
    %v3948 = vpop.permute.xlu0 %3947
    %3949 = vrot.lane.b32.xlu0 %v3904, 32
    %v3950 = vpop.permute.xlu0 %3949
    %3951 = vrot.lane.b32.xlu0 %v3905, 32
    %v3952 = vpop.permute.xlu0 %3951
    %3953 = vrot.lane.b32.xlu0 %v3906, 32
    %v3954 = vpop.permute.xlu0 %3953
    %v3955 = vsel %vm136, %v3924, %v3926
    %v3956 = vsel %vm136, %v3928, %v3930
    %v3957 = vsel %vm136, %v3932, %v3934
    %v3958 = vsel %vm136, %v3936, %v3938
    %v3959 = vsel %vm136, %v3940, %v3942
    %v3960 = vsel %vm136, %v3944, %v3946
    %v3961 = vsel %vm136, %v3948, %v3950
    %v3962 = vsel %vm136, %v3952, %v3954
    %v3972 = vsel %vm1475, %v3887, 0
    %v3975 = vsel %vm1475, %v3888, 0
    %v3978 = vsel %vm1475, %v3889, 0
    %v3981 = vsel %vm1475, %v3890, 0
    %3983 = vmatprep.subr.mxu0 0.0
    %3984 = vmatpush1.msra.mxu0 %v3955
    %3985 = vmatprep.subr.mxu0 0.0
    %3986 = vmatpush1.msra.mxu0 %v3956
    %3987 = vmatprep.subr.mxu0 0.0
    %3988 = vmatpush1.msra.mxu0 %v3957
    %3989 = vmatprep.subr.mxu0 0.0
    %3990 = vmatpush1.msra.mxu0 %v3958
    %3991 = vmatprep.subr.mxu0 0.0
    %3992 = vmatpush1.msra.mxu0 %v3959
    %3993 = vmatprep.subr.mxu0 0.0
    %3994 = vmatpush1.msra.mxu0 %v3960
    %3995 = vmatprep.subr.mxu0 0.0
    %3996 = vmatpush1.msra.mxu0 %v3961
    %3997 = vmatprep.subr.mxu0 0.0
    %3998 = vmatpush1.msra.mxu0 %v3962
    %3999 = vmatprep.subr.mxu0 0.0
    %4000 = vmatpush1.msra.mxu0 0.0
    %4001 = vmatprep.subr.mxu0 0.0
    %4002 = vmatpush1.msra.mxu0 0.0
    %4003 = vmatprep.subr.mxu0 0.0
    %4004 = vmatpush1.msra.mxu0 0.0
    %4005 = vmatprep.subr.mxu0 0.0
    %4006 = vmatpush1.msra.mxu0 0.0
    %4007 = vmatprep.subr.mxu0 0.0
    %4008 = vmatpush1.msra.mxu0 0.0
    %4009 = vmatprep.subr.mxu0 0.0
    %4010 = vmatpush1.msra.mxu0 0.0
    %4011 = vmatprep.subr.mxu0 0.0
    %4012 = vmatpush1.msra.mxu0 0.0
    %4013 = vmatprep.subr.mxu0 0.0
    %4014 = vmatpush1.msra.mxu0 0.0
    %4015 = vmatprep.subr.mxu0 0.0
    %4016 = vmatpush1.msra.mxu0 0.0
    %4017 = vmatprep.subr.mxu0 0.0
    %4018 = vmatpush1.msra.mxu0 0.0
    %4019 = vmatprep.subr.mxu0 0.0
    %4020 = vmatpush1.msra.mxu0 0.0
    %4021 = vmatprep.subr.mxu0 0.0
    %4022 = vmatpush1.msra.mxu0 0.0
    %4023 = vmatprep.subr.mxu0 0.0
    %4024 = vmatpush1.msra.mxu0 0.0
    %4025 = vmatprep.subr.mxu0 0.0
    %4026 = vmatpush1.msra.mxu0 0.0
    %4027 = vmatprep.subr.mxu0 0.0
    %4028 = vmatpush1.msra.mxu0 0.0
    %4029 = vmatprep.subr.mxu0 0.0
    %4030 = vmatpush1.msra.mxu0 0.0
    %4031 = vmatprep.subr.mxu0 0.0
    %4032 = vmatpush1.msra.mxu0 0.0
    %4033 = vmatprep.subr.mxu0 0.0
    %4034 = vmatpush1.msra.mxu0 0.0
    %4035 = vmatprep.subr.mxu0 0.0
    %4036 = vmatpush1.msra.mxu0 0.0
    %4037 = vmatprep.subr.mxu0 0.0
    %4038 = vmatpush1.msra.mxu0 0.0
    %4039 = vmatprep.subr.mxu0 0.0
    %4040 = vmatpush1.msra.mxu0 0.0
    %4041 = vmatprep.subr.mxu0 0.0
    %4042 = vmatpush1.msra.mxu0 0.0
    %4043 = vmatprep.subr.mxu0 0.0
    %4044 = vmatpush1.msra.mxu0 0.0
    %4045 = vmatprep.subr.mxu0 0.0
    %4046 = vmatpush1.msra.mxu0 0.0
    %4047 = vmatprep.mubr.f32.mxu0 0.0
    %4048 = vmatmul.mubr.f32.gmra.mrb[0].mxu0 %v3972
    %v4049 = vpop.f32.mrb[0].mxu0
    %v4050 = vadd.f32 0.0, %v4049
    %v4051 = vpop.f32.mrb[0].mxu0
    %4052 = vmatprep.mubr.f32.mxu0 0.0
    %4053 = vmatmul.mubr.f32.gmra.mrb[0].mxu0 %v3975
    %v4054 = vpop.f32.mrb[0].mxu0
    %v4055 = vadd.f32 0.0, %v4054
    %v4056 = vpop.f32.mrb[0].mxu0
    %4057 = vmatprep.mubr.f32.mxu0 0.0
    %4058 = vmatmul.mubr.f32.gmra.mrb[0].mxu0 %v3978
    %v4059 = vpop.f32.mrb[0].mxu0
    %v4060 = vadd.f32 0.0, %v4059
    %v4061 = vpop.f32.mrb[0].mxu0
    %4062 = vmatprep.mubr.f32.mxu0 0.0
    %4063 = vmatmul.mubr.f32.gmra.mrb[0].mxu0 %v3981
    %v4064 = vpop.f32.mrb[0].mxu0
    %v4065 = vadd.f32 0.0, %v4064
    %v4066 = vpop.f32.mrb[0].mxu0
    %4067 = vdwg.mxu0
    %4068 = vrot.lane.b32.xlu0 %v4050, 1
    %v4069 = vpop.permute.xlu0 %4068
    %4070 = vrot.lane.b32.xlu0 %v4055, 1
    %v4071 = vpop.permute.xlu0 %4070
    %4072 = vrot.lane.b32.xlu0 %v4060, 1
    %v4073 = vpop.permute.xlu0 %4072
    %4074 = vrot.lane.b32.xlu0 %v4065, 1
    %v4075 = vpop.permute.xlu0 %4074
    %v4076 = vmul.f32 %v4069, %v589
    %v4077 = vmul.f32 %v4071, %v589
    %v4078 = vmul.f32 %v4073, %v589
    %v4079 = vmul.f32 %v4075, %v589
    %4080 = vrot.lane.b32.xlu0 %v4050, 127
    %v4081 = vpop.permute.xlu0 %4080
    %4082 = vrot.lane.b32.xlu0 %v4055, 127
    %v4083 = vpop.permute.xlu0 %4082
    %4084 = vrot.lane.b32.xlu0 %v4060, 127
    %v4085 = vpop.permute.xlu0 %4084
    %4086 = vrot.lane.b32.xlu0 %v4065, 127
    %v4087 = vpop.permute.xlu0 %4086
    %v4088 = vmul.f32 %v4081, %v590
    %v4089 = vmul.f32 %v4083, %v590
    %v4090 = vmul.f32 %v4085, %v590
    %v4091 = vmul.f32 %v4087, %v590
    %s4092 = scalar_lea.vmem %s1, 704
    %v4093 = vld [vmem:[%s4092] sm:$0xff]
    %v4094 = vld [vmem:[%s4092 + $0x8] sm:$0xff]
    %v4095 = vld [vmem:[%s4092 + $0x10] sm:$0xff]
    %v4096 = vld [vmem:[%s4092 + $0x18] sm:$0xff]
    %s4097 = scalar_lea.vmem %s1, 736
    %v4098 = vld [vmem:[%s4097] sm:$0xff]
    %v4099 = vld [vmem:[%s4097 + $0x8] sm:$0xff]
    %v4100 = vld [vmem:[%s4097 + $0x10] sm:$0xff]
    %v4101 = vld [vmem:[%s4097 + $0x18] sm:$0xff]
    %s4102 = scalar_lea.vmem %s1, 768
    %v4103 = vld [vmem:[%s4102] sm:$0xff]
    %v4104 = vld [vmem:[%s4102 + $0x8] sm:$0xff]
    %v4105 = vld [vmem:[%s4102 + $0x10] sm:$0xff]
    %v4106 = vld [vmem:[%s4102 + $0x18] sm:$0xff]
    %v4108 = vsel %vm136, %v4098, 0
    %v4111 = vsel %vm136, %v4099, 0
    %v4114 = vsel %vm136, %v4100, 0
    %v4117 = vsel %vm136, %v4101, 0
    %4119 = vmatprep.subr.mxu0 0.0
    %4120 = vmatpush1.msra.mxu0 %v4050
    %4121 = vmatprep.subr.mxu0 0.0
    %4122 = vmatpush1.msra.mxu0 %v4055
    %4123 = vmatprep.subr.mxu0 0.0
    %4124 = vmatpush1.msra.mxu0 %v4060
    %4125 = vmatprep.subr.mxu0 0.0
    %4126 = vmatpush1.msra.mxu0 %v4065
    %4127 = vmatprep.subr.mxu0 0.0
    %4128 = vmatpush1.msra.mxu0 0.0
    %4129 = vmatprep.subr.mxu0 0.0
    %4130 = vmatpush1.msra.mxu0 0.0
    %4131 = vmatprep.subr.mxu0 0.0
    %4132 = vmatpush1.msra.mxu0 0.0
    %4133 = vmatprep.subr.mxu0 0.0
    %4134 = vmatpush1.msra.mxu0 0.0
    %4135 = vmatprep.subr.mxu0 0.0
    %4136 = vmatpush1.msra.mxu0 0.0
    %4137 = vmatprep.subr.mxu0 0.0
    %4138 = vmatpush1.msra.mxu0 0.0
    %4139 = vmatprep.subr.mxu0 0.0
    %4140 = vmatpush1.msra.mxu0 0.0
    %4141 = vmatprep.subr.mxu0 0.0
    %4142 = vmatpush1.msra.mxu0 0.0
    %4143 = vmatprep.subr.mxu0 0.0
    %4144 = vmatpush1.msra.mxu0 0.0
    %4145 = vmatprep.subr.mxu0 0.0
    %4146 = vmatpush1.msra.mxu0 0.0
    %4147 = vmatprep.subr.mxu0 0.0
    %4148 = vmatpush1.msra.mxu0 0.0
    %4149 = vmatprep.subr.mxu0 0.0
    %4150 = vmatpush1.msra.mxu0 0.0
    %4151 = vmatprep.subr.mxu0 0.0
    %4152 = vmatpush1.msra.mxu0 0.0
    %4153 = vmatprep.subr.mxu0 0.0
    %4154 = vmatpush1.msra.mxu0 0.0
    %4155 = vmatprep.subr.mxu0 0.0
    %4156 = vmatpush1.msra.mxu0 0.0
    %4157 = vmatprep.subr.mxu0 0.0
    %4158 = vmatpush1.msra.mxu0 0.0
    %4159 = vmatprep.subr.mxu0 0.0
    %4160 = vmatpush1.msra.mxu0 0.0
    %4161 = vmatprep.subr.mxu0 0.0
    %4162 = vmatpush1.msra.mxu0 0.0
    %4163 = vmatprep.subr.mxu0 0.0
    %4164 = vmatpush1.msra.mxu0 0.0
    %4165 = vmatprep.subr.mxu0 0.0
    %4166 = vmatpush1.msra.mxu0 0.0
    %4167 = vmatprep.subr.mxu0 0.0
    %4168 = vmatpush1.msra.mxu0 0.0
    %4169 = vmatprep.subr.mxu0 0.0
    %4170 = vmatpush1.msra.mxu0 0.0
    %4171 = vmatprep.subr.mxu0 0.0
    %4172 = vmatpush1.msra.mxu0 0.0
    %4173 = vmatprep.subr.mxu0 0.0
    %4174 = vmatpush1.msra.mxu0 0.0
    %4175 = vmatprep.subr.mxu0 0.0
    %4176 = vmatpush1.msra.mxu0 0.0
    %4177 = vmatprep.subr.mxu0 0.0
    %4178 = vmatpush1.msra.mxu0 0.0
    %4179 = vmatprep.subr.mxu0 0.0
    %4180 = vmatpush1.msra.mxu0 0.0
    %4181 = vmatprep.subr.mxu0 0.0
    %4182 = vmatpush1.msra.mxu0 0.0
    %4183 = vmatprep.mubr.f32.mxu0 0.0
    %4184 = vmatmul.mubr.f32.gmra.mrb[0].mxu0 %v4108
    %v4185 = vpop.f32.mrb[0].mxu0
    %v4186 = vadd.f32 0.0, %v4185
    %v4187 = vpop.f32.mrb[0].mxu0
    %4188 = vmatprep.mubr.f32.mxu0 0.0
    %4189 = vmatmul.mubr.f32.gmra.mrb[0].mxu0 %v4111
    %v4190 = vpop.f32.mrb[0].mxu0
    %v4191 = vadd.f32 0.0, %v4190
    %v4192 = vpop.f32.mrb[0].mxu0
    %4193 = vmatprep.mubr.f32.mxu0 0.0
    %4194 = vmatmul.mubr.f32.gmra.mrb[0].mxu0 %v4114
    %v4195 = vpop.f32.mrb[0].mxu0
    %v4196 = vadd.f32 0.0, %v4195
    %v4197 = vpop.f32.mrb[0].mxu0
    %4198 = vmatprep.mubr.f32.mxu0 0.0
    %4199 = vmatmul.mubr.f32.gmra.mrb[0].mxu0 %v4117
    %v4200 = vpop.f32.mrb[0].mxu0
    %v4201 = vadd.f32 0.0, %v4200
    %v4202 = vpop.f32.mrb[0].mxu0
    %4203 = vdwg.mxu0
    %v4205 = vsel %vm136, %v4093, 0
    %v4208 = vsel %vm136, %v4094, 0
    %v4211 = vsel %vm136, %v4095, 0
    %v4214 = vsel %vm136, %v4096, 0
    %4216 = vmatprep.subr.mxu0 0.0
    %4217 = vmatpush1.msra.mxu0 %v4076
    %4218 = vmatprep.subr.mxu0 0.0
    %4219 = vmatpush1.msra.mxu0 %v4077
    %4220 = vmatprep.subr.mxu0 0.0
    %4221 = vmatpush1.msra.mxu0 %v4078
    %4222 = vmatprep.subr.mxu0 0.0
    %4223 = vmatpush1.msra.mxu0 %v4079
    %4224 = vmatprep.subr.mxu0 0.0
    %4225 = vmatpush1.msra.mxu0 0.0
    %4226 = vmatprep.subr.mxu0 0.0
    %4227 = vmatpush1.msra.mxu0 0.0
    %4228 = vmatprep.subr.mxu0 0.0
    %4229 = vmatpush1.msra.mxu0 0.0
    %4230 = vmatprep.subr.mxu0 0.0
    %4231 = vmatpush1.msra.mxu0 0.0
    %4232 = vmatprep.subr.mxu0 0.0
    %4233 = vmatpush1.msra.mxu0 0.0
    %4234 = vmatprep.subr.mxu0 0.0
    %4235 = vmatpush1.msra.mxu0 0.0
    %4236 = vmatprep.subr.mxu0 0.0
    %4237 = vmatpush1.msra.mxu0 0.0
    %4238 = vmatprep.subr.mxu0 0.0
    %4239 = vmatpush1.msra.mxu0 0.0
    %4240 = vmatprep.subr.mxu0 0.0
    %4241 = vmatpush1.msra.mxu0 0.0
    %4242 = vmatprep.subr.mxu0 0.0
    %4243 = vmatpush1.msra.mxu0 0.0
    %4244 = vmatprep.subr.mxu0 0.0
    %4245 = vmatpush1.msra.mxu0 0.0
    %4246 = vmatprep.subr.mxu0 0.0
    %4247 = vmatpush1.msra.mxu0 0.0
    %4248 = vmatprep.subr.mxu0 0.0
    %4249 = vmatpush1.msra.mxu0 0.0
    %4250 = vmatprep.subr.mxu0 0.0
    %4251 = vmatpush1.msra.mxu0 0.0
    %4252 = vmatprep.subr.mxu0 0.0
    %4253 = vmatpush1.msra.mxu0 0.0
    %4254 = vmatprep.subr.mxu0 0.0
    %4255 = vmatpush1.msra.mxu0 0.0
    %4256 = vmatprep.subr.mxu0 0.0
    %4257 = vmatpush1.msra.mxu0 0.0
    %4258 = vmatprep.subr.mxu0 0.0
    %4259 = vmatpush1.msra.mxu0 0.0
    %4260 = vmatprep.subr.mxu0 0.0
    %4261 = vmatpush1.msra.mxu0 0.0
    %4262 = vmatprep.subr.mxu0 0.0
    %4263 = vmatpush1.msra.mxu0 0.0
    %4264 = vmatprep.subr.mxu0 0.0
    %4265 = vmatpush1.msra.mxu0 0.0
    %4266 = vmatprep.subr.mxu0 0.0
    %4267 = vmatpush1.msra.mxu0 0.0
    %4268 = vmatprep.subr.mxu0 0.0
    %4269 = vmatpush1.msra.mxu0 0.0
    %4270 = vmatprep.subr.mxu0 0.0
    %4271 = vmatpush1.msra.mxu0 0.0
    %4272 = vmatprep.subr.mxu0 0.0
    %4273 = vmatpush1.msra.mxu0 0.0
    %4274 = vmatprep.subr.mxu0 0.0
    %4275 = vmatpush1.msra.mxu0 0.0
    %4276 = vmatprep.subr.mxu0 0.0
    %4277 = vmatpush1.msra.mxu0 0.0
    %4278 = vmatprep.subr.mxu0 0.0
    %4279 = vmatpush1.msra.mxu0 0.0
    %4280 = vmatprep.mubr.f32.mxu0 0.0
    %4281 = vmatmul.mubr.f32.gmra.mrb[0].mxu0 %v4205
    %v4282 = vpop.f32.mrb[0].mxu0
    %v4283 = vadd.f32 %v4186, %v4282
    %v4284 = vpop.f32.mrb[0].mxu0
    %4285 = vmatprep.mubr.f32.mxu0 0.0
    %4286 = vmatmul.mubr.f32.gmra.mrb[0].mxu0 %v4208
    %v4287 = vpop.f32.mrb[0].mxu0
    %v4288 = vadd.f32 %v4191, %v4287
    %v4289 = vpop.f32.mrb[0].mxu0
    %4290 = vmatprep.mubr.f32.mxu0 0.0
    %4291 = vmatmul.mubr.f32.gmra.mrb[0].mxu0 %v4211
    %v4292 = vpop.f32.mrb[0].mxu0
    %v4293 = vadd.f32 %v4196, %v4292
    %v4294 = vpop.f32.mrb[0].mxu0
    %4295 = vmatprep.mubr.f32.mxu0 0.0
    %4296 = vmatmul.mubr.f32.gmra.mrb[0].mxu0 %v4214
    %v4297 = vpop.f32.mrb[0].mxu0
    %v4298 = vadd.f32 %v4201, %v4297
    %v4299 = vpop.f32.mrb[0].mxu0
    %4300 = vdwg.mxu0
    %v4302 = vsel %vm136, %v4103, 0
    %v4305 = vsel %vm136, %v4104, 0
    %v4308 = vsel %vm136, %v4105, 0
    %v4311 = vsel %vm136, %v4106, 0
    %4313 = vmatprep.subr.mxu0 0.0
    %4314 = vmatpush1.msra.mxu0 %v4088
    %4315 = vmatprep.subr.mxu0 0.0
    %4316 = vmatpush1.msra.mxu0 %v4089
    %4317 = vmatprep.subr.mxu0 0.0
    %4318 = vmatpush1.msra.mxu0 %v4090
    %4319 = vmatprep.subr.mxu0 0.0
    %4320 = vmatpush1.msra.mxu0 %v4091
    %4321 = vmatprep.subr.mxu0 0.0
    %4322 = vmatpush1.msra.mxu0 0.0
    %4323 = vmatprep.subr.mxu0 0.0
    %4324 = vmatpush1.msra.mxu0 0.0
    %4325 = vmatprep.subr.mxu0 0.0
    %4326 = vmatpush1.msra.mxu0 0.0
    %4327 = vmatprep.subr.mxu0 0.0
    %4328 = vmatpush1.msra.mxu0 0.0
    %4329 = vmatprep.subr.mxu0 0.0
    %4330 = vmatpush1.msra.mxu0 0.0
    %4331 = vmatprep.subr.mxu0 0.0
    %4332 = vmatpush1.msra.mxu0 0.0
    %4333 = vmatprep.subr.mxu0 0.0
    %4334 = vmatpush1.msra.mxu0 0.0
    %4335 = vmatprep.subr.mxu0 0.0
    %4336 = vmatpush1.msra.mxu0 0.0
    %4337 = vmatprep.subr.mxu0 0.0
    %4338 = vmatpush1.msra.mxu0 0.0
    %4339 = vmatprep.subr.mxu0 0.0
    %4340 = vmatpush1.msra.mxu0 0.0
    %4341 = vmatprep.subr.mxu0 0.0
    %4342 = vmatpush1.msra.mxu0 0.0
    %4343 = vmatprep.subr.mxu0 0.0
    %4344 = vmatpush1.msra.mxu0 0.0
    %4345 = vmatprep.subr.mxu0 0.0
    %4346 = vmatpush1.msra.mxu0 0.0
    %4347 = vmatprep.subr.mxu0 0.0
    %4348 = vmatpush1.msra.mxu0 0.0
    %4349 = vmatprep.subr.mxu0 0.0
    %4350 = vmatpush1.msra.mxu0 0.0
    %4351 = vmatprep.subr.mxu0 0.0
    %4352 = vmatpush1.msra.mxu0 0.0
    %4353 = vmatprep.subr.mxu0 0.0
    %4354 = vmatpush1.msra.mxu0 0.0
    %4355 = vmatprep.subr.mxu0 0.0
    %4356 = vmatpush1.msra.mxu0 0.0
    %4357 = vmatprep.subr.mxu0 0.0
    %4358 = vmatpush1.msra.mxu0 0.0
    %4359 = vmatprep.subr.mxu0 0.0
    %4360 = vmatpush1.msra.mxu0 0.0
    %4361 = vmatprep.subr.mxu0 0.0
    %4362 = vmatpush1.msra.mxu0 0.0
    %4363 = vmatprep.subr.mxu0 0.0
    %4364 = vmatpush1.msra.mxu0 0.0
    %4365 = vmatprep.subr.mxu0 0.0
    %4366 = vmatpush1.msra.mxu0 0.0
    %4367 = vmatprep.subr.mxu0 0.0
    %4368 = vmatpush1.msra.mxu0 0.0
    %4369 = vmatprep.subr.mxu0 0.0
    %4370 = vmatpush1.msra.mxu0 0.0
    %4371 = vmatprep.subr.mxu0 0.0
    %4372 = vmatpush1.msra.mxu0 0.0
    %4373 = vmatprep.subr.mxu0 0.0
    %4374 = vmatpush1.msra.mxu0 0.0
    %4375 = vmatprep.subr.mxu0 0.0
    %4376 = vmatpush1.msra.mxu0 0.0
    %4377 = vmatprep.mubr.f32.mxu0 0.0
    %4378 = vmatmul.mubr.f32.gmra.mrb[0].mxu0 %v4302
    %v4379 = vpop.f32.mrb[0].mxu0
    %v4380 = vadd.f32 0.0, %v4379
    %v4381 = vpop.f32.mrb[0].mxu0
    %4382 = vmatprep.mubr.f32.mxu0 0.0
    %4383 = vmatmul.mubr.f32.gmra.mrb[0].mxu0 %v4305
    %v4384 = vpop.f32.mrb[0].mxu0
    %v4385 = vadd.f32 0.0, %v4384
    %v4386 = vpop.f32.mrb[0].mxu0
    %4387 = vmatprep.mubr.f32.mxu0 0.0
    %4388 = vmatmul.mubr.f32.gmra.mrb[0].mxu0 %v4308
    %v4389 = vpop.f32.mrb[0].mxu0
    %v4390 = vadd.f32 0.0, %v4389
    %v4391 = vpop.f32.mrb[0].mxu0
    %4392 = vmatprep.mubr.f32.mxu0 0.0
    %4393 = vmatmul.mubr.f32.gmra.mrb[0].mxu0 %v4311
    %v4394 = vpop.f32.mrb[0].mxu0
    %v4395 = vadd.f32 0.0, %v4394
    %v4396 = vpop.f32.mrb[0].mxu0
    %4397 = vdwg.mxu0
    %v4398 = vadd.f32 %v4283, %v4380
    %v4399 = vadd.f32 %v4288, %v4385
    %v4400 = vadd.f32 %v4293, %v4390
    %v4401 = vadd.f32 %v4298, %v4395
    %vm4402 = vcmp.gt.f32.partialorder %v4398, 0.0
    %vm4403 = vcmp.gt.f32.partialorder %v4399, 0.0
    %vm4404 = vcmp.gt.f32.partialorder %v4400, 0.0
    %vm4405 = vcmp.gt.f32.partialorder %v4401, 0.0
    %v4406 = vmul.f32 %v4398, 0.2
    %v4407 = vmul.f32 %v4399, 0.2
    %v4408 = vmul.f32 %v4400, 0.2
    %v4409 = vmul.f32 %v4401, 0.2
    %v4410 = vsel %vm4402, %v4398, %v4406
    %v4411 = vsel %vm4403, %v4399, %v4407
    %v4412 = vsel %vm4404, %v4400, %v4408
    %v4413 = vsel %vm4405, %v4401, %v4409
    %v4414 = vld [vmem:[%s3 + $0x8] sm:$0xff]
    %v4415 = vld [vmem:[%s3 + $0x10] sm:$0xff]
    %v4416 = vld [vmem:[%s3 + $0x18] sm:$0xff]
    %v4417 = vld [vmem:[%s3 + $0x28] sm:$0xff]
    %v4418 = vld [vmem:[%s3 + $0x30] sm:$0xff]
    %v4419 = vld [vmem:[%s3 + $0x38] sm:$0xff]
    %v4420 = vld [vmem:[%s3 + $0x48] sm:$0xff]
    %v4421 = vld [vmem:[%s3 + $0x50] sm:$0xff]
    %v4422 = vld [vmem:[%s3 + $0x58] sm:$0xff]
    %v4423 = vld [vmem:[%s3 + $0x68] sm:$0xff]
    %v4424 = vld [vmem:[%s3 + $0x70] sm:$0xff]
    %v4425 = vld [vmem:[%s3 + $0x78] sm:$0xff]
    %v4426 = vld [vmem:[%s3 + $0x88] sm:$0xff]
    %v4427 = vld [vmem:[%s3 + $0x90] sm:$0xff]
    %v4428 = vld [vmem:[%s3 + $0x98] sm:$0xff]
    %v4429 = vld [vmem:[%s3 + $0xa8] sm:$0xff]
    %v4430 = vld [vmem:[%s3 + $0xb0] sm:$0xff]
    %v4431 = vld [vmem:[%s3 + $0xb8] sm:$0xff]
    %v4432 = vld [vmem:[%s3 + $0xc8] sm:$0xff]
    %v4433 = vld [vmem:[%s3 + $0xd0] sm:$0xff]
    %v4434 = vld [vmem:[%s3 + $0xd8] sm:$0xff]
    %v4435 = vld [vmem:[%s3 + $0xe8] sm:$0xff]
    %v4436 = vld [vmem:[%s3 + $0xf0] sm:$0xff]
    %v4437 = vld [vmem:[%s3 + $0xf8] sm:$0xff]
    %v4438 = vld [vmem:[%s3 + $0x108] sm:$0xff]
    %v4439 = vld [vmem:[%s3 + $0x110] sm:$0xff]
    %v4440 = vld [vmem:[%s3 + $0x118] sm:$0xff]
    %v4441 = vld [vmem:[%s3 + $0x128] sm:$0xff]
    %v4442 = vld [vmem:[%s3 + $0x130] sm:$0xff]
    %v4443 = vld [vmem:[%s3 + $0x138] sm:$0xff]
    %v4444 = vld [vmem:[%s3 + $0x148] sm:$0xff]
    %v4445 = vld [vmem:[%s3 + $0x150] sm:$0xff]
    %v4446 = vld [vmem:[%s3 + $0x158] sm:$0xff]
    %v4447 = vld [vmem:[%s3 + $0x168] sm:$0xff]
    %v4448 = vld [vmem:[%s3 + $0x170] sm:$0xff]
    %v4449 = vld [vmem:[%s3 + $0x178] sm:$0xff]
    %v4450 = vld [vmem:[%s3 + $0x188] sm:$0xff]
    %v4451 = vld [vmem:[%s3 + $0x190] sm:$0xff]
    %v4452 = vld [vmem:[%s3 + $0x198] sm:$0xff]
    %v4453 = vld [vmem:[%s3 + $0x1a8] sm:$0xff]
    %v4454 = vld [vmem:[%s3 + $0x1b0] sm:$0xff]
    %v4455 = vld [vmem:[%s3 + $0x1b8] sm:$0xff]
    %v4456 = vld [vmem:[%s3 + $0x1c8] sm:$0xff]
    %v4457 = vld [vmem:[%s3 + $0x1d0] sm:$0xff]
    %v4458 = vld [vmem:[%s3 + $0x1d8] sm:$0xff]
    %v4459 = vld [vmem:[%s3 + $0x1e8] sm:$0xff]
    %v4460 = vld [vmem:[%s3 + $0x1f0] sm:$0xff]
    %v4461 = vld [vmem:[%s3 + $0x1f8] sm:$0xff]
    %4510 = vrot.lane.b32.xlu0 %v4414, 32
    %v4511 = vpop.permute.xlu0 %4510
    %4512 = vrot.lane.b32.xlu0 %v4415, 32
    %v4513 = vpop.permute.xlu0 %4512
    %4514 = vrot.lane.b32.xlu0 %v4416, 32
    %v4515 = vpop.permute.xlu0 %4514
    %4516 = vrot.lane.b32.xlu0 %v4417, 32
    %v4517 = vpop.permute.xlu0 %4516
    %4518 = vrot.lane.b32.xlu0 %v4418, 32
    %v4519 = vpop.permute.xlu0 %4518
    %4520 = vrot.lane.b32.xlu0 %v4419, 32
    %v4521 = vpop.permute.xlu0 %4520
    %4522 = vrot.lane.b32.xlu0 %v4420, 32
    %v4523 = vpop.permute.xlu0 %4522
    %4524 = vrot.lane.b32.xlu0 %v4421, 32
    %v4525 = vpop.permute.xlu0 %4524
    %4526 = vrot.lane.b32.xlu0 %v4422, 32
    %v4527 = vpop.permute.xlu0 %4526
    %4528 = vrot.lane.b32.xlu0 %v4423, 32
    %v4529 = vpop.permute.xlu0 %4528
    %4530 = vrot.lane.b32.xlu0 %v4424, 32
    %v4531 = vpop.permute.xlu0 %4530
    %4532 = vrot.lane.b32.xlu0 %v4425, 32
    %v4533 = vpop.permute.xlu0 %4532
    %4534 = vrot.lane.b32.xlu0 %v4426, 32
    %v4535 = vpop.permute.xlu0 %4534
    %4536 = vrot.lane.b32.xlu0 %v4427, 32
    %v4537 = vpop.permute.xlu0 %4536
    %4538 = vrot.lane.b32.xlu0 %v4428, 32
    %v4539 = vpop.permute.xlu0 %4538
    %4540 = vrot.lane.b32.xlu0 %v4429, 32
    %v4541 = vpop.permute.xlu0 %4540
    %4542 = vrot.lane.b32.xlu0 %v4430, 32
    %v4543 = vpop.permute.xlu0 %4542
    %4544 = vrot.lane.b32.xlu0 %v4431, 32
    %v4545 = vpop.permute.xlu0 %4544
    %4546 = vrot.lane.b32.xlu0 %v4432, 32
    %v4547 = vpop.permute.xlu0 %4546
    %4548 = vrot.lane.b32.xlu0 %v4433, 32
    %v4549 = vpop.permute.xlu0 %4548
    %4550 = vrot.lane.b32.xlu0 %v4434, 32
    %v4551 = vpop.permute.xlu0 %4550
    %4552 = vrot.lane.b32.xlu0 %v4435, 32
    %v4553 = vpop.permute.xlu0 %4552
    %4554 = vrot.lane.b32.xlu0 %v4436, 32
    %v4555 = vpop.permute.xlu0 %4554
    %4556 = vrot.lane.b32.xlu0 %v4437, 32
    %v4557 = vpop.permute.xlu0 %4556
    %4558 = vrot.lane.b32.xlu0 %v4438, 32
    %v4559 = vpop.permute.xlu0 %4558
    %4560 = vrot.lane.b32.xlu0 %v4439, 32
    %v4561 = vpop.permute.xlu0 %4560
    %4562 = vrot.lane.b32.xlu0 %v4440, 32
    %v4563 = vpop.permute.xlu0 %4562
    %4564 = vrot.lane.b32.xlu0 %v4441, 32
    %v4565 = vpop.permute.xlu0 %4564
    %4566 = vrot.lane.b32.xlu0 %v4442, 32
    %v4567 = vpop.permute.xlu0 %4566
    %4568 = vrot.lane.b32.xlu0 %v4443, 32
    %v4569 = vpop.permute.xlu0 %4568
    %4570 = vrot.lane.b32.xlu0 %v4444, 32
    %v4571 = vpop.permute.xlu0 %4570
    %4572 = vrot.lane.b32.xlu0 %v4445, 32
    %v4573 = vpop.permute.xlu0 %4572
    %4574 = vrot.lane.b32.xlu0 %v4446, 32
    %v4575 = vpop.permute.xlu0 %4574
    %4576 = vrot.lane.b32.xlu0 %v4447, 32
    %v4577 = vpop.permute.xlu0 %4576
    %4578 = vrot.lane.b32.xlu0 %v4448, 32
    %v4579 = vpop.permute.xlu0 %4578
    %4580 = vrot.lane.b32.xlu0 %v4449, 32
    %v4581 = vpop.permute.xlu0 %4580
    %4582 = vrot.lane.b32.xlu0 %v4450, 32
    %v4583 = vpop.permute.xlu0 %4582
    %4584 = vrot.lane.b32.xlu0 %v4451, 32
    %v4585 = vpop.permute.xlu0 %4584
    %4586 = vrot.lane.b32.xlu0 %v4452, 32
    %v4587 = vpop.permute.xlu0 %4586
    %4588 = vrot.lane.b32.xlu0 %v4453, 32
    %v4589 = vpop.permute.xlu0 %4588
    %4590 = vrot.lane.b32.xlu0 %v4454, 32
    %v4591 = vpop.permute.xlu0 %4590
    %4592 = vrot.lane.b32.xlu0 %v4455, 32
    %v4593 = vpop.permute.xlu0 %4592
    %4594 = vrot.lane.b32.xlu0 %v4456, 32
    %v4595 = vpop.permute.xlu0 %4594
    %4596 = vrot.lane.b32.xlu0 %v4457, 32
    %v4597 = vpop.permute.xlu0 %4596
    %4598 = vrot.lane.b32.xlu0 %v4458, 32
    %v4599 = vpop.permute.xlu0 %4598
    %4600 = vrot.lane.b32.xlu0 %v4459, 32
    %v4601 = vpop.permute.xlu0 %4600
    %4602 = vrot.lane.b32.xlu0 %v4460, 32
    %v4603 = vpop.permute.xlu0 %4602
    %4604 = vrot.lane.b32.xlu0 %v4461, 32
    %v4605 = vpop.permute.xlu0 %4604
    %v4606 = vsel %vm136, %v4511, %v4513
    %v4607 = vsel %vm136, %v4513, %v4515
    %v4608 = vsel %vm136, %v4517, %v4519
    %v4609 = vsel %vm136, %v4519, %v4521
    %v4610 = vsel %vm136, %v4523, %v4525
    %v4611 = vsel %vm136, %v4525, %v4527
    %v4612 = vsel %vm136, %v4529, %v4531
    %v4613 = vsel %vm136, %v4531, %v4533
    %v4614 = vsel %vm136, %v4535, %v4537
    %v4615 = vsel %vm136, %v4537, %v4539
    %v4616 = vsel %vm136, %v4541, %v4543
    %v4617 = vsel %vm136, %v4543, %v4545
    %v4618 = vsel %vm136, %v4547, %v4549
    %v4619 = vsel %vm136, %v4549, %v4551
    %v4620 = vsel %vm136, %v4553, %v4555
    %v4621 = vsel %vm136, %v4555, %v4557
    %v4622 = vsel %vm136, %v4559, %v4561
    %v4623 = vsel %vm136, %v4561, %v4563
    %v4624 = vsel %vm136, %v4565, %v4567
    %v4625 = vsel %vm136, %v4567, %v4569
    %v4626 = vsel %vm136, %v4571, %v4573
    %v4627 = vsel %vm136, %v4573, %v4575
    %v4628 = vsel %vm136, %v4577, %v4579
    %v4629 = vsel %vm136, %v4579, %v4581
    %v4630 = vsel %vm136, %v4583, %v4585
    %v4631 = vsel %vm136, %v4585, %v4587
    %v4632 = vsel %vm136, %v4589, %v4591
    %v4633 = vsel %vm136, %v4591, %v4593
    %v4634 = vsel %vm136, %v4595, %v4597
    %v4635 = vsel %vm136, %v4597, %v4599
    %v4636 = vsel %vm136, %v4601, %v4603
    %v4637 = vsel %vm136, %v4603, %v4605
    %4670 = vmatprep.subr.mxu0 %v4607
    %4671 = vmatpush1.msra.mxu0 %v4606
    %4672 = vmatprep.subr.mxu0 %v4609
    %4673 = vmatpush1.msra.mxu0 %v4608
    %4674 = vmatprep.subr.mxu0 %v4611
    %4675 = vmatpush1.msra.mxu0 %v4610
    %4676 = vmatprep.subr.mxu0 %v4613
    %4677 = vmatpush1.msra.mxu0 %v4612
    %4678 = vmatprep.subr.mxu0 %v4615
    %4679 = vmatpush1.msra.mxu0 %v4614
    %4680 = vmatprep.subr.mxu0 %v4617
    %4681 = vmatpush1.msra.mxu0 %v4616
    %4682 = vmatprep.subr.mxu0 %v4619
    %4683 = vmatpush1.msra.mxu0 %v4618
    %4684 = vmatprep.subr.mxu0 %v4621
    %4685 = vmatpush1.msra.mxu0 %v4620
    %4686 = vmatprep.subr.mxu0 %v4623
    %4687 = vmatpush1.msra.mxu0 %v4622
    %4688 = vmatprep.subr.mxu0 %v4625
    %4689 = vmatpush1.msra.mxu0 %v4624
    %4690 = vmatprep.subr.mxu0 %v4627
    %4691 = vmatpush1.msra.mxu0 %v4626
    %4692 = vmatprep.subr.mxu0 %v4629
    %4693 = vmatpush1.msra.mxu0 %v4628
    %4694 = vmatprep.subr.mxu0 %v4631
    %4695 = vmatpush1.msra.mxu0 %v4630
    %4696 = vmatprep.subr.mxu0 %v4633
    %4697 = vmatpush1.msra.mxu0 %v4632
    %4698 = vmatprep.subr.mxu0 %v4635
    %4699 = vmatpush1.msra.mxu0 %v4634
    %4700 = vmatprep.subr.mxu0 %v4637
    %4701 = vmatpush1.msra.mxu0 %v4636
    %4702 = vmatprep.subr.mxu0 0.0
    %4703 = vmatpush1.msra.mxu0 0.0
    %4704 = vmatprep.subr.mxu0 0.0
    %4705 = vmatpush1.msra.mxu0 0.0
    %4706 = vmatprep.subr.mxu0 0.0
    %4707 = vmatpush1.msra.mxu0 0.0
    %4708 = vmatprep.subr.mxu0 0.0
    %4709 = vmatpush1.msra.mxu0 0.0
    %4710 = vmatprep.subr.mxu0 0.0
    %4711 = vmatpush1.msra.mxu0 0.0
    %4712 = vmatprep.subr.mxu0 0.0
    %4713 = vmatpush1.msra.mxu0 0.0
    %4714 = vmatprep.subr.mxu0 0.0
    %4715 = vmatpush1.msra.mxu0 0.0
    %4716 = vmatprep.subr.mxu0 0.0
    %4717 = vmatpush1.msra.mxu0 0.0
    %4718 = vmatprep.subr.mxu0 0.0
    %4719 = vmatpush1.msra.mxu0 0.0
    %4720 = vmatprep.subr.mxu0 0.0
    %4721 = vmatpush1.msra.mxu0 0.0
    %4722 = vmatprep.subr.mxu0 0.0
    %4723 = vmatpush1.msra.mxu0 0.0
    %4724 = vmatprep.subr.mxu0 0.0
    %4725 = vmatpush1.msra.mxu0 0.0
    %4726 = vmatprep.subr.mxu0 0.0
    %4727 = vmatpush1.msra.mxu0 0.0
    %4728 = vmatprep.subr.mxu0 0.0
    %4729 = vmatpush1.msra.mxu0 0.0
    %4730 = vmatprep.subr.mxu0 0.0
    %4731 = vmatpush1.msra.mxu0 0.0
    %4732 = vmatprep.subr.mxu0 0.0
    %4733 = vmatpush1.msra.mxu0 0.0
    %4734 = vmatprep.mubr.f32.mxu0 0.0
    %4735 = vmatmul.mubr.f32.gmra.mrb[0].mxu0 %v4410
    %v4736 = vpop.f32.mrb[0].mxu0
    %v4737 = vadd.f32 0.0, %v4736
    %v4738 = vpop.f32.mrb[0].mxu0
    %v4739 = vadd.f32 0.0, %v4738
    %4740 = vmatprep.mubr.f32.mxu0 0.0
    %4741 = vmatmul.mubr.f32.gmra.mrb[0].mxu0 %v4411
    %v4742 = vpop.f32.mrb[0].mxu0
    %v4743 = vadd.f32 0.0, %v4742
    %v4744 = vpop.f32.mrb[0].mxu0
    %v4745 = vadd.f32 0.0, %v4744
    %4746 = vmatprep.mubr.f32.mxu0 0.0
    %4747 = vmatmul.mubr.f32.gmra.mrb[0].mxu0 %v4412
    %v4748 = vpop.f32.mrb[0].mxu0
    %v4749 = vadd.f32 0.0, %v4748
    %v4750 = vpop.f32.mrb[0].mxu0
    %v4751 = vadd.f32 0.0, %v4750
    %4752 = vmatprep.mubr.f32.mxu0 0.0
    %4753 = vmatmul.mubr.f32.gmra.mrb[0].mxu0 %v4413
    %v4754 = vpop.f32.mrb[0].mxu0
    %v4755 = vadd.f32 0.0, %v4754
    %v4756 = vpop.f32.mrb[0].mxu0
    %v4757 = vadd.f32 0.0, %v4756
    %4758 = vdwg.mxu0
    %4759 = vrot.lane.b32.xlu0 %v4737, 1
    %v4760 = vpop.permute.xlu0 %4759
    %4761 = vrot.lane.b32.xlu0 %v4743, 1
    %v4762 = vpop.permute.xlu0 %4761
    %4763 = vrot.lane.b32.xlu0 %v4749, 1
    %v4764 = vpop.permute.xlu0 %4763
    %4765 = vrot.lane.b32.xlu0 %v4755, 1
    %v4766 = vpop.permute.xlu0 %4765
    %4767 = vrot.lane.b32.xlu0 %v4739, 1
    %v4768 = vpop.permute.xlu0 %4767
    %4769 = vrot.lane.b32.xlu0 %v4745, 1
    %v4770 = vpop.permute.xlu0 %4769
    %4771 = vrot.lane.b32.xlu0 %v4751, 1
    %v4772 = vpop.permute.xlu0 %4771
    %4773 = vrot.lane.b32.xlu0 %v4757, 1
    %v4774 = vpop.permute.xlu0 %4773
    %v4775 = vsel %vm50, %v4760, %v4768
    %v4776 = vsel %vm50, %v4762, %v4770
    %v4777 = vsel %vm50, %v4764, %v4772
    %v4778 = vsel %vm50, %v4766, %v4774
    %v4779 = vsel %vm50, %v4768, %v4760
    %v4780 = vsel %vm50, %v4770, %v4762
    %v4781 = vsel %vm50, %v4772, %v4764
    %v4782 = vsel %vm50, %v4774, %v4766
    %v4783 = vmul.f32 %v4779, %v63
    %v4784 = vmul.f32 %v4775, %v67
    %v4785 = vmul.f32 %v4780, %v63
    %v4786 = vmul.f32 %v4776, %v67
    %v4787 = vmul.f32 %v4781, %v63
    %v4788 = vmul.f32 %v4777, %v67
    %v4789 = vmul.f32 %v4782, %v63
    %v4790 = vmul.f32 %v4778, %v67
    %4791 = vrot.lane.b32.xlu0 %v4737, 127
    %v4792 = vpop.permute.xlu0 %4791
    %4793 = vrot.lane.b32.xlu0 %v4743, 127
    %v4794 = vpop.permute.xlu0 %4793
    %4795 = vrot.lane.b32.xlu0 %v4749, 127
    %v4796 = vpop.permute.xlu0 %4795
    %4797 = vrot.lane.b32.xlu0 %v4755, 127
    %v4798 = vpop.permute.xlu0 %4797
    %4799 = vrot.lane.b32.xlu0 %v4739, 127
    %v4800 = vpop.permute.xlu0 %4799
    %4801 = vrot.lane.b32.xlu0 %v4745, 127
    %v4802 = vpop.permute.xlu0 %4801
    %4803 = vrot.lane.b32.xlu0 %v4751, 127
    %v4804 = vpop.permute.xlu0 %4803
    %4805 = vrot.lane.b32.xlu0 %v4757, 127
    %v4806 = vpop.permute.xlu0 %4805
    %v4807 = vsel %vm94, %v4792, %v4800
    %v4808 = vsel %vm94, %v4794, %v4802
    %v4809 = vsel %vm94, %v4796, %v4804
    %v4810 = vsel %vm94, %v4798, %v4806
    %v4811 = vsel %vm94, %v4800, %v4792
    %v4812 = vsel %vm94, %v4802, %v4794
    %v4813 = vsel %vm94, %v4804, %v4796
    %v4814 = vsel %vm94, %v4806, %v4798
    %v4815 = vmul.f32 %v4807, %v107
    %v4816 = vmul.f32 %v4811, %v111
    %v4817 = vmul.f32 %v4808, %v107
    %v4818 = vmul.f32 %v4812, %v111
    %v4819 = vmul.f32 %v4809, %v107
    %v4820 = vmul.f32 %v4813, %v111
    %v4821 = vmul.f32 %v4810, %v107
    %v4822 = vmul.f32 %v4814, %v111
    %s4823 = scalar_lea.vmem %s1, 800
    %v4824 = vld [vmem:[%s4823] sm:$0xff]
    %s4825 = scalar_lea.vmem %s1, 832
    %v4826 = vld [vmem:[%s4825] sm:$0xff]
    %s4827 = scalar_lea.vmem %s1, 864
    %v4828 = vld [vmem:[%s4827] sm:$0xff]
    %v4830 = vsel %vm136, %v4826, 0
    %4832 = vmatprep.subr.mxu0 %v4739
    %4833 = vmatpush1.msra.mxu0 %v4737
    %4834 = vmatprep.subr.mxu0 %v4745
    %4835 = vmatpush1.msra.mxu0 %v4743
    %4836 = vmatprep.subr.mxu0 %v4751
    %4837 = vmatpush1.msra.mxu0 %v4749
    %4838 = vmatprep.subr.mxu0 %v4757
    %4839 = vmatpush1.msra.mxu0 %v4755
    %4840 = vmatprep.subr.mxu0 0.0
    %4841 = vmatpush1.msra.mxu0 0.0
    %4842 = vmatprep.subr.mxu0 0.0
    %4843 = vmatpush1.msra.mxu0 0.0
    %4844 = vmatprep.subr.mxu0 0.0
    %4845 = vmatpush1.msra.mxu0 0.0
    %4846 = vmatprep.subr.mxu0 0.0
    %4847 = vmatpush1.msra.mxu0 0.0
    %4848 = vmatprep.subr.mxu0 0.0
    %4849 = vmatpush1.msra.mxu0 0.0
    %4850 = vmatprep.subr.mxu0 0.0
    %4851 = vmatpush1.msra.mxu0 0.0
    %4852 = vmatprep.subr.mxu0 0.0
    %4853 = vmatpush1.msra.mxu0 0.0
    %4854 = vmatprep.subr.mxu0 0.0
    %4855 = vmatpush1.msra.mxu0 0.0
    %4856 = vmatprep.subr.mxu0 0.0
    %4857 = vmatpush1.msra.mxu0 0.0
    %4858 = vmatprep.subr.mxu0 0.0
    %4859 = vmatpush1.msra.mxu0 0.0
    %4860 = vmatprep.subr.mxu0 0.0
    %4861 = vmatpush1.msra.mxu0 0.0
    %4862 = vmatprep.subr.mxu0 0.0
    %4863 = vmatpush1.msra.mxu0 0.0
    %4864 = vmatprep.subr.mxu0 0.0
    %4865 = vmatpush1.msra.mxu0 0.0
    %4866 = vmatprep.subr.mxu0 0.0
    %4867 = vmatpush1.msra.mxu0 0.0
    %4868 = vmatprep.subr.mxu0 0.0
    %4869 = vmatpush1.msra.mxu0 0.0
    %4870 = vmatprep.subr.mxu0 0.0
    %4871 = vmatpush1.msra.mxu0 0.0
    %4872 = vmatprep.subr.mxu0 0.0
    %4873 = vmatpush1.msra.mxu0 0.0
    %4874 = vmatprep.subr.mxu0 0.0
    %4875 = vmatpush1.msra.mxu0 0.0
    %4876 = vmatprep.subr.mxu0 0.0
    %4877 = vmatpush1.msra.mxu0 0.0
    %4878 = vmatprep.subr.mxu0 0.0
    %4879 = vmatpush1.msra.mxu0 0.0
    %4880 = vmatprep.subr.mxu0 0.0
    %4881 = vmatpush1.msra.mxu0 0.0
    %4882 = vmatprep.subr.mxu0 0.0
    %4883 = vmatpush1.msra.mxu0 0.0
    %4884 = vmatprep.subr.mxu0 0.0
    %4885 = vmatpush1.msra.mxu0 0.0
    %4886 = vmatprep.subr.mxu0 0.0
    %4887 = vmatpush1.msra.mxu0 0.0
    %4888 = vmatprep.subr.mxu0 0.0
    %4889 = vmatpush1.msra.mxu0 0.0
    %4890 = vmatprep.subr.mxu0 0.0
    %4891 = vmatpush1.msra.mxu0 0.0
    %4892 = vmatprep.subr.mxu0 0.0
    %4893 = vmatpush1.msra.mxu0 0.0
    %4894 = vmatprep.subr.mxu0 0.0
    %4895 = vmatpush1.msra.mxu0 0.0
    %4896 = vmatprep.mubr.f32.mxu0 0.0
    %4897 = vmatmul.mubr.f32.gmra.mrb[0].mxu0 %v4830
    %v4898 = vpop.f32.mrb[0].mxu0
    %v4899 = vadd.f32 0.0, %v4898
    %v4900 = vpop.f32.mrb[0].mxu0
    %v4901 = vadd.f32 0.0, %v4900
    %4902 = vdwg.mxu0
    %v4904 = vsel %vm136, %v4824, 0
    %4906 = vmatprep.subr.mxu0 %v4784
    %4907 = vmatpush1.msra.mxu0 %v4783
    %4908 = vmatprep.subr.mxu0 %v4786
    %4909 = vmatpush1.msra.mxu0 %v4785
    %4910 = vmatprep.subr.mxu0 %v4788
    %4911 = vmatpush1.msra.mxu0 %v4787
    %4912 = vmatprep.subr.mxu0 %v4790
    %4913 = vmatpush1.msra.mxu0 %v4789
    %4914 = vmatprep.subr.mxu0 0.0
    %4915 = vmatpush1.msra.mxu0 0.0
    %4916 = vmatprep.subr.mxu0 0.0
    %4917 = vmatpush1.msra.mxu0 0.0
    %4918 = vmatprep.subr.mxu0 0.0
    %4919 = vmatpush1.msra.mxu0 0.0
    %4920 = vmatprep.subr.mxu0 0.0
    %4921 = vmatpush1.msra.mxu0 0.0
    %4922 = vmatprep.subr.mxu0 0.0
    %4923 = vmatpush1.msra.mxu0 0.0
    %4924 = vmatprep.subr.mxu0 0.0
    %4925 = vmatpush1.msra.mxu0 0.0
    %4926 = vmatprep.subr.mxu0 0.0
    %4927 = vmatpush1.msra.mxu0 0.0
    %4928 = vmatprep.subr.mxu0 0.0
    %4929 = vmatpush1.msra.mxu0 0.0
    %4930 = vmatprep.subr.mxu0 0.0
    %4931 = vmatpush1.msra.mxu0 0.0
    %4932 = vmatprep.subr.mxu0 0.0
    %4933 = vmatpush1.msra.mxu0 0.0
    %4934 = vmatprep.subr.mxu0 0.0
    %4935 = vmatpush1.msra.mxu0 0.0
    %4936 = vmatprep.subr.mxu0 0.0
    %4937 = vmatpush1.msra.mxu0 0.0
    %4938 = vmatprep.subr.mxu0 0.0
    %4939 = vmatpush1.msra.mxu0 0.0
    %4940 = vmatprep.subr.mxu0 0.0
    %4941 = vmatpush1.msra.mxu0 0.0
    %4942 = vmatprep.subr.mxu0 0.0
    %4943 = vmatpush1.msra.mxu0 0.0
    %4944 = vmatprep.subr.mxu0 0.0
    %4945 = vmatpush1.msra.mxu0 0.0
    %4946 = vmatprep.subr.mxu0 0.0
    %4947 = vmatpush1.msra.mxu0 0.0
    %4948 = vmatprep.subr.mxu0 0.0
    %4949 = vmatpush1.msra.mxu0 0.0
    %4950 = vmatprep.subr.mxu0 0.0
    %4951 = vmatpush1.msra.mxu0 0.0
    %4952 = vmatprep.subr.mxu0 0.0
    %4953 = vmatpush1.msra.mxu0 0.0
    %4954 = vmatprep.subr.mxu0 0.0
    %4955 = vmatpush1.msra.mxu0 0.0
    %4956 = vmatprep.subr.mxu0 0.0
    %4957 = vmatpush1.msra.mxu0 0.0
    %4958 = vmatprep.subr.mxu0 0.0
    %4959 = vmatpush1.msra.mxu0 0.0
    %4960 = vmatprep.subr.mxu0 0.0
    %4961 = vmatpush1.msra.mxu0 0.0
    %4962 = vmatprep.subr.mxu0 0.0
    %4963 = vmatpush1.msra.mxu0 0.0
    %4964 = vmatprep.subr.mxu0 0.0
    %4965 = vmatpush1.msra.mxu0 0.0
    %4966 = vmatprep.subr.mxu0 0.0
    %4967 = vmatpush1.msra.mxu0 0.0
    %4968 = vmatprep.subr.mxu0 0.0
    %4969 = vmatpush1.msra.mxu0 0.0
    %4970 = vmatprep.mubr.f32.mxu0 0.0
    %4971 = vmatmul.mubr.f32.gmra.mrb[0].mxu0 %v4904
    %v4972 = vpop.f32.mrb[0].mxu0
    %v4973 = vadd.f32 %v4899, %v4972
    %v4974 = vpop.f32.mrb[0].mxu0
    %v4975 = vadd.f32 %v4901, %v4974
    %4976 = vdwg.mxu0
    %v4978 = vsel %vm136, %v4828, 0
    %4980 = vmatprep.subr.mxu0 %v4816
    %4981 = vmatpush1.msra.mxu0 %v4815
    %4982 = vmatprep.subr.mxu0 %v4818
    %4983 = vmatpush1.msra.mxu0 %v4817
    %4984 = vmatprep.subr.mxu0 %v4820
    %4985 = vmatpush1.msra.mxu0 %v4819
    %4986 = vmatprep.subr.mxu0 %v4822
    %4987 = vmatpush1.msra.mxu0 %v4821
    %4988 = vmatprep.subr.mxu0 0.0
    %4989 = vmatpush1.msra.mxu0 0.0
    %4990 = vmatprep.subr.mxu0 0.0
    %4991 = vmatpush1.msra.mxu0 0.0
    %4992 = vmatprep.subr.mxu0 0.0
    %4993 = vmatpush1.msra.mxu0 0.0
    %4994 = vmatprep.subr.mxu0 0.0
    %4995 = vmatpush1.msra.mxu0 0.0
    %4996 = vmatprep.subr.mxu0 0.0
    %4997 = vmatpush1.msra.mxu0 0.0
    %4998 = vmatprep.subr.mxu0 0.0
    %4999 = vmatpush1.msra.mxu0 0.0
    %5000 = vmatprep.subr.mxu0 0.0
    %5001 = vmatpush1.msra.mxu0 0.0
    %5002 = vmatprep.subr.mxu0 0.0
    %5003 = vmatpush1.msra.mxu0 0.0
    %5004 = vmatprep.subr.mxu0 0.0
    %5005 = vmatpush1.msra.mxu0 0.0
    %5006 = vmatprep.subr.mxu0 0.0
    %5007 = vmatpush1.msra.mxu0 0.0
    %5008 = vmatprep.subr.mxu0 0.0
    %5009 = vmatpush1.msra.mxu0 0.0
    %5010 = vmatprep.subr.mxu0 0.0
    %5011 = vmatpush1.msra.mxu0 0.0
    %5012 = vmatprep.subr.mxu0 0.0
    %5013 = vmatpush1.msra.mxu0 0.0
    %5014 = vmatprep.subr.mxu0 0.0
    %5015 = vmatpush1.msra.mxu0 0.0
    %5016 = vmatprep.subr.mxu0 0.0
    %5017 = vmatpush1.msra.mxu0 0.0
    %5018 = vmatprep.subr.mxu0 0.0
    %5019 = vmatpush1.msra.mxu0 0.0
    %5020 = vmatprep.subr.mxu0 0.0
    %5021 = vmatpush1.msra.mxu0 0.0
    %5022 = vmatprep.subr.mxu0 0.0
    %5023 = vmatpush1.msra.mxu0 0.0
    %5024 = vmatprep.subr.mxu0 0.0
    %5025 = vmatpush1.msra.mxu0 0.0
    %5026 = vmatprep.subr.mxu0 0.0
    %5027 = vmatpush1.msra.mxu0 0.0
    %5028 = vmatprep.subr.mxu0 0.0
    %5029 = vmatpush1.msra.mxu0 0.0
    %5030 = vmatprep.subr.mxu0 0.0
    %5031 = vmatpush1.msra.mxu0 0.0
    %5032 = vmatprep.subr.mxu0 0.0
    %5033 = vmatpush1.msra.mxu0 0.0
    %5034 = vmatprep.subr.mxu0 0.0
    %5035 = vmatpush1.msra.mxu0 0.0
    %5036 = vmatprep.subr.mxu0 0.0
    %5037 = vmatpush1.msra.mxu0 0.0
    %5038 = vmatprep.subr.mxu0 0.0
    %5039 = vmatpush1.msra.mxu0 0.0
    %5040 = vmatprep.subr.mxu0 0.0
    %5041 = vmatpush1.msra.mxu0 0.0
    %5042 = vmatprep.subr.mxu0 0.0
    %5043 = vmatpush1.msra.mxu0 0.0
    %5044 = vmatprep.mubr.f32.mxu0 0.0
    %5045 = vmatmul.mubr.f32.gmra.mrb[0].mxu0 %v4978
    %v5046 = vpop.f32.mrb[0].mxu0
    %v5047 = vadd.f32 0.0, %v5046
    %v5048 = vpop.f32.mrb[0].mxu0
    %v5049 = vadd.f32 0.0, %v5048
    %5050 = vdwg.mxu0
    %v5051 = vadd.f32 %v4973, %v5047
    %v5052 = vadd.f32 %v4975, %v5049
    %v5053 = vtanh.pop %v5051
    %v5054 = vtanh.pop %v5052
    %v5057 = vcombine.low %v5053, %v5054
    %v5059 = vunpack.c.l.s4 1983009808
    %v5060 = vunpack.c.0.s8 %v5059
    %v5061 = vlaneseq
    %v5062 = vshrl.u32 %v5061, 7
    %v5063 = vsub.s32 %v5060, %v5062
    %v5064 = vrot.slane %v5057, %v5063
    %5066 = vst [vmem:[#allocation2] sm:$0xf] %v5064
    // Predicated region
    $region22: #{tpu_custom_call.1} parent=1 // pred_check
      _
    $region23: #{tpu_custom_call.1} parent=1 // pred_check_branch
      %5068 = sbr.rel (0) target = $region25
    $region24: #{tpu_custom_call.1} parent=1 // pred_region
      %s5070 = ssub.s32 64, 64
      %5071 = vsyncadd [#allocation3], %s5070
      %s5073 = sshll.u32 [#allocation2], 4
      %s5074 = int_to_ptr.vmem [resolvable:$true] %s5073
      %5076 = dma.vmem_to_hbm [thread:$0]  %s5074, 64, %s5, [#allocation3]
    $region25: #{tpu_custom_call.1} parent=1 // pred_fallthru
      _
    // Predicated region
    $region26: #{tpu_custom_call.1} parent=1 // pred_check
      _
    $region27: #{tpu_custom_call.1} parent=1 // pred_check_branch
      %5078 = sbr.rel (0) target = $region29
    $region28: #{tpu_custom_call.1} parent=1 // pred_region
      %5079 = dma.done [#allocation3], 64
    $region29: #{tpu_custom_call.1} parent=1 // pred_fallthru
      _
    %5080 = vsyncpa [#allocation3], 1

</llo_original>
